<compile_context>
chip_gen: v7x
topology: tpu7x:2x2x1
jax: 0.10.0
libtpu: 0.0.40
codegen_flags: <defaults>
</compile_context>

<pallas_src>
import functools

import jax
import jax.numpy as jnp
from jax import lax
from jax.experimental import pallas as pl
from jax.experimental.pallas import tpu as pltpu


W_OFF = 8  # sublane-aligned column offset of the halo interior inside xpad


# --------------------------- Pallas kernel ---------------------------

def _sepconv_bn(x, xpad_ref, dw_ref, pw_ref, shift_ref, *, apply_relu):
    """One [ReLU] -> depthwise 3x3 (pad 1) -> pointwise 1x1 (MXU) -> +BN-shift.

    x: (H, W, Cin) f32 value. The zero halo lives in `xpad_ref` (VMEM scratch,
    interior at [1:H+1, W_OFF:W_OFF+W]); BN scale is pre-folded into `pw`
    (bf16), only the per-channel shift is added here.
    """
    H, W, cin = x.shape
    if apply_relu:
        x = jnp.maximum(x, 0.0)                  # interior only; halo stays 0
    # 8-sublane-aligned interior write -> dense vst.
    xpad_ref[1:H + 1, W_OFF:W_OFF + W, :cin] = x

    dw = dw_ref[...]                             # (9, Cin) f32 depthwise taps
    acc = jnp.zeros((H, W, cin), jnp.float32)
    # 3 dense aligned slab loads; dx shifts are static value slices of the slab.
    for dy in range(3):
        slab = xpad_ref[dy:dy + H, :, :cin]      # (H, W+16, Cin)
        for dx in range(3):
            win = slab[:, W_OFF - 1 + dx:W_OFF - 1 + dx + W, :]
            acc = acc + win * dw[dy * 3 + dx].reshape(1, 1, cin)

    pw = pw_ref[...]                             # (Cin, Cout) bf16, BN folded
    cout = pw.shape[1]
    # W is a multiple of 8 here so this reshape is layout-trivial.
    # TODO(synk): for odd W (real Xception 19x19) contract channels in place.
    y = jnp.dot(acc.reshape(H * W, cin).astype(jnp.bfloat16), pw,
                preferred_element_type=jnp.float32)
    y = y + shift_ref[...]                       # (1, Cout) BN shift
    return y.reshape(H, W, cout)


def _block_kernel(*refs, num_layers, relu_flags, stride, has_skip):
    """Whole Xception Block for one batch element, fully fused in VMEM."""
    inp_ref = refs[0]
    pos = 1
    layer_refs = [refs[pos + 3 * l: pos + 3 * l + 3] for l in range(num_layers)]
    pos += 3 * num_layers
    if has_skip:
        wsk_ref, ssh_ref = refs[pos], refs[pos + 1]
        pos += 2
    o_ref = refs[pos]
    xpad_ref = refs[pos + 1]

    H, W, cin0 = inp_ref.shape
    Hp, Wp, cmax = xpad_ref.shape

    # Zero ONLY the 1-wide halo border the 3x3 windows read (the interior is
    # overwritten every layer).  Done every grid step -> tiny vst cost and
    # correct even when the "parallel" batch axis is split across TensorCores.
    zrow = jnp.zeros((1, Wp, cmax), jnp.float32)
    xpad_ref[0:1, :, :] = zrow
    xpad_ref[Hp - 1:Hp, :, :] = zrow
    zcol = jnp.zeros((Hp, 1, cmax), jnp.float32)
    xpad_ref[:, W_OFF - 1:W_OFF, :] = zcol
    xpad_ref[:, W_OFF + W:W_OFF + W + 1, :] = zcol

    x0 = inp_ref[...]                            # (H, W, Cin0) f32
    x = x0
    for l in range(num_layers):
        dw_ref, pw_ref, shift_ref = layer_refs[l]
        x = _sepconv_bn(x, xpad_ref, dw_ref, pw_ref, shift_ref,
                        apply_relu=relu_flags[l])

    cout = x.shape[-1]
    if stride == 2:
        Ho, Wo = H // 2, W // 2
        # Fused 3x3 / stride-2 / pad-1 max pool, reusing xpad_ref as the
        # (-inf)-top/left-padded buffer (cmax >= cout is guaranteed by wrapper).
        xpad_ref[0:1, W_OFF - 1:W_OFF + W, :cout] = jnp.full(
            (1, W + 1, cout), -jnp.inf, jnp.float32)
        xpad_ref[1:H + 1, W_OFF - 1:W_OFF, :cout] = jnp.full(
            (H, 1, cout), -jnp.inf, jnp.float32)
        xpad_ref[1:H + 1, W_OFF:W_OFF + W, :cout] = x
        pooled = None
        for ky in range(3):
            for kx in range(3):
                t = xpad_ref[pl.ds(ky, Ho, 2),
                             pl.ds(W_OFF - 1 + kx, Wo, 2), :cout]
                pooled = t if pooled is None else jnp.maximum(pooled, t)
        x = pooled
        # Stride-2 subsample of the residual input for the 1x1 skip conv
        # (pure pl.ds slices; no int indexer -> works in Mosaic & interpret).
        inp_s = inp_ref[pl.ds(0, Ho, 2), pl.ds(0, Wo, 2), :]
    else:
        Ho, Wo = H, W
        inp_s = x0

    if has_skip:
        # skip = BN(Conv1x1(inp, stride)); BN scale pre-folded into the weight.
        sk = jnp.dot(inp_s.reshape(Ho * Wo, cin0).astype(jnp.bfloat16),
                     wsk_ref[...], preferred_element_type=jnp.float32)
        sk = sk + ssh_ref[...]
        x = x + sk.reshape(Ho, Wo, cout)
    else:
        x = x + inp_s                            # identity residual
    o_ref[...] = x


# ----------------------------- wrapper -----------------------------

def block_forward(inp, params):
    """inp: (N, H, W, Cin) float32 NHWC."""
    N, H, W, cin0 = inp.shape
    layers = params['layers']
    L = len(layers)
    stride = params['strides']
    # TODO(synk): MaxPool with stride > 2 not implemented (Xception uses 1 or 2).
    assert stride in (1, 2)
    skip = params['skip']
    has_skip = skip is not None
    cout = layers[-1]['pw'].shape[1]
    if stride == 2:
        # TODO(synk): odd spatial (147x147 entry flow) ceil-mode sizing unhandled.
        assert H % 2 == 0 and W % 2 == 0
        Ho, Wo = H // 2, W // 2
    else:
        Ho, Wo = H, W
    if not has_skip:
        assert stride == 1 and cout == cin0, "identity residual needs s=1, Cin==Cout"

    operands = [inp]
    in_specs = [pl.BlockSpec((None, H, W, cin0), lambda n: (n, 0, 0, 0))]
    for lyr in layers:
        ci, co = lyr['pw'].shape
        operands += [lyr['dw'], lyr['pw'], lyr['shift']]
        in_specs += [pl.BlockSpec((9, ci), lambda n: (0, 0)),
                     pl.BlockSpec((ci, co), lambda n: (0, 0)),
                     pl.BlockSpec((1, co), lambda n: (0, 0))]
    if has_skip:
        operands += [skip['w'], skip['shift']]
        in_specs += [pl.BlockSpec((cin0, cout), lambda n: (0, 0)),
                     pl.BlockSpec((1, cout), lambda n: (0, 0))]

    cmax = max(l['dw'].shape[1] for l in layers)
    if stride == 2:
        cmax = max(cmax, cout)    # xpad doubles as the max-pool buffer
    # Single VMEM scratch: zero halo + pool pad. Interior at [1:H+1, 8:8+W]
    # (8-sublane aligned); one extra column each side for the 3x3 window.
    scratch = [pltpu.VMEM((H + 2, W + 16, cmax), jnp.float32)]

    kernel = functools.partial(
        _block_kernel, num_layers=L,
        relu_flags=tuple(bool(l['relu']) for l in layers),
        stride=stride, has_skip=has_skip)

    return pl.pallas_call(
        kernel,
        out_shape=jax.ShapeDtypeStruct((N, Ho, Wo, cout), jnp.float32),
        grid_spec=pltpu.PrefetchScalarGridSpec(
            num_scalar_prefetch=0,
            grid=(N,),
            in_specs=in_specs,
            out_specs=pl.BlockSpec((None, Ho, Wo, cout), lambda n: (n, 0, 0, 0)),
            scratch_shapes=scratch),
        compiler_params=pltpu.CompilerParams(
            dimension_semantics=("parallel",),        # batch across TCs
            # headroom on v7x (64 MiB/TC); v5e/v6e have 128 MiB and can go higher.
            vmem_limit_bytes=48 * 1024 * 1024),
    )(*operands)


# ------------------------ parameters ------------------------

def _fold_bn(gamma, beta, mean, var, eps=1e-5):
    scale = gamma / jnp.sqrt(var + eps)
    shift = beta - mean * scale
    return scale, shift


def _sep_layer(key, cin, cout, apply_relu):
    k1, k2, k3, k4, k5, k6 = jax.random.split(key, 6)
    dw = jax.random.normal(k1, (9, cin), jnp.float32) / 3.0        # 3x3 dw taps
    pw = jax.random.normal(k2, (cin, cout), jnp.float32) / jnp.sqrt(cin)
    gamma = 1.0 + 0.1 * jax.random.normal(k3, (cout,), jnp.float32)
    beta = 0.1 * jax.random.normal(k4, (cout,), jnp.float32)
    mean = 0.1 * jax.random.normal(k5, (cout,), jnp.float32)
    var = jax.random.uniform(k6, (cout,), jnp.float32, 0.5, 1.5)
    scale, shift = _fold_bn(gamma, beta, mean, var)
    pw_k = (pw * scale[None, :]).astype(jnp.bfloat16)   # fold BN scale, bf16 MXU
    return dict(relu=apply_relu, dw=dw, pw=pw_k,
                shift=shift.reshape(1, -1).astype(jnp.float32))


def init_block_params(key, in_filters, out_filters, reps, strides=1,
                      start_with_relu=True, grow_first=True):
    keys = list(jax.random.split(key, reps + 2))
    shapes = []
    filters = in_filters
    if grow_first:
        shapes.append((in_filters, out_filters))
        filters = out_filters
    for _ in range(reps - 1):
        shapes.append((filters, filters))
    if not grow_first:
        shapes.append((in_filters, out_filters))
    layers = []
    for idx, (cin, cout) in enumerate(shapes):
        apply_relu = start_with_relu if idx == 0 else True
        layers.append(_sep_layer(keys[idx], cin, cout, apply_relu))
    skip = None
    if out_filters != in_filters or strides != 1:
        k1, k2, k3, k4, k5 = jax.random.split(keys[len(shapes)], 5)
        w = jax.random.normal(k1, (in_filters, out_filters), jnp.float32) / jnp.sqrt(in_filters)
        gamma = 1.0 + 0.1 * jax.random.normal(k2, (out_filters,), jnp.float32)
        beta = 0.1 * jax.random.normal(k3, (out_filters,), jnp.float32)
        mean = 0.1 * jax.random.normal(k4, (out_filters,), jnp.float32)
        var = jax.random.uniform(k5, (out_filters,), jnp.float32, 0.5, 1.5)
        scale, shift = _fold_bn(gamma, beta, mean, var)
        skip = dict(w=(w * scale[None, :]).astype(jnp.bfloat16),
                    shift=shift.reshape(1, -1).astype(jnp.float32))
    return dict(layers=layers, skip=skip, strides=strides)


# ------------------------ pure-JAX reference ------------------------

def ref_block(inp, params):
    hp = lax.Precision.HIGHEST
    x = inp
    for layer in params['layers']:
        if layer['relu']:
            x = jnp.maximum(x, 0.0)
        cin = x.shape[-1]
        x = lax.conv_general_dilated(
            x, layer['dw'].reshape(3, 3, 1, cin), (1, 1), ((1, 1), (1, 1)),
            dimension_numbers=('NHWC', 'HWIO', 'NHWC'),
            feature_group_count=cin, precision=hp)
        pw = layer['pw'].astype(jnp.float32)           # same (BN-folded) weights
        x = jnp.einsum('nhwc,co->nhwo', x, pw, precision=hp)
        x = x + layer['shift'].reshape(1, 1, 1, -1)
    s = params['strides']
    if s != 1:
        x = lax.reduce_window(x, -jnp.inf, lax.max,
                              (1, 3, 3, 1), (1, s, s, 1),
                              ((0, 0), (1, 1), (1, 1), (0, 0)))
    if params['skip'] is not None:
        sk = params['skip']
        w = sk['w'].astype(jnp.float32)
        cin, cout = w.shape
        y = lax.conv_general_dilated(
            inp, w.reshape(1, 1, cin, cout), (s, s), 'VALID',
            dimension_numbers=('NHWC', 'HWIO', 'NHWC'), precision=hp)
        y = y + sk['shift'].reshape(1, 1, 1, -1)
    else:
        y = inp
    return x + y


# ------------------------------- main -------------------------------

if __name__ == "__main__":
    key = jax.random.PRNGKey(0)
    kx, kp1, kp2 = jax.random.split(key, 3)

    x_nchw = jax.random.normal(kx, (2, 4, 16, 16), jnp.float32)   # PyTorch NCHW
    x = jnp.transpose(x_nchw, (0, 2, 3, 1))                       # -> NHWC

    # Tolerance sized for the bf16 MXU operands (f32 accumulate).
    ATOL = RTOL = 3e-2

    # Block(in=4, out=8, reps=2, strides=2, start_with_relu=True, grow_first=True)
    p1 = init_block_params(kp1, 4, 8, reps=2, strides=2)
    out1 = jax.block_until_ready(block_forward(x, p1))
    ref1 = ref_block(x, p1)
    assert out1.shape == (2, 8, 8, 8), out1.shape
    assert jnp.allclose(out1, ref1, atol=ATOL, rtol=RTOL), \
        float(jnp.max(jnp.abs(out1 - ref1)))

    # Block(in=4, out=4, reps=2, strides=1) -> identity skip, no max-pool
    p2 = init_block_params(kp2, 4, 4, reps=2, strides=1)
    out2 = jax.block_until_ready(block_forward(x, p2))
    ref2 = ref_block(x, p2)
    assert out2.shape == (2, 16, 16, 4), out2.shape
    assert jnp.allclose(out2, ref2, atol=ATOL, rtol=RTOL), \
        float(jnp.max(jnp.abs(out2 - ref2)))

    print("KERNEL_OK")
</pallas_src>

<mosaic_0001>
module attributes {stable_mosaic.version = 11 : i64} {
  func.func @_block_kernel(%arg0: i32, %arg1: memref<1x16x16x4xf32, #tpu.memory_space<vmem>>, %arg2: memref<9x4xf32, #tpu.memory_space<vmem>>, %arg3: memref<4x8xbf16, #tpu.memory_space<vmem>>, %arg4: memref<1x8xf32, #tpu.memory_space<vmem>>, %arg5: memref<9x8xf32, #tpu.memory_space<vmem>>, %arg6: memref<8x8xbf16, #tpu.memory_space<vmem>>, %arg7: memref<1x8xf32, #tpu.memory_space<vmem>>, %arg8: memref<4x8xbf16, #tpu.memory_space<vmem>>, %arg9: memref<1x8xf32, #tpu.memory_space<vmem>>, %arg10: memref<1x8x8x8xf32, #tpu.memory_space<vmem>>, %arg11: memref<18x32x8xf32, #tpu.memory_space<vmem>>) attributes {dimension_semantics = [#tpu.dimension_semantics<parallel>], iteration_bounds = array<i64: 2>, scalar_prefetch = 0 : i64, scratch_operands = 1 : i64, tpu.core_type = #tpu.core_type<tc>, window_params = [{transform_indices = @transform_0, window_bounds = array<i64: 1, 16, 16, 4>}, {pipeline_mode = #tpu.pipeline_mode<synchronous>, transform_indices = @transform_1, window_bounds = array<i64: 9, 4>}, {pipeline_mode = #tpu.pipeline_mode<synchronous>, transform_indices = @transform_2, window_bounds = array<i64: 4, 8>}, {pipeline_mode = #tpu.pipeline_mode<synchronous>, transform_indices = @transform_3, window_bounds = array<i64: 1, 8>}, {pipeline_mode = #tpu.pipeline_mode<synchronous>, transform_indices = @transform_4, window_bounds = array<i64: 9, 8>}, {pipeline_mode = #tpu.pipeline_mode<synchronous>, transform_indices = @transform_5, window_bounds = array<i64: 8, 8>}, {pipeline_mode = #tpu.pipeline_mode<synchronous>, transform_indices = @transform_6, window_bounds = array<i64: 1, 8>}, {pipeline_mode = #tpu.pipeline_mode<synchronous>, transform_indices = @transform_7, window_bounds = array<i64: 4, 8>}, {pipeline_mode = #tpu.pipeline_mode<synchronous>, transform_indices = @transform_8, window_bounds = array<i64: 1, 8>}, {transform_indices = @transform_9, window_bounds = array<i64: 1, 8, 8, 8>}]} {
    %cst = arith.constant 0.000000e+00 : f32
    %0 = vector.broadcast %cst : f32 to vector<1x32x8xf32>
    %c0 = arith.constant 0 : index
    %c0_0 = arith.constant 0 : index
    %c0_1 = arith.constant 0 : index
    %1 = vector.load %arg11[%c0, %c0_0, %c0_1] : memref<18x32x8xf32, #tpu.memory_space<vmem>>, vector<1x32x8xf32>
    tpu.vector_store %arg11[%c0, %c0_0, %c0_1], %0 {strides = array<i32>} : memref<18x32x8xf32, #tpu.memory_space<vmem>>, vector<1x32x8xf32>,
    %c17 = arith.constant 17 : index
    %c0_2 = arith.constant 0 : index
    %c0_3 = arith.constant 0 : index
    %2 = vector.load %arg11[%c17, %c0_2, %c0_3] : memref<18x32x8xf32, #tpu.memory_space<vmem>>, vector<1x32x8xf32>
    tpu.vector_store %arg11[%c17, %c0_2, %c0_3], %0 {strides = array<i32>} : memref<18x32x8xf32, #tpu.memory_space<vmem>>, vector<1x32x8xf32>,
    %cst_4 = arith.constant 0.000000e+00 : f32
    %3 = vector.broadcast %cst_4 : f32 to vector<18x1x8xf32>
    %c0_5 = arith.constant 0 : index
    %c7 = arith.constant 7 : index
    %c0_6 = arith.constant 0 : index
    %4 = vector.load %arg11[%c0_5, %c7, %c0_6] : memref<18x32x8xf32, #tpu.memory_space<vmem>>, vector<18x1x8xf32>
    tpu.vector_store %arg11[%c0_5, %c7, %c0_6], %3 {strides = array<i32>} : memref<18x32x8xf32, #tpu.memory_space<vmem>>, vector<18x1x8xf32>,
    %c0_7 = arith.constant 0 : index
    %c24 = arith.constant 24 : index
    %c0_8 = arith.constant 0 : index
    %5 = vector.load %arg11[%c0_7, %c24, %c0_8] : memref<18x32x8xf32, #tpu.memory_space<vmem>>, vector<18x1x8xf32>
    tpu.vector_store %arg11[%c0_7, %c24, %c0_8], %3 {strides = array<i32>} : memref<18x32x8xf32, #tpu.memory_space<vmem>>, vector<18x1x8xf32>,
    %c0_9 = arith.constant 0 : index
    %c0_10 = arith.constant 0 : index
    %c0_11 = arith.constant 0 : index
    %c0_12 = arith.constant 0 : index
    %6 = vector.load %arg1[%c0_9, %c0_10, %c0_11, %c0_12] : memref<1x16x16x4xf32, #tpu.memory_space<vmem>>, vector<1x16x16x4xf32>
    %7 = vector.shape_cast %6 : vector<1x16x16x4xf32> to vector<16x16x4xf32>
    %cst_13 = arith.constant 0.000000e+00 : f32
    %8 = vector.broadcast %cst_13 : f32 to vector<16x16x4xf32>
    %9 = arith.maximumf %7, %8 : vector<16x16x4xf32>
    %c1 = arith.constant 1 : index
    %c8 = arith.constant 8 : index
    %c0_14 = arith.constant 0 : index
    %10 = vector.load %arg11[%c1, %c8, %c0_14] : memref<18x32x8xf32, #tpu.memory_space<vmem>>, vector<16x16x4xf32>
    tpu.vector_store %arg11[%c1, %c8, %c0_14], %9 {strides = array<i32>} : memref<18x32x8xf32, #tpu.memory_space<vmem>>, vector<16x16x4xf32>,
    %c0_15 = arith.constant 0 : index
    %c0_16 = arith.constant 0 : index
    %11 = vector.load %arg2[%c0_15, %c0_16] : memref<9x4xf32, #tpu.memory_space<vmem>>, vector<9x4xf32>
    %cst_17 = arith.constant 0.000000e+00 : f32
    %12 = vector.broadcast %cst_17 : f32 to vector<16x16x4xf32>
    %c0_18 = arith.constant 0 : index
    %c0_19 = arith.constant 0 : index
    %c0_20 = arith.constant 0 : index
    %13 = vector.load %arg11[%c0_18, %c0_19, %c0_20] : memref<18x32x8xf32, #tpu.memory_space<vmem>>, vector<16x32x4xf32>
    %14 = vector.extract_strided_slice %13 {offsets = [0, 7, 0], sizes = [16, 16, 4], strides = [1, 1, 1]} : vector<16x32x4xf32> to vector<16x16x4xf32>
    %15 = vector.extract_strided_slice %11 {offsets = [0, 0], sizes = [1, 4], strides = [1, 1]} : vector<9x4xf32> to vector<1x4xf32>
    %16 = vector.shape_cast %15 : vector<1x4xf32> to vector<4xf32>
    %17 = vector.shape_cast %16 : vector<4xf32> to vector<1x1x4xf32>
    %18 = vector.broadcast %17 : vector<1x1x4xf32> to vector<16x16x4xf32>
    %19 = arith.mulf %14, %18 : vector<16x16x4xf32>
    %20 = arith.addf %12, %19 : vector<16x16x4xf32>
    %21 = vector.extract_strided_slice %13 {offsets = [0, 8, 0], sizes = [16, 16, 4], strides = [1, 1, 1]} : vector<16x32x4xf32> to vector<16x16x4xf32>
    %22 = vector.extract_strided_slice %11 {offsets = [1, 0], sizes = [1, 4], strides = [1, 1]} : vector<9x4xf32> to vector<1x4xf32>
    %23 = vector.shape_cast %22 : vector<1x4xf32> to vector<4xf32>
    %24 = vector.shape_cast %23 : vector<4xf32> to vector<1x1x4xf32>
    %25 = vector.broadcast %24 : vector<1x1x4xf32> to vector<16x16x4xf32>
    %26 = arith.mulf %21, %25 : vector<16x16x4xf32>
    %27 = arith.addf %20, %26 : vector<16x16x4xf32>
    %28 = vector.extract_strided_slice %13 {offsets = [0, 9, 0], sizes = [16, 16, 4], strides = [1, 1, 1]} : vector<16x32x4xf32> to vector<16x16x4xf32>
    %29 = vector.extract_strided_slice %11 {offsets = [2, 0], sizes = [1, 4], strides = [1, 1]} : vector<9x4xf32> to vector<1x4xf32>
    %30 = vector.shape_cast %29 : vector<1x4xf32> to vector<4xf32>
    %31 = vector.shape_cast %30 : vector<4xf32> to vector<1x1x4xf32>
    %32 = vector.broadcast %31 : vector<1x1x4xf32> to vector<16x16x4xf32>
    %33 = arith.mulf %28, %32 : vector<16x16x4xf32>
    %34 = arith.addf %27, %33 : vector<16x16x4xf32>
    %c1_21 = arith.constant 1 : index
    %c0_22 = arith.constant 0 : index
    %c0_23 = arith.constant 0 : index
    %35 = vector.load %arg11[%c1_21, %c0_22, %c0_23] : memref<18x32x8xf32, #tpu.memory_space<vmem>>, vector<16x32x4xf32>
    %36 = vector.extract_strided_slice %35 {offsets = [0, 7, 0], sizes = [16, 16, 4], strides = [1, 1, 1]} : vector<16x32x4xf32> to vector<16x16x4xf32>
    %37 = vector.extract_strided_slice %11 {offsets = [3, 0], sizes = [1, 4], strides = [1, 1]} : vector<9x4xf32> to vector<1x4xf32>
    %38 = vector.shape_cast %37 : vector<1x4xf32> to vector<4xf32>
    %39 = vector.shape_cast %38 : vector<4xf32> to vector<1x1x4xf32>
    %40 = vector.broadcast %39 : vector<1x1x4xf32> to vector<16x16x4xf32>
    %41 = arith.mulf %36, %40 : vector<16x16x4xf32>
    %42 = arith.addf %34, %41 : vector<16x16x4xf32>
    %43 = vector.extract_strided_slice %35 {offsets = [0, 8, 0], sizes = [16, 16, 4], strides = [1, 1, 1]} : vector<16x32x4xf32> to vector<16x16x4xf32>
    %44 = vector.extract_strided_slice %11 {offsets = [4, 0], sizes = [1, 4], strides = [1, 1]} : vector<9x4xf32> to vector<1x4xf32>
    %45 = vector.shape_cast %44 : vector<1x4xf32> to vector<4xf32>
    %46 = vector.shape_cast %45 : vector<4xf32> to vector<1x1x4xf32>
    %47 = vector.broadcast %46 : vector<1x1x4xf32> to vector<16x16x4xf32>
    %48 = arith.mulf %43, %47 : vector<16x16x4xf32>
    %49 = arith.addf %42, %48 : vector<16x16x4xf32>
    %50 = vector.extract_strided_slice %35 {offsets = [0, 9, 0], sizes = [16, 16, 4], strides = [1, 1, 1]} : vector<16x32x4xf32> to vector<16x16x4xf32>
    %51 = vector.extract_strided_slice %11 {offsets = [5, 0], sizes = [1, 4], strides = [1, 1]} : vector<9x4xf32> to vector<1x4xf32>
    %52 = vector.shape_cast %51 : vector<1x4xf32> to vector<4xf32>
    %53 = vector.shape_cast %52 : vector<4xf32> to vector<1x1x4xf32>
    %54 = vector.broadcast %53 : vector<1x1x4xf32> to vector<16x16x4xf32>
    %55 = arith.mulf %50, %54 : vector<16x16x4xf32>
    %56 = arith.addf %49, %55 : vector<16x16x4xf32>
    %c2 = arith.constant 2 : index
    %c0_24 = arith.constant 0 : index
    %c0_25 = arith.constant 0 : index
    %57 = vector.load %arg11[%c2, %c0_24, %c0_25] : memref<18x32x8xf32, #tpu.memory_space<vmem>>, vector<16x32x4xf32>
    %58 = vector.extract_strided_slice %57 {offsets = [0, 7, 0], sizes = [16, 16, 4], strides = [1, 1, 1]} : vector<16x32x4xf32> to vector<16x16x4xf32>
    %59 = vector.extract_strided_slice %11 {offsets = [6, 0], sizes = [1, 4], strides = [1, 1]} : vector<9x4xf32> to vector<1x4xf32>
    %60 = vector.shape_cast %59 : vector<1x4xf32> to vector<4xf32>
    %61 = vector.shape_cast %60 : vector<4xf32> to vector<1x1x4xf32>
    %62 = vector.broadcast %61 : vector<1x1x4xf32> to vector<16x16x4xf32>
    %63 = arith.mulf %58, %62 : vector<16x16x4xf32>
    %64 = arith.addf %56, %63 : vector<16x16x4xf32>
    %65 = vector.extract_strided_slice %57 {offsets = [0, 8, 0], sizes = [16, 16, 4], strides = [1, 1, 1]} : vector<16x32x4xf32> to vector<16x16x4xf32>
    %66 = vector.extract_strided_slice %11 {offsets = [7, 0], sizes = [1, 4], strides = [1, 1]} : vector<9x4xf32> to vector<1x4xf32>
    %67 = vector.shape_cast %66 : vector<1x4xf32> to vector<4xf32>
    %68 = vector.shape_cast %67 : vector<4xf32> to vector<1x1x4xf32>
    %69 = vector.broadcast %68 : vector<1x1x4xf32> to vector<16x16x4xf32>
    %70 = arith.mulf %65, %69 : vector<16x16x4xf32>
    %71 = arith.addf %64, %70 : vector<16x16x4xf32>
    %72 = vector.extract_strided_slice %57 {offsets = [0, 9, 0], sizes = [16, 16, 4], strides = [1, 1, 1]} : vector<16x32x4xf32> to vector<16x16x4xf32>
    %73 = vector.extract_strided_slice %11 {offsets = [8, 0], sizes = [1, 4], strides = [1, 1]} : vector<9x4xf32> to vector<1x4xf32>
    %74 = vector.shape_cast %73 : vector<1x4xf32> to vector<4xf32>
    %75 = vector.shape_cast %74 : vector<4xf32> to vector<1x1x4xf32>
    %76 = vector.broadcast %75 : vector<1x1x4xf32> to vector<16x16x4xf32>
    %77 = arith.mulf %72, %76 : vector<16x16x4xf32>
    %78 = arith.addf %71, %77 : vector<16x16x4xf32>
    %c0_26 = arith.constant 0 : index
    %c0_27 = arith.constant 0 : index
    %79 = vector.load %arg3[%c0_26, %c0_27] : memref<4x8xbf16, #tpu.memory_space<vmem>>, vector<4x8xbf16>
    %80 = vector.shape_cast %78 : vector<16x16x4xf32> to vector<256x4xf32>
    %81 = arith.truncf %80 : vector<256x4xf32> to vector<256x4xbf16>
    %cst_28 = arith.constant dense<0.000000e+00> : vector<256x8xf32>
    %82 = tpu.matmul %81, %79, %cst_28 {dimension_numbers = #tpu.dot_dimension_numbers<[1], [0], [0], [1], [0, 0, 1, 1], [], []>} : vector<256x4xbf16>, vector<4x8xbf16>, vector<256x8xf32> -> vector<256x8xf32>
    %c0_29 = arith.constant 0 : index
    %c0_30 = arith.constant 0 : index
    %83 = vector.load %arg4[%c0_29, %c0_30] : memref<1x8xf32, #tpu.memory_space<vmem>>, vector<1x8xf32>
    %84 = vector.broadcast %83 : vector<1x8xf32> to vector<256x8xf32>
    %85 = arith.addf %82, %84 : vector<256x8xf32>
    %86 = vector.shape_cast %85 : vector<256x8xf32> to vector<16x16x8xf32>
    %cst_31 = arith.constant 0.000000e+00 : f32
    %87 = vector.broadcast %cst_31 : f32 to vector<16x16x8xf32>
    %88 = arith.maximumf %86, %87 : vector<16x16x8xf32>
    %c1_32 = arith.constant 1 : index
    %c8_33 = arith.constant 8 : index
    %c0_34 = arith.constant 0 : index
    %89 = vector.load %arg11[%c1_32, %c8_33, %c0_34] : memref<18x32x8xf32, #tpu.memory_space<vmem>>, vector<16x16x8xf32>
    tpu.vector_store %arg11[%c1_32, %c8_33, %c0_34], %88 {strides = array<i32>} : memref<18x32x8xf32, #tpu.memory_space<vmem>>, vector<16x16x8xf32>,
    %c0_35 = arith.constant 0 : index
    %c0_36 = arith.constant 0 : index
    %90 = vector.load %arg5[%c0_35, %c0_36] : memref<9x8xf32, #tpu.memory_space<vmem>>, vector<9x8xf32>
    %cst_37 = arith.constant 0.000000e+00 : f32
    %91 = vector.broadcast %cst_37 : f32 to vector<16x16x8xf32>
    %c0_38 = arith.constant 0 : index
    %c0_39 = arith.constant 0 : index
    %c0_40 = arith.constant 0 : index
    %92 = vector.load %arg11[%c0_38, %c0_39, %c0_40] : memref<18x32x8xf32, #tpu.memory_space<vmem>>, vector<16x32x8xf32>
    %93 = vector.extract_strided_slice %92 {offsets = [0, 7, 0], sizes = [16, 16, 8], strides = [1, 1, 1]} : vector<16x32x8xf32> to vector<16x16x8xf32>
    %94 = vector.extract_strided_slice %90 {offsets = [0, 0], sizes = [1, 8], strides = [1, 1]} : vector<9x8xf32> to vector<1x8xf32>
    %95 = vector.shape_cast %94 : vector<1x8xf32> to vector<8xf32>
    %96 = vector.shape_cast %95 : vector<8xf32> to vector<1x1x8xf32>
    %97 = vector.broadcast %96 : vector<1x1x8xf32> to vector<16x16x8xf32>
    %98 = arith.mulf %93, %97 : vector<16x16x8xf32>
    %99 = arith.addf %91, %98 : vector<16x16x8xf32>
    %100 = vector.extract_strided_slice %92 {offsets = [0, 8, 0], sizes = [16, 16, 8], strides = [1, 1, 1]} : vector<16x32x8xf32> to vector<16x16x8xf32>
    %101 = vector.extract_strided_slice %90 {offsets = [1, 0], sizes = [1, 8], strides = [1, 1]} : vector<9x8xf32> to vector<1x8xf32>
    %102 = vector.shape_cast %101 : vector<1x8xf32> to vector<8xf32>
    %103 = vector.shape_cast %102 : vector<8xf32> to vector<1x1x8xf32>
    %104 = vector.broadcast %103 : vector<1x1x8xf32> to vector<16x16x8xf32>
    %105 = arith.mulf %100, %104 : vector<16x16x8xf32>
    %106 = arith.addf %99, %105 : vector<16x16x8xf32>
    %107 = vector.extract_strided_slice %92 {offsets = [0, 9, 0], sizes = [16, 16, 8], strides = [1, 1, 1]} : vector<16x32x8xf32> to vector<16x16x8xf32>
    %108 = vector.extract_strided_slice %90 {offsets = [2, 0], sizes = [1, 8], strides = [1, 1]} : vector<9x8xf32> to vector<1x8xf32>
    %109 = vector.shape_cast %108 : vector<1x8xf32> to vector<8xf32>
    %110 = vector.shape_cast %109 : vector<8xf32> to vector<1x1x8xf32>
    %111 = vector.broadcast %110 : vector<1x1x8xf32> to vector<16x16x8xf32>
    %112 = arith.mulf %107, %111 : vector<16x16x8xf32>
    %113 = arith.addf %106, %112 : vector<16x16x8xf32>
    %c1_41 = arith.constant 1 : index
    %c0_42 = arith.constant 0 : index
    %c0_43 = arith.constant 0 : index
    %114 = vector.load %arg11[%c1_41, %c0_42, %c0_43] : memref<18x32x8xf32, #tpu.memory_space<vmem>>, vector<16x32x8xf32>
    %115 = vector.extract_strided_slice %114 {offsets = [0, 7, 0], sizes = [16, 16, 8], strides = [1, 1, 1]} : vector<16x32x8xf32> to vector<16x16x8xf32>
    %116 = vector.extract_strided_slice %90 {offsets = [3, 0], sizes = [1, 8], strides = [1, 1]} : vector<9x8xf32> to vector<1x8xf32>
    %117 = vector.shape_cast %116 : vector<1x8xf32> to vector<8xf32>
    %118 = vector.shape_cast %117 : vector<8xf32> to vector<1x1x8xf32>
    %119 = vector.broadcast %118 : vector<1x1x8xf32> to vector<16x16x8xf32>
    %120 = arith.mulf %115, %119 : vector<16x16x8xf32>
    %121 = arith.addf %113, %120 : vector<16x16x8xf32>
    %122 = vector.extract_strided_slice %114 {offsets = [0, 8, 0], sizes = [16, 16, 8], strides = [1, 1, 1]} : vector<16x32x8xf32> to vector<16x16x8xf32>
    %123 = vector.extract_strided_slice %90 {offsets = [4, 0], sizes = [1, 8], strides = [1, 1]} : vector<9x8xf32> to vector<1x8xf32>
    %124 = vector.shape_cast %123 : vector<1x8xf32> to vector<8xf32>
    %125 = vector.shape_cast %124 : vector<8xf32> to vector<1x1x8xf32>
    %126 = vector.broadcast %125 : vector<1x1x8xf32> to vector<16x16x8xf32>
    %127 = arith.mulf %122, %126 : vector<16x16x8xf32>
    %128 = arith.addf %121, %127 : vector<16x16x8xf32>
    %129 = vector.extract_strided_slice %114 {offsets = [0, 9, 0], sizes = [16, 16, 8], strides = [1, 1, 1]} : vector<16x32x8xf32> to vector<16x16x8xf32>
    %130 = vector.extract_strided_slice %90 {offsets = [5, 0], sizes = [1, 8], strides = [1, 1]} : vector<9x8xf32> to vector<1x8xf32>
    %131 = vector.shape_cast %130 : vector<1x8xf32> to vector<8xf32>
    %132 = vector.shape_cast %131 : vector<8xf32> to vector<1x1x8xf32>
    %133 = vector.broadcast %132 : vector<1x1x8xf32> to vector<16x16x8xf32>
    %134 = arith.mulf %129, %133 : vector<16x16x8xf32>
    %135 = arith.addf %128, %134 : vector<16x16x8xf32>
    %c2_44 = arith.constant 2 : index
    %c0_45 = arith.constant 0 : index
    %c0_46 = arith.constant 0 : index
    %136 = vector.load %arg11[%c2_44, %c0_45, %c0_46] : memref<18x32x8xf32, #tpu.memory_space<vmem>>, vector<16x32x8xf32>
    %137 = vector.extract_strided_slice %136 {offsets = [0, 7, 0], sizes = [16, 16, 8], strides = [1, 1, 1]} : vector<16x32x8xf32> to vector<16x16x8xf32>
    %138 = vector.extract_strided_slice %90 {offsets = [6, 0], sizes = [1, 8], strides = [1, 1]} : vector<9x8xf32> to vector<1x8xf32>
    %139 = vector.shape_cast %138 : vector<1x8xf32> to vector<8xf32>
    %140 = vector.shape_cast %139 : vector<8xf32> to vector<1x1x8xf32>
    %141 = vector.broadcast %140 : vector<1x1x8xf32> to vector<16x16x8xf32>
    %142 = arith.mulf %137, %141 : vector<16x16x8xf32>
    %143 = arith.addf %135, %142 : vector<16x16x8xf32>
    %144 = vector.extract_strided_slice %136 {offsets = [0, 8, 0], sizes = [16, 16, 8], strides = [1, 1, 1]} : vector<16x32x8xf32> to vector<16x16x8xf32>
    %145 = vector.extract_strided_slice %90 {offsets = [7, 0], sizes = [1, 8], strides = [1, 1]} : vector<9x8xf32> to vector<1x8xf32>
    %146 = vector.shape_cast %145 : vector<1x8xf32> to vector<8xf32>
    %147 = vector.shape_cast %146 : vector<8xf32> to vector<1x1x8xf32>
    %148 = vector.broadcast %147 : vector<1x1x8xf32> to vector<16x16x8xf32>
    %149 = arith.mulf %144, %148 : vector<16x16x8xf32>
    %150 = arith.addf %143, %149 : vector<16x16x8xf32>
    %151 = vector.extract_strided_slice %136 {offsets = [0, 9, 0], sizes = [16, 16, 8], strides = [1, 1, 1]} : vector<16x32x8xf32> to vector<16x16x8xf32>
    %152 = vector.extract_strided_slice %90 {offsets = [8, 0], sizes = [1, 8], strides = [1, 1]} : vector<9x8xf32> to vector<1x8xf32>
    %153 = vector.shape_cast %152 : vector<1x8xf32> to vector<8xf32>
    %154 = vector.shape_cast %153 : vector<8xf32> to vector<1x1x8xf32>
    %155 = vector.broadcast %154 : vector<1x1x8xf32> to vector<16x16x8xf32>
    %156 = arith.mulf %151, %155 : vector<16x16x8xf32>
    %157 = arith.addf %150, %156 : vector<16x16x8xf32>
    %c0_47 = arith.constant 0 : index
    %c0_48 = arith.constant 0 : index
    %158 = vector.load %arg6[%c0_47, %c0_48] : memref<8x8xbf16, #tpu.memory_space<vmem>>, vector<8x8xbf16>
    %159 = vector.shape_cast %157 : vector<16x16x8xf32> to vector<256x8xf32>
    %160 = arith.truncf %159 : vector<256x8xf32> to vector<256x8xbf16>
    %cst_49 = arith.constant dense<0.000000e+00> : vector<256x8xf32>
    %161 = tpu.matmul %160, %158, %cst_49 {dimension_numbers = #tpu.dot_dimension_numbers<[1], [0], [0], [1], [0, 0, 1, 1], [], []>} : vector<256x8xbf16>, vector<8x8xbf16>, vector<256x8xf32> -> vector<256x8xf32>
    %c0_50 = arith.constant 0 : index
    %c0_51 = arith.constant 0 : index
    %162 = vector.load %arg7[%c0_50, %c0_51] : memref<1x8xf32, #tpu.memory_space<vmem>>, vector<1x8xf32>
    %163 = vector.broadcast %162 : vector<1x8xf32> to vector<256x8xf32>
    %164 = arith.addf %161, %163 : vector<256x8xf32>
    %165 = vector.shape_cast %164 : vector<256x8xf32> to vector<16x16x8xf32>
    %cst_52 = arith.constant 0xFF800000 : f32
    %166 = vector.broadcast %cst_52 : f32 to vector<1x17x8xf32>
    %c0_53 = arith.constant 0 : index
    %c7_54 = arith.constant 7 : index
    %c0_55 = arith.constant 0 : index
    %167 = vector.load %arg11[%c0_53, %c7_54, %c0_55] : memref<18x32x8xf32, #tpu.memory_space<vmem>>, vector<1x17x8xf32>
    tpu.vector_store %arg11[%c0_53, %c7_54, %c0_55], %166 {strides = array<i32>} : memref<18x32x8xf32, #tpu.memory_space<vmem>>, vector<1x17x8xf32>,
    %cst_56 = arith.constant 0xFF800000 : f32
    %168 = vector.broadcast %cst_56 : f32 to vector<16x1x8xf32>
    %c1_57 = arith.constant 1 : index
    %c7_58 = arith.constant 7 : index
    %c0_59 = arith.constant 0 : index
    %169 = vector.load %arg11[%c1_57, %c7_58, %c0_59] : memref<18x32x8xf32, #tpu.memory_space<vmem>>, vector<16x1x8xf32>
    tpu.vector_store %arg11[%c1_57, %c7_58, %c0_59], %168 {strides = array<i32>} : memref<18x32x8xf32, #tpu.memory_space<vmem>>, vector<16x1x8xf32>,
    %c1_60 = arith.constant 1 : index
    %c8_61 = arith.constant 8 : index
    %c0_62 = arith.constant 0 : index
    %170 = vector.load %arg11[%c1_60, %c8_61, %c0_62] : memref<18x32x8xf32, #tpu.memory_space<vmem>>, vector<16x16x8xf32>
    tpu.vector_store %arg11[%c1_60, %c8_61, %c0_62], %165 {strides = array<i32>} : memref<18x32x8xf32, #tpu.memory_space<vmem>>, vector<16x16x8xf32>,
    %c0_63 = arith.constant 0 : index
    %c7_64 = arith.constant 7 : index
    %c0_65 = arith.constant 0 : index
    %171 = tpu.strided_load %arg11[%c0_63, %c7_64, %c0_65] {strides = array<i32: 2, 2, 1>} : memref<18x32x8xf32, #tpu.memory_space<vmem>>, vector<8x8x8xf32>
    %c0_66 = arith.constant 0 : index
    %c8_67 = arith.constant 8 : index
    %c0_68 = arith.constant 0 : index
    %172 = tpu.strided_load %arg11[%c0_66, %c8_67, %c0_68] {strides = array<i32: 2, 2, 1>} : memref<18x32x8xf32, #tpu.memory_space<vmem>>, vector<8x8x8xf32>
    %173 = arith.maximumf %171, %172 : vector<8x8x8xf32>
    %c0_69 = arith.constant 0 : index
    %c9 = arith.constant 9 : index
    %c0_70 = arith.constant 0 : index
    %174 = tpu.strided_load %arg11[%c0_69, %c9, %c0_70] {strides = array<i32: 2, 2, 1>} : memref<18x32x8xf32, #tpu.memory_space<vmem>>, vector<8x8x8xf32>
    %175 = arith.maximumf %173, %174 : vector<8x8x8xf32>
    %c1_71 = arith.constant 1 : index
    %c7_72 = arith.constant 7 : index
    %c0_73 = arith.constant 0 : index
    %176 = tpu.strided_load %arg11[%c1_71, %c7_72, %c0_73] {strides = array<i32: 2, 2, 1>} : memref<18x32x8xf32, #tpu.memory_space<vmem>>, vector<8x8x8xf32>
    %177 = arith.maximumf %175, %176 : vector<8x8x8xf32>
    %c1_74 = arith.constant 1 : index
    %c8_75 = arith.constant 8 : index
    %c0_76 = arith.constant 0 : index
    %178 = tpu.strided_load %arg11[%c1_74, %c8_75, %c0_76] {strides = array<i32: 2, 2, 1>} : memref<18x32x8xf32, #tpu.memory_space<vmem>>, vector<8x8x8xf32>
    %179 = arith.maximumf %177, %178 : vector<8x8x8xf32>
    %c1_77 = arith.constant 1 : index
    %c9_78 = arith.constant 9 : index
    %c0_79 = arith.constant 0 : index
    %180 = tpu.strided_load %arg11[%c1_77, %c9_78, %c0_79] {strides = array<i32: 2, 2, 1>} : memref<18x32x8xf32, #tpu.memory_space<vmem>>, vector<8x8x8xf32>
    %181 = arith.maximumf %179, %180 : vector<8x8x8xf32>
    %c2_80 = arith.constant 2 : index
    %c7_81 = arith.constant 7 : index
    %c0_82 = arith.constant 0 : index
    %182 = tpu.strided_load %arg11[%c2_80, %c7_81, %c0_82] {strides = array<i32: 2, 2, 1>} : memref<18x32x8xf32, #tpu.memory_space<vmem>>, vector<8x8x8xf32>
    %183 = arith.maximumf %181, %182 : vector<8x8x8xf32>
    %c2_83 = arith.constant 2 : index
    %c8_84 = arith.constant 8 : index
    %c0_85 = arith.constant 0 : index
    %184 = tpu.strided_load %arg11[%c2_83, %c8_84, %c0_85] {strides = array<i32: 2, 2, 1>} : memref<18x32x8xf32, #tpu.memory_space<vmem>>, vector<8x8x8xf32>
    %185 = arith.maximumf %183, %184 : vector<8x8x8xf32>
    %c2_86 = arith.constant 2 : index
    %c9_87 = arith.constant 9 : index
    %c0_88 = arith.constant 0 : index
    %186 = tpu.strided_load %arg11[%c2_86, %c9_87, %c0_88] {strides = array<i32: 2, 2, 1>} : memref<18x32x8xf32, #tpu.memory_space<vmem>>, vector<8x8x8xf32>
    %187 = arith.maximumf %185, %186 : vector<8x8x8xf32>
    %c0_89 = arith.constant 0 : index
    %c0_90 = arith.constant 0 : index
    %c0_91 = arith.constant 0 : index
    %c0_92 = arith.constant 0 : index
    %188 = tpu.strided_load %arg1[%c0_89, %c0_90, %c0_91, %c0_92] {strides = array<i32: 1, 2, 2, 1>} : memref<1x16x16x4xf32, #tpu.memory_space<vmem>>, vector<1x8x8x4xf32>
    %189 = vector.shape_cast %188 : vector<1x8x8x4xf32> to vector<8x8x4xf32>
    %190 = vector.shape_cast %189 : vector<8x8x4xf32> to vector<64x4xf32>
    %191 = arith.truncf %190 : vector<64x4xf32> to vector<64x4xbf16>
    %c0_93 = arith.constant 0 : index
    %c0_94 = arith.constant 0 : index
    %192 = vector.load %arg8[%c0_93, %c0_94] : memref<4x8xbf16, #tpu.memory_space<vmem>>, vector<4x8xbf16>
    %cst_95 = arith.constant dense<0.000000e+00> : vector<64x8xf32>
    %193 = tpu.matmul %191, %192, %cst_95 {dimension_numbers = #tpu.dot_dimension_numbers<[1], [0], [0], [1], [0, 0, 1, 1], [], []>} : vector<64x4xbf16>, vector<4x8xbf16>, vector<64x8xf32> -> vector<64x8xf32>
    %c0_96 = arith.constant 0 : index
    %c0_97 = arith.constant 0 : index
    %194 = vector.load %arg9[%c0_96, %c0_97] : memref<1x8xf32, #tpu.memory_space<vmem>>, vector<1x8xf32>
    %195 = vector.broadcast %194 : vector<1x8xf32> to vector<64x8xf32>
    %196 = arith.addf %193, %195 : vector<64x8xf32>
    %197 = vector.shape_cast %196 : vector<64x8xf32> to vector<8x8x8xf32>
    %198 = arith.addf %187, %197 : vector<8x8x8xf32>
    %c0_98 = arith.constant 0 : index
    %c0_99 = arith.constant 0 : index
    %c0_100 = arith.constant 0 : index
    %c0_101 = arith.constant 0 : index
    %199 = vector.load %arg10[%c0_98, %c0_99, %c0_100, %c0_101] : memref<1x8x8x8xf32, #tpu.memory_space<vmem>>, vector<1x8x8x8xf32>
    %200 = vector.shape_cast %199 : vector<1x8x8x8xf32> to vector<8x8x8xf32>
    %201 = vector.shape_cast %198 : vector<8x8x8xf32> to vector<1x8x8x8xf32>
    tpu.vector_store %arg10[%c0_98, %c0_99, %c0_100, %c0_101], %201 {strides = array<i32>} : memref<1x8x8x8xf32, #tpu.memory_space<vmem>>, vector<1x8x8x8xf32>,
    return
  }
  func.func @transform_0(%arg0: i32) -> (i32, i32, i32, i32) {
    %c0_i32 = arith.constant 0 : i32
    %c0_i32_0 = arith.constant 0 : i32
    %c0_i32_1 = arith.constant 0 : i32
    %c0_i32_2 = arith.constant 0 : i32
    return %arg0, %c0_i32, %c0_i32_0, %c0_i32_1 : i32, i32, i32, i32
  }
  func.func @transform_1(%arg0: i32) -> (i32, i32) {
    %c0_i32 = arith.constant 0 : i32
    %c0_i32_0 = arith.constant 0 : i32
    %c0_i32_1 = arith.constant 0 : i32
    return %c0_i32, %c0_i32_0 : i32, i32
  }
  func.func @transform_2(%arg0: i32) -> (i32, i32) {
    %c0_i32 = arith.constant 0 : i32
    %c0_i32_0 = arith.constant 0 : i32
    %c0_i32_1 = arith.constant 0 : i32
    return %c0_i32, %c0_i32_0 : i32, i32
  }
  func.func @transform_3(%arg0: i32) -> (i32, i32) {
    %c0_i32 = arith.constant 0 : i32
    %c0_i32_0 = arith.constant 0 : i32
    %c0_i32_1 = arith.constant 0 : i32
    return %c0_i32, %c0_i32_0 : i32, i32
  }
  func.func @transform_4(%arg0: i32) -> (i32, i32) {
    %c0_i32 = arith.constant 0 : i32
    %c0_i32_0 = arith.constant 0 : i32
    %c0_i32_1 = arith.constant 0 : i32
    return %c0_i32, %c0_i32_0 : i32, i32
  }
  func.func @transform_5(%arg0: i32) -> (i32, i32) {
    %c0_i32 = arith.constant 0 : i32
    %c0_i32_0 = arith.constant 0 : i32
    %c0_i32_1 = arith.constant 0 : i32
    return %c0_i32, %c0_i32_0 : i32, i32
  }
  func.func @transform_6(%arg0: i32) -> (i32, i32) {
    %c0_i32 = arith.constant 0 : i32
    %c0_i32_0 = arith.constant 0 : i32
    %c0_i32_1 = arith.constant 0 : i32
    return %c0_i32, %c0_i32_0 : i32, i32
  }
  func.func @transform_7(%arg0: i32) -> (i32, i32) {
    %c0_i32 = arith.constant 0 : i32
    %c0_i32_0 = arith.constant 0 : i32
    %c0_i32_1 = arith.constant 0 : i32
    return %c0_i32, %c0_i32_0 : i32, i32
  }
  func.func @transform_8(%arg0: i32) -> (i32, i32) {
    %c0_i32 = arith.constant 0 : i32
    %c0_i32_0 = arith.constant 0 : i32
    %c0_i32_1 = arith.constant 0 : i32
    return %c0_i32, %c0_i32_0 : i32, i32
  }
  func.func @transform_9(%arg0: i32) -> (i32, i32, i32, i32) {
    %c0_i32 = arith.constant 0 : i32
    %c0_i32_0 = arith.constant 0 : i32
    %c0_i32_1 = arith.constant 0 : i32
    %c0_i32_2 = arith.constant 0 : i32
    return %arg0, %c0_i32, %c0_i32_0, %c0_i32_1 : i32, i32, i32, i32
  }
}

</mosaic_0001>

<llo_original>
// kernel: tpu_custom_call.1
$region0: #{tpu_custom_call.1}
  #allocation0 [shape = 'u32[]', space=smem, size = 0x4, offset = 0x4, fixed_abs, tag = 'smem constant byte address 0x4 - core index']
  #allocation1 [shape = 'u32[144,128]{1,0:T(1,128)}', space=vmem, size = 0x12000, scoped, tag = 'internal scratch']
  #allocation2 [shape = 'f32[18,32,8]{2,1,0:T(8,128)}', space=vmem, size = 0x48000, scoped, tag = 'scratch operand']
  %s0 = inlined_call_operand.vmem [shape: f32[2,16,16,4], index: 0, kind: input, shape index: {}]
  %s1 = inlined_call_operand.vmem [shape: f32[9,4], index: 1, kind: input, shape index: {}]
  %s2 = inlined_call_operand.vmem [shape: bf16[4,8], index: 2, kind: input, shape index: {}]
  %s3 = inlined_call_operand.vmem [shape: f32[1,8], index: 3, kind: input, shape index: {}]
  %s4 = inlined_call_operand.vmem [shape: f32[9,8], index: 4, kind: input, shape index: {}]
  %s5 = inlined_call_operand.vmem [shape: bf16[8,8], index: 5, kind: input, shape index: {}]
  %s6 = inlined_call_operand.vmem [shape: f32[1,8], index: 6, kind: input, shape index: {}]
  %s7 = inlined_call_operand.vmem [shape: bf16[4,8], index: 7, kind: input, shape index: {}]
  %s8 = inlined_call_operand.vmem [shape: f32[1,8], index: 8, kind: input, shape index: {}]
  %s9 = inlined_call_operand.hbm [shape: f32[2,8,8,8], index: 9, kind: output, shape index: {}]
  %s10 = sld [smem:[#allocation0]]
  $region69: #{tpu_custom_call.1} parent=0
    _
  %s12 = ssub.s32 1, %s10
  %s13 = scalar_select 0, %s12, %s10
  $region1: #{tpu_custom_call.1} parent=0
    #allocation3 [shape = 'u8[65536]{0}', space=vmem, size = 0x10000, scoped, tag = 'output window, operand 0']
    #allocation4 [shape = 's32[2]{0}', space=sflag, size = 0x8, scoped, tag = 'scoped memory for tpu_custom_call.1']
    %14 = vsyncpa [#allocation4], 0
    %s15 = scalar_lea.sflag [#allocation4], 1
    %16 = vsyncpa %s15, 0
    loop: start=0, step=1, limit=4
    $region2: #{tpu_custom_call.1} parent=1 // loop_pre_header
      _
    $region3: #{tpu_custom_call.1} parent=1 // loop_header
      %s18 = sphi 0, %s22
      %p19 = scmp.ge.s32.totalorder %s18, 4
      %s28 = sphi 0, %s30
      %s31 = sphi 0, %s28
      %s32 = sphi 0, %s31
      %s48 = sphi 0, %s32
      %s52 = sphi 0, %s52
      %s54 = sphi 0, %s52
      %s55 = sphi 0, %s54
      %s69 = sphi 0, %s55
      %s73 = sphi 0, %s73
      %s75 = sphi 0, %s73
      %s76 = sphi 0, %s75
      %s90 = sphi 0, %s76
      %s94 = sphi 0, %s94
      %s96 = sphi 0, %s94
      %s97 = sphi 0, %s96
      %s111 = sphi 0, %s97
      %s115 = sphi 0, %s115
      %s117 = sphi 0, %s115
      %s118 = sphi 0, %s117
      %s132 = sphi 0, %s118
      %s136 = sphi 0, %s136
      %s138 = sphi 0, %s136
      %s139 = sphi 0, %s138
      %s153 = sphi 0, %s139
      %s157 = sphi 0, %s157
      %s159 = sphi 0, %s157
      %s160 = sphi 0, %s159
      %s174 = sphi 0, %s160
      %s178 = sphi 0, %s178
      %s180 = sphi 0, %s178
      %s181 = sphi 0, %s180
      %s195 = sphi 0, %s181
      %s199 = sphi 0, %s199
      %s201 = sphi 0, %s199
      %s202 = sphi 0, %s201
      %s216 = sphi 0, %s202
      %s222 = sphi 0, %s224
      %s225 = sphi 0, %s222
      %s226 = sphi 0, %s225
      %s242 = sphi 0, %s226
    $region4: #{tpu_custom_call.1} parent=1 // loop_header_branch
      %21 = sbr.rel (%p19) target = $region8
    $region5: #{tpu_custom_call.1} parent=1 // loop_body
      %s23 = ssub.s32 %s18, 1
      %s24 = ssub.s32 %s18, 2
      %s25 = sadd.s32 %s18, 1
      %s26 = ssub.s32 %s18, %s25
      %p27 = scmp.eq.s32.totalorder %s26, 0
      %s29 = sadd.s32 %s28, 1
      %s30 = scalar_select %p27, %s28, %s29
      %p33 = pneg %p27
      %p34 = scmp.eq.s32.totalorder %s18, 1
      %p35 = por %p33, %p34
      %p36 = scmp.ne.s32.totalorder %s28, %s31
      %p37 = scmp.eq.s32.totalorder %s18, 0
      %p38 = por %p36, %p37
      %p39 = scmp.ne.s32.totalorder %s28, %s31
      %p40 = scmp.eq.s32.totalorder %s23, 1
      %p41 = por %p39, %p40
      %p42 = scmp.ne.s32.totalorder %s31, %s32
      %p43 = scmp.eq.s32.totalorder %s23, 0
      %p44 = por %p42, %p43
      %p45 = scmp.ne.s32.totalorder %s31, %s32
      %p46 = scmp.eq.s32.totalorder %s24, 1
      %p47 = por %p45, %p46
      %p49 = scmp.ne.s32.totalorder %s32, %s48
      %p50 = scmp.eq.s32.totalorder %s24, 0
      %p51 = por %p49, %p50
      %s53 = sadd.s32 %s52, 1
      %p56 = scmp.eq.s32.totalorder %s18, 1
      %p57 = scmp.ne.s32.totalorder %s52, %s54
      %p58 = scmp.eq.s32.totalorder %s18, 0
      %p59 = por %p57, %p58
      %p60 = scmp.ne.s32.totalorder %s52, %s54
      %p61 = scmp.eq.s32.totalorder %s23, 1
      %p62 = por %p60, %p61
      %p63 = scmp.ne.s32.totalorder %s54, %s55
      %p64 = scmp.eq.s32.totalorder %s23, 0
      %p65 = por %p63, %p64
      %p66 = scmp.ne.s32.totalorder %s54, %s55
      %p67 = scmp.eq.s32.totalorder %s24, 1
      %p68 = por %p66, %p67
      %p70 = scmp.ne.s32.totalorder %s55, %s69
      %p71 = scmp.eq.s32.totalorder %s24, 0
      %p72 = por %p70, %p71
      %s74 = sadd.s32 %s73, 1
      %p77 = scmp.eq.s32.totalorder %s18, 1
      %p78 = scmp.ne.s32.totalorder %s73, %s75
      %p79 = scmp.eq.s32.totalorder %s18, 0
      %p80 = por %p78, %p79
      %p81 = scmp.ne.s32.totalorder %s73, %s75
      %p82 = scmp.eq.s32.totalorder %s23, 1
      %p83 = por %p81, %p82
      %p84 = scmp.ne.s32.totalorder %s75, %s76
      %p85 = scmp.eq.s32.totalorder %s23, 0
      %p86 = por %p84, %p85
      %p87 = scmp.ne.s32.totalorder %s75, %s76
      %p88 = scmp.eq.s32.totalorder %s24, 1
      %p89 = por %p87, %p88
      %p91 = scmp.ne.s32.totalorder %s76, %s90
      %p92 = scmp.eq.s32.totalorder %s24, 0
      %p93 = por %p91, %p92
      %s95 = sadd.s32 %s94, 1
      %p98 = scmp.eq.s32.totalorder %s18, 1
      %p99 = scmp.ne.s32.totalorder %s94, %s96
      %p100 = scmp.eq.s32.totalorder %s18, 0
      %p101 = por %p99, %p100
      %p102 = scmp.ne.s32.totalorder %s94, %s96
      %p103 = scmp.eq.s32.totalorder %s23, 1
      %p104 = por %p102, %p103
      %p105 = scmp.ne.s32.totalorder %s96, %s97
      %p106 = scmp.eq.s32.totalorder %s23, 0
      %p107 = por %p105, %p106
      %p108 = scmp.ne.s32.totalorder %s96, %s97
      %p109 = scmp.eq.s32.totalorder %s24, 1
      %p110 = por %p108, %p109
      %p112 = scmp.ne.s32.totalorder %s97, %s111
      %p113 = scmp.eq.s32.totalorder %s24, 0
      %p114 = por %p112, %p113
      %s116 = sadd.s32 %s115, 1
      %p119 = scmp.eq.s32.totalorder %s18, 1
      %p120 = scmp.ne.s32.totalorder %s115, %s117
      %p121 = scmp.eq.s32.totalorder %s18, 0
      %p122 = por %p120, %p121
      %p123 = scmp.ne.s32.totalorder %s115, %s117
      %p124 = scmp.eq.s32.totalorder %s23, 1
      %p125 = por %p123, %p124
      %p126 = scmp.ne.s32.totalorder %s117, %s118
      %p127 = scmp.eq.s32.totalorder %s23, 0
      %p128 = por %p126, %p127
      %p129 = scmp.ne.s32.totalorder %s117, %s118
      %p130 = scmp.eq.s32.totalorder %s24, 1
      %p131 = por %p129, %p130
      %p133 = scmp.ne.s32.totalorder %s118, %s132
      %p134 = scmp.eq.s32.totalorder %s24, 0
      %p135 = por %p133, %p134
      %s137 = sadd.s32 %s136, 1
      %p140 = scmp.eq.s32.totalorder %s18, 1
      %p141 = scmp.ne.s32.totalorder %s136, %s138
      %p142 = scmp.eq.s32.totalorder %s18, 0
      %p143 = por %p141, %p142
      %p144 = scmp.ne.s32.totalorder %s136, %s138
      %p145 = scmp.eq.s32.totalorder %s23, 1
      %p146 = por %p144, %p145
      %p147 = scmp.ne.s32.totalorder %s138, %s139
      %p148 = scmp.eq.s32.totalorder %s23, 0
      %p149 = por %p147, %p148
      %p150 = scmp.ne.s32.totalorder %s138, %s139
      %p151 = scmp.eq.s32.totalorder %s24, 1
      %p152 = por %p150, %p151
      %p154 = scmp.ne.s32.totalorder %s139, %s153
      %p155 = scmp.eq.s32.totalorder %s24, 0
      %p156 = por %p154, %p155
      %s158 = sadd.s32 %s157, 1
      %p161 = scmp.eq.s32.totalorder %s18, 1
      %p162 = scmp.ne.s32.totalorder %s157, %s159
      %p163 = scmp.eq.s32.totalorder %s18, 0
      %p164 = por %p162, %p163
      %p165 = scmp.ne.s32.totalorder %s157, %s159
      %p166 = scmp.eq.s32.totalorder %s23, 1
      %p167 = por %p165, %p166
      %p168 = scmp.ne.s32.totalorder %s159, %s160
      %p169 = scmp.eq.s32.totalorder %s23, 0
      %p170 = por %p168, %p169
      %p171 = scmp.ne.s32.totalorder %s159, %s160
      %p172 = scmp.eq.s32.totalorder %s24, 1
      %p173 = por %p171, %p172
      %p175 = scmp.ne.s32.totalorder %s160, %s174
      %p176 = scmp.eq.s32.totalorder %s24, 0
      %p177 = por %p175, %p176
      %s179 = sadd.s32 %s178, 1
      %p182 = scmp.eq.s32.totalorder %s18, 1
      %p183 = scmp.ne.s32.totalorder %s178, %s180
      %p184 = scmp.eq.s32.totalorder %s18, 0
      %p185 = por %p183, %p184
      %p186 = scmp.ne.s32.totalorder %s178, %s180
      %p187 = scmp.eq.s32.totalorder %s23, 1
      %p188 = por %p186, %p187
      %p189 = scmp.ne.s32.totalorder %s180, %s181
      %p190 = scmp.eq.s32.totalorder %s23, 0
      %p191 = por %p189, %p190
      %p192 = scmp.ne.s32.totalorder %s180, %s181
      %p193 = scmp.eq.s32.totalorder %s24, 1
      %p194 = por %p192, %p193
      %p196 = scmp.ne.s32.totalorder %s181, %s195
      %p197 = scmp.eq.s32.totalorder %s24, 0
      %p198 = por %p196, %p197
      %s200 = sadd.s32 %s199, 1
      %p203 = scmp.eq.s32.totalorder %s18, 1
      %p204 = scmp.ne.s32.totalorder %s199, %s201
      %p205 = scmp.eq.s32.totalorder %s18, 0
      %p206 = por %p204, %p205
      %p207 = scmp.ne.s32.totalorder %s199, %s201
      %p208 = scmp.eq.s32.totalorder %s23, 1
      %p209 = por %p207, %p208
      %p210 = scmp.ne.s32.totalorder %s201, %s202
      %p211 = scmp.eq.s32.totalorder %s23, 0
      %p212 = por %p210, %p211
      %p213 = scmp.ne.s32.totalorder %s201, %s202
      %p214 = scmp.eq.s32.totalorder %s24, 1
      %p215 = por %p213, %p214
      %p217 = scmp.ne.s32.totalorder %s202, %s216
      %p218 = scmp.eq.s32.totalorder %s24, 0
      %p219 = por %p217, %p218
      %s220 = ssub.s32 %s18, %s25
      %p221 = scmp.eq.s32.totalorder %s220, 0
      %s223 = sadd.s32 %s222, 1
      %s224 = scalar_select %p221, %s222, %s223
      %p227 = pneg %p221
      %p228 = scmp.eq.s32.totalorder %s18, 1
      %p229 = por %p227, %p228
      %p230 = scmp.ne.s32.totalorder %s222, %s225
      %p231 = scmp.eq.s32.totalorder %s18, 0
      %p232 = por %p230, %p231
      %p233 = scmp.ne.s32.totalorder %s222, %s225
      %p234 = scmp.eq.s32.totalorder %s23, 1
      %p235 = por %p233, %p234
      %p236 = scmp.ne.s32.totalorder %s225, %s226
      %p237 = scmp.eq.s32.totalorder %s23, 0
      %p238 = por %p236, %p237
      %p239 = scmp.ne.s32.totalorder %s225, %s226
      %p240 = scmp.eq.s32.totalorder %s24, 1
      %p241 = por %p239, %p240
      %p243 = scmp.ne.s32.totalorder %s226, %s242
      %p244 = scmp.eq.s32.totalorder %s24, 0
      %p245 = por %p243, %p244
      %p246 = scmp.le.s32.totalorder 1, %s18
      %p247 = scmp.lt.s32.totalorder %s18, 3
      %p248 = pnand %p246, %p247
      %p249 = pneg %p248
      // Predicated region
      $region9: #{tpu_custom_call.1} parent=5 // pred_check
        _
      $region10: #{tpu_custom_call.1} parent=5 // pred_check_branch
        %251 = sbr.rel (%p248) target = $region12
      $region11: #{tpu_custom_call.1} parent=5 // pred_region
        %s252 = ssub.s32 %s18, 1
        // Predicated region
        $region13: #{tpu_custom_call.1} parent=11 // pred_check
          %p253 = pneg %p65
        $region14: #{tpu_custom_call.1} parent=11 // pred_check_branch
          %255 = sbr.rel (%p253) target = $region16
        $region15: #{tpu_custom_call.1} parent=11 // pred_region
          _
        $region16: #{tpu_custom_call.1} parent=11 // pred_fallthru
          _
        // Predicated region
        $region17: #{tpu_custom_call.1} parent=11 // pred_check
          %p256 = pneg %p86
        $region18: #{tpu_custom_call.1} parent=11 // pred_check_branch
          %258 = sbr.rel (%p256) target = $region20
        $region19: #{tpu_custom_call.1} parent=11 // pred_region
          _
        $region20: #{tpu_custom_call.1} parent=11 // pred_fallthru
          _
        // Predicated region
        $region21: #{tpu_custom_call.1} parent=11 // pred_check
          %p259 = pneg %p107
        $region22: #{tpu_custom_call.1} parent=11 // pred_check_branch
          %261 = sbr.rel (%p259) target = $region24
        $region23: #{tpu_custom_call.1} parent=11 // pred_region
          _
        $region24: #{tpu_custom_call.1} parent=11 // pred_fallthru
          _
        // Predicated region
        $region25: #{tpu_custom_call.1} parent=11 // pred_check
          %p262 = pneg %p128
        $region26: #{tpu_custom_call.1} parent=11 // pred_check_branch
          %264 = sbr.rel (%p262) target = $region28
        $region27: #{tpu_custom_call.1} parent=11 // pred_region
          _
        $region28: #{tpu_custom_call.1} parent=11 // pred_fallthru
          _
        // Predicated region
        $region29: #{tpu_custom_call.1} parent=11 // pred_check
          %p265 = pneg %p149
        $region30: #{tpu_custom_call.1} parent=11 // pred_check_branch
          %267 = sbr.rel (%p265) target = $region32
        $region31: #{tpu_custom_call.1} parent=11 // pred_region
          _
        $region32: #{tpu_custom_call.1} parent=11 // pred_fallthru
          _
        // Predicated region
        $region33: #{tpu_custom_call.1} parent=11 // pred_check
          %p268 = pneg %p170
        $region34: #{tpu_custom_call.1} parent=11 // pred_check_branch
          %270 = sbr.rel (%p268) target = $region36
        $region35: #{tpu_custom_call.1} parent=11 // pred_region
          _
        $region36: #{tpu_custom_call.1} parent=11 // pred_fallthru
          _
        // Predicated region
        $region37: #{tpu_custom_call.1} parent=11 // pred_check
          %p271 = pneg %p191
        $region38: #{tpu_custom_call.1} parent=11 // pred_check_branch
          %273 = sbr.rel (%p271) target = $region40
        $region39: #{tpu_custom_call.1} parent=11 // pred_region
          _
        $region40: #{tpu_custom_call.1} parent=11 // pred_fallthru
          _
        // Predicated region
        $region41: #{tpu_custom_call.1} parent=11 // pred_check
          %p274 = pneg %p212
        $region42: #{tpu_custom_call.1} parent=11 // pred_check_branch
          %276 = sbr.rel (%p274) target = $region44
        $region43: #{tpu_custom_call.1} parent=11 // pred_region
          _
        $region44: #{tpu_custom_call.1} parent=11 // pred_fallthru
          _
      $region12: #{tpu_custom_call.1} parent=5 // pred_fallthru
        _
      %p277 = scmp.lt.s32.totalorder %s18, 2
      // Predicated region
      $region45: #{tpu_custom_call.1} parent=5 // pred_check
        %p278 = pneg %p277
      $region46: #{tpu_custom_call.1} parent=5 // pred_check_branch
        %280 = sbr.rel (%p278) target = $region48
      $region47: #{tpu_custom_call.1} parent=5 // pred_region
        // Predicated region
        $region49: #{tpu_custom_call.1} parent=47 // pred_check
          %p281 = pneg %p38
        $region50: #{tpu_custom_call.1} parent=47 // pred_check_branch
          %283 = sbr.rel (%p281) target = $region52
        $region51: #{tpu_custom_call.1} parent=47 // pred_region
          %p284 = scmp.lt.s32.totalorder %s18, 1
          %s285 = scalar_select %p284, %s18, 1
          %s286 = smul.addr %s285, 32
          %s287 = smul.addr %s286, 8
          %s288 = scalar_lea.vmem %s0, %s287
        $region52: #{tpu_custom_call.1} parent=47 // pred_fallthru
          _
      $region48: #{tpu_custom_call.1} parent=5 // pred_fallthru
        _
      %p289 = scmp.le.s32.totalorder 1, %s18
      %p290 = scmp.lt.s32.totalorder %s18, 3
      %p291 = pnand %p289, %p290
      %p292 = pneg %p291
      // Predicated region
      $region53: #{tpu_custom_call.1} parent=5 // pred_check
        _
      $region54: #{tpu_custom_call.1} parent=5 // pred_check_branch
        %294 = sbr.rel (%p291) target = $region56
      $region55: #{tpu_custom_call.1} parent=5 // pred_region
        %s295 = ssub.s32 %s18, 1
        %p296 = scmp.lt.s32.totalorder %s23, 1
        %s297 = scalar_select %p296, %s23, 1
        %s298 = smul.addr %s297, 32
        %s299 = smul.addr %s298, 8
        %s300 = scalar_lea.vmem %s0, %s299
        %p301 = pneg %p44
        %p302 = pneg %p41
        %p303 = pneg %p65
        %p304 = pneg %p62
        %p305 = pneg %p86
        %p306 = pneg %p83
        %p307 = pneg %p107
        %p308 = pneg %p104
        %p309 = pneg %p128
        %p310 = pneg %p125
        %p311 = pneg %p149
        %p312 = pneg %p146
        %p313 = pneg %p170
        %p314 = pneg %p167
        %p315 = pneg %p191
        %p316 = pneg %p188
        %p317 = pneg %p212
        %p318 = pneg %p209
        %p319 = pneg %p238
        %p320 = pneg %p235
        %s321 = sand.u32 %s225, 1
        %s322 = scalar_lea.sflag [#allocation4], %s321
        %s323 = sand.u32 %s225, 1
        %s324 = smul.addr %s323, 64
        %s325 = scalar_lea.vmem [#allocation3], %s324
        %p326 = scmp.lt.s32.totalorder %s23, 1
        %s327 = scalar_select %p326, %s23, 1
        %s328 = smul.addr %s327, 32
        %s329 = smul.addr %s328, 8
        %s330 = scalar_lea.vmem %s0, %s329
        %vm332 = vcmask 64512
        %333 = vst.msk [vmem:[#allocation2] sm:$0xff] %vm332, 0.0
        %334 = vst.msk [vmem:[#allocation2 + $0x8] sm:$0xff] %vm332, 0.0
        %335 = vst.msk [vmem:[#allocation2 + $0x10] sm:$0xff] %vm332, 0.0
        %336 = vst.msk [vmem:[#allocation2 + $0x18] sm:$0xff] %vm332, 0.0
        %s337 = scalar_lea.vmem [#allocation2], 544
        %338 = vst.msk [vmem:[%s337] sm:$0xff] %vm332, 0.0
        %339 = vst.msk [vmem:[%s337 + $0x8] sm:$0xff] %vm332, 0.0
        %340 = vst.msk [vmem:[%s337 + $0x10] sm:$0xff] %vm332, 0.0
        %341 = vst.msk [vmem:[%s337 + $0x18] sm:$0xff] %vm332, 0.0
        %vm342 = vcmask 57344
        %343 = vst.msk [vmem:[#allocation2 + $0x7] sm:$0x1] %vm342, 0.0
        %344 = vst.msk [vmem:[#allocation2 + $0x27] sm:$0x1] %vm342, 0.0
        %345 = vst.msk [vmem:[#allocation2 + $0x47] sm:$0x1] %vm342, 0.0
        %346 = vst.msk [vmem:[#allocation2 + $0x67] sm:$0x1] %vm342, 0.0
        %347 = vst.msk [vmem:[#allocation2 + $0x87] sm:$0x1] %vm342, 0.0
        %348 = vst.msk [vmem:[#allocation2 + $0xa7] sm:$0x1] %vm342, 0.0
        %349 = vst.msk [vmem:[#allocation2 + $0xc7] sm:$0x1] %vm342, 0.0
        %350 = vst.msk [vmem:[#allocation2 + $0xe7] sm:$0x1] %vm342, 0.0
        %351 = vst.msk [vmem:[#allocation2 + $0x107] sm:$0x1] %vm342, 0.0
        %352 = vst.msk [vmem:[#allocation2 + $0x127] sm:$0x1] %vm342, 0.0
        %353 = vst.msk [vmem:[#allocation2 + $0x147] sm:$0x1] %vm342, 0.0
        %354 = vst.msk [vmem:[#allocation2 + $0x167] sm:$0x1] %vm342, 0.0
        %355 = vst.msk [vmem:[#allocation2 + $0x187] sm:$0x1] %vm342, 0.0
        %356 = vst.msk [vmem:[#allocation2 + $0x1a7] sm:$0x1] %vm342, 0.0
        %357 = vst.msk [vmem:[#allocation2 + $0x1c7] sm:$0x1] %vm342, 0.0
        %358 = vst.msk [vmem:[#allocation2 + $0x1e7] sm:$0x1] %vm342, 0.0
        %359 = vst.msk [vmem:[#allocation2 + $0x207] sm:$0x1] %vm342, 0.0
        %360 = vst.msk [vmem:[#allocation2 + $0x227] sm:$0x1] %vm342, 0.0
        %361 = vst.msk [vmem:[#allocation2 + $0x18] sm:$0x1] %vm342, 0.0
        %362 = vst.msk [vmem:[#allocation2 + $0x38] sm:$0x1] %vm342, 0.0
        %363 = vst.msk [vmem:[#allocation2 + $0x58] sm:$0x1] %vm342, 0.0
        %364 = vst.msk [vmem:[#allocation2 + $0x78] sm:$0x1] %vm342, 0.0
        %365 = vst.msk [vmem:[#allocation2 + $0x98] sm:$0x1] %vm342, 0.0
        %366 = vst.msk [vmem:[#allocation2 + $0xb8] sm:$0x1] %vm342, 0.0
        %367 = vst.msk [vmem:[#allocation2 + $0xd8] sm:$0x1] %vm342, 0.0
        %368 = vst.msk [vmem:[#allocation2 + $0xf8] sm:$0x1] %vm342, 0.0
        %369 = vst.msk [vmem:[#allocation2 + $0x118] sm:$0x1] %vm342, 0.0
        %370 = vst.msk [vmem:[#allocation2 + $0x138] sm:$0x1] %vm342, 0.0
        %371 = vst.msk [vmem:[#allocation2 + $0x158] sm:$0x1] %vm342, 0.0
        %372 = vst.msk [vmem:[#allocation2 + $0x178] sm:$0x1] %vm342, 0.0
        %373 = vst.msk [vmem:[#allocation2 + $0x198] sm:$0x1] %vm342, 0.0
        %374 = vst.msk [vmem:[#allocation2 + $0x1b8] sm:$0x1] %vm342, 0.0
        %375 = vst.msk [vmem:[#allocation2 + $0x1d8] sm:$0x1] %vm342, 0.0
        %376 = vst.msk [vmem:[#allocation2 + $0x1f8] sm:$0x1] %vm342, 0.0
        %377 = vst.msk [vmem:[#allocation2 + $0x218] sm:$0x1] %vm342, 0.0
        %378 = vst.msk [vmem:[#allocation2 + $0x238] sm:$0x1] %vm342, 0.0
        %v379 = vld [vmem:[%s330] sm:$0xff]
        %v380 = vld [vmem:[%s330 + $0x8] sm:$0xff]
        %v381 = vld [vmem:[%s330 + $0x10] sm:$0xff]
        %v382 = vld [vmem:[%s330 + $0x18] sm:$0xff]
        %v383 = vld [vmem:[%s330 + $0x20] sm:$0xff]
        %v384 = vld [vmem:[%s330 + $0x28] sm:$0xff]
        %v385 = vld [vmem:[%s330 + $0x30] sm:$0xff]
        %v386 = vld [vmem:[%s330 + $0x38] sm:$0xff]
        %v387 = vld [vmem:[%s330 + $0x40] sm:$0xff]
        %v388 = vld [vmem:[%s330 + $0x48] sm:$0xff]
        %v389 = vld [vmem:[%s330 + $0x50] sm:$0xff]
        %v390 = vld [vmem:[%s330 + $0x58] sm:$0xff]
        %v391 = vld [vmem:[%s330 + $0x60] sm:$0xff]
        %v392 = vld [vmem:[%s330 + $0x68] sm:$0xff]
        %v393 = vld [vmem:[%s330 + $0x70] sm:$0xff]
        %v394 = vld [vmem:[%s330 + $0x78] sm:$0xff]
        %v395 = vld [vmem:[%s330 + $0x80] sm:$0xff]
        %v396 = vld [vmem:[%s330 + $0x88] sm:$0xff]
        %v397 = vld [vmem:[%s330 + $0x90] sm:$0xff]
        %v398 = vld [vmem:[%s330 + $0x98] sm:$0xff]
        %v399 = vld [vmem:[%s330 + $0xa0] sm:$0xff]
        %v400 = vld [vmem:[%s330 + $0xa8] sm:$0xff]
        %v401 = vld [vmem:[%s330 + $0xb0] sm:$0xff]
        %v402 = vld [vmem:[%s330 + $0xb8] sm:$0xff]
        %v403 = vld [vmem:[%s330 + $0xc0] sm:$0xff]
        %v404 = vld [vmem:[%s330 + $0xc8] sm:$0xff]
        %v405 = vld [vmem:[%s330 + $0xd0] sm:$0xff]
        %v406 = vld [vmem:[%s330 + $0xd8] sm:$0xff]
        %v407 = vld [vmem:[%s330 + $0xe0] sm:$0xff]
        %v408 = vld [vmem:[%s330 + $0xe8] sm:$0xff]
        %v409 = vld [vmem:[%s330 + $0xf0] sm:$0xff]
        %v410 = vld [vmem:[%s330 + $0xf8] sm:$0xff]
        %v411 = vmax.f32 %v379, 0.0
        %v412 = vmax.f32 %v380, 0.0
        %v413 = vmax.f32 %v381, 0.0
        %v414 = vmax.f32 %v382, 0.0
        %v415 = vmax.f32 %v383, 0.0
        %v416 = vmax.f32 %v384, 0.0
        %v417 = vmax.f32 %v385, 0.0
        %v418 = vmax.f32 %v386, 0.0
        %v419 = vmax.f32 %v387, 0.0
        %v420 = vmax.f32 %v388, 0.0
        %v421 = vmax.f32 %v389, 0.0
        %v422 = vmax.f32 %v390, 0.0
        %v423 = vmax.f32 %v391, 0.0
        %v424 = vmax.f32 %v392, 0.0
        %v425 = vmax.f32 %v393, 0.0
        %v426 = vmax.f32 %v394, 0.0
        %v427 = vmax.f32 %v395, 0.0
        %v428 = vmax.f32 %v396, 0.0
        %v429 = vmax.f32 %v397, 0.0
        %v430 = vmax.f32 %v398, 0.0
        %v431 = vmax.f32 %v399, 0.0
        %v432 = vmax.f32 %v400, 0.0
        %v433 = vmax.f32 %v401, 0.0
        %v434 = vmax.f32 %v402, 0.0
        %v435 = vmax.f32 %v403, 0.0
        %v436 = vmax.f32 %v404, 0.0
        %v437 = vmax.f32 %v405, 0.0
        %v438 = vmax.f32 %v406, 0.0
        %v439 = vmax.f32 %v407, 0.0
        %v440 = vmax.f32 %v408, 0.0
        %v441 = vmax.f32 %v409, 0.0
        %v442 = vmax.f32 %v410, 0.0
        %s443 = scalar_lea.vmem [#allocation2], 32
        %vm444 = vcmask 31744
        %445 = vst.msk [vmem:[%s443 + $0x8] sm:$0xff] %vm444, %v411
        %446 = vst.msk [vmem:[%s443 + $0x10] sm:$0xff] %vm444, %v412
        %447 = vst.msk [vmem:[%s443 + $0x28] sm:$0xff] %vm444, %v413
        %448 = vst.msk [vmem:[%s443 + $0x30] sm:$0xff] %vm444, %v414
        %449 = vst.msk [vmem:[%s443 + $0x48] sm:$0xff] %vm444, %v415
        %450 = vst.msk [vmem:[%s443 + $0x50] sm:$0xff] %vm444, %v416
        %451 = vst.msk [vmem:[%s443 + $0x68] sm:$0xff] %vm444, %v417
        %452 = vst.msk [vmem:[%s443 + $0x70] sm:$0xff] %vm444, %v418
        %453 = vst.msk [vmem:[%s443 + $0x88] sm:$0xff] %vm444, %v419
        %454 = vst.msk [vmem:[%s443 + $0x90] sm:$0xff] %vm444, %v420
        %455 = vst.msk [vmem:[%s443 + $0xa8] sm:$0xff] %vm444, %v421
        %456 = vst.msk [vmem:[%s443 + $0xb0] sm:$0xff] %vm444, %v422
        %457 = vst.msk [vmem:[%s443 + $0xc8] sm:$0xff] %vm444, %v423
        %458 = vst.msk [vmem:[%s443 + $0xd0] sm:$0xff] %vm444, %v424
        %459 = vst.msk [vmem:[%s443 + $0xe8] sm:$0xff] %vm444, %v425
        %460 = vst.msk [vmem:[%s443 + $0xf0] sm:$0xff] %vm444, %v426
        %461 = vst.msk [vmem:[%s443 + $0x108] sm:$0xff] %vm444, %v427
        %462 = vst.msk [vmem:[%s443 + $0x110] sm:$0xff] %vm444, %v428
        %463 = vst.msk [vmem:[%s443 + $0x128] sm:$0xff] %vm444, %v429
        %464 = vst.msk [vmem:[%s443 + $0x130] sm:$0xff] %vm444, %v430
        %465 = vst.msk [vmem:[%s443 + $0x148] sm:$0xff] %vm444, %v431
        %466 = vst.msk [vmem:[%s443 + $0x150] sm:$0xff] %vm444, %v432
        %467 = vst.msk [vmem:[%s443 + $0x168] sm:$0xff] %vm444, %v433
        %468 = vst.msk [vmem:[%s443 + $0x170] sm:$0xff] %vm444, %v434
        %469 = vst.msk [vmem:[%s443 + $0x188] sm:$0xff] %vm444, %v435
        %470 = vst.msk [vmem:[%s443 + $0x190] sm:$0xff] %vm444, %v436
        %471 = vst.msk [vmem:[%s443 + $0x1a8] sm:$0xff] %vm444, %v437
        %472 = vst.msk [vmem:[%s443 + $0x1b0] sm:$0xff] %vm444, %v438
        %473 = vst.msk [vmem:[%s443 + $0x1c8] sm:$0xff] %vm444, %v439
        %474 = vst.msk [vmem:[%s443 + $0x1d0] sm:$0xff] %vm444, %v440
        %475 = vst.msk [vmem:[%s443 + $0x1e8] sm:$0xff] %vm444, %v441
        %476 = vst.msk [vmem:[%s443 + $0x1f0] sm:$0xff] %vm444, %v442
        %v477 = vld [vmem:[%s1] sm:$0xff]
        %v478 = vld [vmem:[%s1 + $0x8] sm:$0x1]
        %v479 = vld [vmem:[#allocation2] sm:$0xff]
        %v480 = vld [vmem:[#allocation2 + $0x8] sm:$0xff]
        %v481 = vld [vmem:[#allocation2 + $0x10] sm:$0xff]
        %v482 = vld [vmem:[#allocation2 + $0x18] sm:$0xff]
        %v483 = vld [vmem:[#allocation2 + $0x20] sm:$0xff]
        %v484 = vld [vmem:[#allocation2 + $0x28] sm:$0xff]
        %v485 = vld [vmem:[#allocation2 + $0x30] sm:$0xff]
        %v486 = vld [vmem:[#allocation2 + $0x38] sm:$0xff]
        %v487 = vld [vmem:[#allocation2 + $0x40] sm:$0xff]
        %v488 = vld [vmem:[#allocation2 + $0x48] sm:$0xff]
        %v489 = vld [vmem:[#allocation2 + $0x50] sm:$0xff]
        %v490 = vld [vmem:[#allocation2 + $0x58] sm:$0xff]
        %v491 = vld [vmem:[#allocation2 + $0x60] sm:$0xff]
        %v492 = vld [vmem:[#allocation2 + $0x68] sm:$0xff]
        %v493 = vld [vmem:[#allocation2 + $0x70] sm:$0xff]
        %v494 = vld [vmem:[#allocation2 + $0x78] sm:$0xff]
        %v495 = vld [vmem:[#allocation2 + $0x80] sm:$0xff]
        %v496 = vld [vmem:[#allocation2 + $0x88] sm:$0xff]
        %v497 = vld [vmem:[#allocation2 + $0x90] sm:$0xff]
        %v498 = vld [vmem:[#allocation2 + $0x98] sm:$0xff]
        %v499 = vld [vmem:[#allocation2 + $0xa0] sm:$0xff]
        %v500 = vld [vmem:[#allocation2 + $0xa8] sm:$0xff]
        %v501 = vld [vmem:[#allocation2 + $0xb0] sm:$0xff]
        %v502 = vld [vmem:[#allocation2 + $0xb8] sm:$0xff]
        %v503 = vld [vmem:[#allocation2 + $0xc0] sm:$0xff]
        %v504 = vld [vmem:[#allocation2 + $0xc8] sm:$0xff]
        %v505 = vld [vmem:[#allocation2 + $0xd0] sm:$0xff]
        %v506 = vld [vmem:[#allocation2 + $0xd8] sm:$0xff]
        %v507 = vld [vmem:[#allocation2 + $0xe0] sm:$0xff]
        %v508 = vld [vmem:[#allocation2 + $0xe8] sm:$0xff]
        %v509 = vld [vmem:[#allocation2 + $0xf0] sm:$0xff]
        %v510 = vld [vmem:[#allocation2 + $0xf8] sm:$0xff]
        %v511 = vld [vmem:[#allocation2 + $0x100] sm:$0xff]
        %v512 = vld [vmem:[#allocation2 + $0x108] sm:$0xff]
        %v513 = vld [vmem:[#allocation2 + $0x110] sm:$0xff]
        %v514 = vld [vmem:[#allocation2 + $0x118] sm:$0xff]
        %v515 = vld [vmem:[#allocation2 + $0x120] sm:$0xff]
        %v516 = vld [vmem:[#allocation2 + $0x128] sm:$0xff]
        %v517 = vld [vmem:[#allocation2 + $0x130] sm:$0xff]
        %v518 = vld [vmem:[#allocation2 + $0x138] sm:$0xff]
        %v519 = vld [vmem:[#allocation2 + $0x140] sm:$0xff]
        %v520 = vld [vmem:[#allocation2 + $0x148] sm:$0xff]
        %v521 = vld [vmem:[#allocation2 + $0x150] sm:$0xff]
        %v522 = vld [vmem:[#allocation2 + $0x158] sm:$0xff]
        %v523 = vld [vmem:[#allocation2 + $0x160] sm:$0xff]
        %v524 = vld [vmem:[#allocation2 + $0x168] sm:$0xff]
        %v525 = vld [vmem:[#allocation2 + $0x170] sm:$0xff]
        %v526 = vld [vmem:[#allocation2 + $0x178] sm:$0xff]
        %v527 = vld [vmem:[#allocation2 + $0x180] sm:$0xff]
        %v528 = vld [vmem:[#allocation2 + $0x188] sm:$0xff]
        %v529 = vld [vmem:[#allocation2 + $0x190] sm:$0xff]
        %v530 = vld [vmem:[#allocation2 + $0x198] sm:$0xff]
        %v531 = vld [vmem:[#allocation2 + $0x1a0] sm:$0xff]
        %v532 = vld [vmem:[#allocation2 + $0x1a8] sm:$0xff]
        %v533 = vld [vmem:[#allocation2 + $0x1b0] sm:$0xff]
        %v534 = vld [vmem:[#allocation2 + $0x1b8] sm:$0xff]
        %v535 = vld [vmem:[#allocation2 + $0x1c0] sm:$0xff]
        %v536 = vld [vmem:[#allocation2 + $0x1c8] sm:$0xff]
        %v537 = vld [vmem:[#allocation2 + $0x1d0] sm:$0xff]
        %v538 = vld [vmem:[#allocation2 + $0x1d8] sm:$0xff]
        %v539 = vld [vmem:[#allocation2 + $0x1e0] sm:$0xff]
        %v540 = vld [vmem:[#allocation2 + $0x1e8] sm:$0xff]
        %v541 = vld [vmem:[#allocation2 + $0x1f0] sm:$0xff]
        %v542 = vld [vmem:[#allocation2 + $0x1f8] sm:$0xff]
        %v543 = vlaneseq
        %v544 = vshrl.u32 %v543, 7
        %v545 = vsub.s32 0, %v544
        %v546 = vrot.slane %v477, %v545
        %v547 = vmul.f32 %v479, %v546
        %v548 = vmul.f32 %v480, %v546
        %v549 = vmul.f32 %v481, %v546
        %v550 = vmul.f32 %v483, %v546
        %v551 = vmul.f32 %v484, %v546
        %v552 = vmul.f32 %v485, %v546
        %v553 = vmul.f32 %v487, %v546
        %v554 = vmul.f32 %v488, %v546
        %v555 = vmul.f32 %v489, %v546
        %v556 = vmul.f32 %v491, %v546
        %v557 = vmul.f32 %v492, %v546
        %v558 = vmul.f32 %v493, %v546
        %v559 = vmul.f32 %v495, %v546
        %v560 = vmul.f32 %v496, %v546
        %v561 = vmul.f32 %v497, %v546
        %v562 = vmul.f32 %v499, %v546
        %v563 = vmul.f32 %v500, %v546
        %v564 = vmul.f32 %v501, %v546
        %v565 = vmul.f32 %v503, %v546
        %v566 = vmul.f32 %v504, %v546
        %v567 = vmul.f32 %v505, %v546
        %v568 = vmul.f32 %v507, %v546
        %v569 = vmul.f32 %v508, %v546
        %v570 = vmul.f32 %v509, %v546
        %v571 = vmul.f32 %v511, %v546
        %v572 = vmul.f32 %v512, %v546
        %v573 = vmul.f32 %v513, %v546
        %v574 = vmul.f32 %v515, %v546
        %v575 = vmul.f32 %v516, %v546
        %v576 = vmul.f32 %v517, %v546
        %v577 = vmul.f32 %v519, %v546
        %v578 = vmul.f32 %v520, %v546
        %v579 = vmul.f32 %v521, %v546
        %v580 = vmul.f32 %v523, %v546
        %v581 = vmul.f32 %v524, %v546
        %v582 = vmul.f32 %v525, %v546
        %v583 = vmul.f32 %v527, %v546
        %v584 = vmul.f32 %v528, %v546
        %v585 = vmul.f32 %v529, %v546
        %v586 = vmul.f32 %v531, %v546
        %v587 = vmul.f32 %v532, %v546
        %v588 = vmul.f32 %v533, %v546
        %v589 = vmul.f32 %v535, %v546
        %v590 = vmul.f32 %v536, %v546
        %v591 = vmul.f32 %v537, %v546
        %v592 = vmul.f32 %v539, %v546
        %v593 = vmul.f32 %v540, %v546
        %v594 = vmul.f32 %v541, %v546
        %v595 = vadd.f32 %v547, 0.0
        %v596 = vadd.f32 %v548, 0.0
        %v597 = vadd.f32 %v549, 0.0
        %v598 = vadd.f32 %v550, 0.0
        %v599 = vadd.f32 %v551, 0.0
        %v600 = vadd.f32 %v552, 0.0
        %v601 = vadd.f32 %v553, 0.0
        %v602 = vadd.f32 %v554, 0.0
        %v603 = vadd.f32 %v555, 0.0
        %v604 = vadd.f32 %v556, 0.0
        %v605 = vadd.f32 %v557, 0.0
        %v606 = vadd.f32 %v558, 0.0
        %v607 = vadd.f32 %v559, 0.0
        %v608 = vadd.f32 %v560, 0.0
        %v609 = vadd.f32 %v561, 0.0
        %v610 = vadd.f32 %v562, 0.0
        %v611 = vadd.f32 %v563, 0.0
        %v612 = vadd.f32 %v564, 0.0
        %v613 = vadd.f32 %v565, 0.0
        %v614 = vadd.f32 %v566, 0.0
        %v615 = vadd.f32 %v567, 0.0
        %v616 = vadd.f32 %v568, 0.0
        %v617 = vadd.f32 %v569, 0.0
        %v618 = vadd.f32 %v570, 0.0
        %v619 = vadd.f32 %v571, 0.0
        %v620 = vadd.f32 %v572, 0.0
        %v621 = vadd.f32 %v573, 0.0
        %v622 = vadd.f32 %v574, 0.0
        %v623 = vadd.f32 %v575, 0.0
        %v624 = vadd.f32 %v576, 0.0
        %v625 = vadd.f32 %v577, 0.0
        %v626 = vadd.f32 %v578, 0.0
        %v627 = vadd.f32 %v579, 0.0
        %v628 = vadd.f32 %v580, 0.0
        %v629 = vadd.f32 %v581, 0.0
        %v630 = vadd.f32 %v582, 0.0
        %v631 = vadd.f32 %v583, 0.0
        %v632 = vadd.f32 %v584, 0.0
        %v633 = vadd.f32 %v585, 0.0
        %v634 = vadd.f32 %v586, 0.0
        %v635 = vadd.f32 %v587, 0.0
        %v636 = vadd.f32 %v588, 0.0
        %v637 = vadd.f32 %v589, 0.0
        %v638 = vadd.f32 %v590, 0.0
        %v639 = vadd.f32 %v591, 0.0
        %v640 = vadd.f32 %v592, 0.0
        %v641 = vadd.f32 %v593, 0.0
        %v642 = vadd.f32 %v594, 0.0
        %v643 = vlaneseq
        %v644 = vshrl.u32 %v643, 7
        %v645 = vsub.s32 1, %v644
        %v646 = vrot.slane %v477, %v645
        %v647 = vmul.f32 %v480, %v646
        %v648 = vmul.f32 %v481, %v646
        %v649 = vmul.f32 %v484, %v646
        %v650 = vmul.f32 %v485, %v646
        %v651 = vmul.f32 %v488, %v646
        %v652 = vmul.f32 %v489, %v646
        %v653 = vmul.f32 %v492, %v646
        %v654 = vmul.f32 %v493, %v646
        %v655 = vmul.f32 %v496, %v646
        %v656 = vmul.f32 %v497, %v646
        %v657 = vmul.f32 %v500, %v646
        %v658 = vmul.f32 %v501, %v646
        %v659 = vmul.f32 %v504, %v646
        %v660 = vmul.f32 %v505, %v646
        %v661 = vmul.f32 %v508, %v646
        %v662 = vmul.f32 %v509, %v646
        %v663 = vmul.f32 %v512, %v646
        %v664 = vmul.f32 %v513, %v646
        %v665 = vmul.f32 %v516, %v646
        %v666 = vmul.f32 %v517, %v646
        %v667 = vmul.f32 %v520, %v646
        %v668 = vmul.f32 %v521, %v646
        %v669 = vmul.f32 %v524, %v646
        %v670 = vmul.f32 %v525, %v646
        %v671 = vmul.f32 %v528, %v646
        %v672 = vmul.f32 %v529, %v646
        %v673 = vmul.f32 %v532, %v646
        %v674 = vmul.f32 %v533, %v646
        %v675 = vmul.f32 %v536, %v646
        %v676 = vmul.f32 %v537, %v646
        %v677 = vmul.f32 %v540, %v646
        %v678 = vmul.f32 %v541, %v646
        %vm711 = vcmask 1046528
        %v712 = vrot.slane %v647, 1
        %v713 = vrot.slane %v648, 1
        %v714 = vsel %vm711, %v712, %v713
        %v715 = vrot.slane %v649, 1
        %v716 = vrot.slane %v650, 1
        %v717 = vsel %vm711, %v715, %v716
        %v718 = vrot.slane %v651, 1
        %v719 = vrot.slane %v652, 1
        %v720 = vsel %vm711, %v718, %v719
        %v721 = vrot.slane %v653, 1
        %v722 = vrot.slane %v654, 1
        %v723 = vsel %vm711, %v721, %v722
        %v724 = vrot.slane %v655, 1
        %v725 = vrot.slane %v656, 1
        %v726 = vsel %vm711, %v724, %v725
        %v727 = vrot.slane %v657, 1
        %v728 = vrot.slane %v658, 1
        %v729 = vsel %vm711, %v727, %v728
        %v730 = vrot.slane %v659, 1
        %v731 = vrot.slane %v660, 1
        %v732 = vsel %vm711, %v730, %v731
        %v733 = vrot.slane %v661, 1
        %v734 = vrot.slane %v662, 1
        %v735 = vsel %vm711, %v733, %v734
        %v736 = vrot.slane %v663, 1
        %v737 = vrot.slane %v664, 1
        %v738 = vsel %vm711, %v736, %v737
        %v739 = vrot.slane %v665, 1
        %v740 = vrot.slane %v666, 1
        %v741 = vsel %vm711, %v739, %v740
        %v742 = vrot.slane %v667, 1
        %v743 = vrot.slane %v668, 1
        %v744 = vsel %vm711, %v742, %v743
        %v745 = vrot.slane %v669, 1
        %v746 = vrot.slane %v670, 1
        %v747 = vsel %vm711, %v745, %v746
        %v748 = vrot.slane %v671, 1
        %v749 = vrot.slane %v672, 1
        %v750 = vsel %vm711, %v748, %v749
        %v751 = vrot.slane %v673, 1
        %v752 = vrot.slane %v674, 1
        %v753 = vsel %vm711, %v751, %v752
        %v754 = vrot.slane %v675, 1
        %v755 = vrot.slane %v676, 1
        %v756 = vsel %vm711, %v754, %v755
        %v757 = vrot.slane %v677, 1
        %v758 = vrot.slane %v678, 1
        %v759 = vsel %vm711, %v757, %v758
        %v808 = vadd.f32 %v595, %v712
        %v809 = vadd.f32 %v596, %v714
        %v810 = vadd.f32 %v597, %v713
        %v811 = vadd.f32 %v598, %v715
        %v812 = vadd.f32 %v599, %v717
        %v813 = vadd.f32 %v600, %v716
        %v814 = vadd.f32 %v601, %v718
        %v815 = vadd.f32 %v602, %v720
        %v816 = vadd.f32 %v603, %v719
        %v817 = vadd.f32 %v604, %v721
        %v818 = vadd.f32 %v605, %v723
        %v819 = vadd.f32 %v606, %v722
        %v820 = vadd.f32 %v607, %v724
        %v821 = vadd.f32 %v608, %v726
        %v822 = vadd.f32 %v609, %v725
        %v823 = vadd.f32 %v610, %v727
        %v824 = vadd.f32 %v611, %v729
        %v825 = vadd.f32 %v612, %v728
        %v826 = vadd.f32 %v613, %v730
        %v827 = vadd.f32 %v614, %v732
        %v828 = vadd.f32 %v615, %v731
        %v829 = vadd.f32 %v616, %v733
        %v830 = vadd.f32 %v617, %v735
        %v831 = vadd.f32 %v618, %v734
        %v832 = vadd.f32 %v619, %v736
        %v833 = vadd.f32 %v620, %v738
        %v834 = vadd.f32 %v621, %v737
        %v835 = vadd.f32 %v622, %v739
        %v836 = vadd.f32 %v623, %v741
        %v837 = vadd.f32 %v624, %v740
        %v838 = vadd.f32 %v625, %v742
        %v839 = vadd.f32 %v626, %v744
        %v840 = vadd.f32 %v627, %v743
        %v841 = vadd.f32 %v628, %v745
        %v842 = vadd.f32 %v629, %v747
        %v843 = vadd.f32 %v630, %v746
        %v844 = vadd.f32 %v631, %v748
        %v845 = vadd.f32 %v632, %v750
        %v846 = vadd.f32 %v633, %v749
        %v847 = vadd.f32 %v634, %v751
        %v848 = vadd.f32 %v635, %v753
        %v849 = vadd.f32 %v636, %v752
        %v850 = vadd.f32 %v637, %v754
        %v851 = vadd.f32 %v638, %v756
        %v852 = vadd.f32 %v639, %v755
        %v853 = vadd.f32 %v640, %v757
        %v854 = vadd.f32 %v641, %v759
        %v855 = vadd.f32 %v642, %v758
        %v856 = vlaneseq
        %v857 = vshrl.u32 %v856, 7
        %v858 = vsub.s32 2, %v857
        %v859 = vrot.slane %v477, %v858
        %v860 = vmul.f32 %v480, %v859
        %v861 = vmul.f32 %v481, %v859
        %v862 = vmul.f32 %v482, %v859
        %v863 = vmul.f32 %v484, %v859
        %v864 = vmul.f32 %v485, %v859
        %v865 = vmul.f32 %v486, %v859
        %v866 = vmul.f32 %v488, %v859
        %v867 = vmul.f32 %v489, %v859
        %v868 = vmul.f32 %v490, %v859
        %v869 = vmul.f32 %v492, %v859
        %v870 = vmul.f32 %v493, %v859
        %v871 = vmul.f32 %v494, %v859
        %v872 = vmul.f32 %v496, %v859
        %v873 = vmul.f32 %v497, %v859
        %v874 = vmul.f32 %v498, %v859
        %v875 = vmul.f32 %v500, %v859
        %v876 = vmul.f32 %v501, %v859
        %v877 = vmul.f32 %v502, %v859
        %v878 = vmul.f32 %v504, %v859
        %v879 = vmul.f32 %v505, %v859
        %v880 = vmul.f32 %v506, %v859
        %v881 = vmul.f32 %v508, %v859
        %v882 = vmul.f32 %v509, %v859
        %v883 = vmul.f32 %v510, %v859
        %v884 = vmul.f32 %v512, %v859
        %v885 = vmul.f32 %v513, %v859
        %v886 = vmul.f32 %v514, %v859
        %v887 = vmul.f32 %v516, %v859
        %v888 = vmul.f32 %v517, %v859
        %v889 = vmul.f32 %v518, %v859
        %v890 = vmul.f32 %v520, %v859
        %v891 = vmul.f32 %v521, %v859
        %v892 = vmul.f32 %v522, %v859
        %v893 = vmul.f32 %v524, %v859
        %v894 = vmul.f32 %v525, %v859
        %v895 = vmul.f32 %v526, %v859
        %v896 = vmul.f32 %v528, %v859
        %v897 = vmul.f32 %v529, %v859
        %v898 = vmul.f32 %v530, %v859
        %v899 = vmul.f32 %v532, %v859
        %v900 = vmul.f32 %v533, %v859
        %v901 = vmul.f32 %v534, %v859
        %v902 = vmul.f32 %v536, %v859
        %v903 = vmul.f32 %v537, %v859
        %v904 = vmul.f32 %v538, %v859
        %v905 = vmul.f32 %v540, %v859
        %v906 = vmul.f32 %v541, %v859
        %v907 = vmul.f32 %v542, %v859
        %vm956 = vcmask 1045504
        %v957 = vrot.slane %v860, 2
        %v958 = vrot.slane %v861, 2
        %v959 = vsel %vm956, %v957, %v958
        %v960 = vrot.slane %v862, 2
        %v961 = vsel %vm956, %v958, %v960
        %v962 = vrot.slane %v863, 2
        %v963 = vrot.slane %v864, 2
        %v964 = vsel %vm956, %v962, %v963
        %v965 = vrot.slane %v865, 2
        %v966 = vsel %vm956, %v963, %v965
        %v967 = vrot.slane %v866, 2
        %v968 = vrot.slane %v867, 2
        %v969 = vsel %vm956, %v967, %v968
        %v970 = vrot.slane %v868, 2
        %v971 = vsel %vm956, %v968, %v970
        %v972 = vrot.slane %v869, 2
        %v973 = vrot.slane %v870, 2
        %v974 = vsel %vm956, %v972, %v973
        %v975 = vrot.slane %v871, 2
        %v976 = vsel %vm956, %v973, %v975
        %v977 = vrot.slane %v872, 2
        %v978 = vrot.slane %v873, 2
        %v979 = vsel %vm956, %v977, %v978
        %v980 = vrot.slane %v874, 2
        %v981 = vsel %vm956, %v978, %v980
        %v982 = vrot.slane %v875, 2
        %v983 = vrot.slane %v876, 2
        %v984 = vsel %vm956, %v982, %v983
        %v985 = vrot.slane %v877, 2
        %v986 = vsel %vm956, %v983, %v985
        %v987 = vrot.slane %v878, 2
        %v988 = vrot.slane %v879, 2
        %v989 = vsel %vm956, %v987, %v988
        %v990 = vrot.slane %v880, 2
        %v991 = vsel %vm956, %v988, %v990
        %v992 = vrot.slane %v881, 2
        %v993 = vrot.slane %v882, 2
        %v994 = vsel %vm956, %v992, %v993
        %v995 = vrot.slane %v883, 2
        %v996 = vsel %vm956, %v993, %v995
        %v997 = vrot.slane %v884, 2
        %v998 = vrot.slane %v885, 2
        %v999 = vsel %vm956, %v997, %v998
        %v1000 = vrot.slane %v886, 2
        %v1001 = vsel %vm956, %v998, %v1000
        %v1002 = vrot.slane %v887, 2
        %v1003 = vrot.slane %v888, 2
        %v1004 = vsel %vm956, %v1002, %v1003
        %v1005 = vrot.slane %v889, 2
        %v1006 = vsel %vm956, %v1003, %v1005
        %v1007 = vrot.slane %v890, 2
        %v1008 = vrot.slane %v891, 2
        %v1009 = vsel %vm956, %v1007, %v1008
        %v1010 = vrot.slane %v892, 2
        %v1011 = vsel %vm956, %v1008, %v1010
        %v1012 = vrot.slane %v893, 2
        %v1013 = vrot.slane %v894, 2
        %v1014 = vsel %vm956, %v1012, %v1013
        %v1015 = vrot.slane %v895, 2
        %v1016 = vsel %vm956, %v1013, %v1015
        %v1017 = vrot.slane %v896, 2
        %v1018 = vrot.slane %v897, 2
        %v1019 = vsel %vm956, %v1017, %v1018
        %v1020 = vrot.slane %v898, 2
        %v1021 = vsel %vm956, %v1018, %v1020
        %v1022 = vrot.slane %v899, 2
        %v1023 = vrot.slane %v900, 2
        %v1024 = vsel %vm956, %v1022, %v1023
        %v1025 = vrot.slane %v901, 2
        %v1026 = vsel %vm956, %v1023, %v1025
        %v1027 = vrot.slane %v902, 2
        %v1028 = vrot.slane %v903, 2
        %v1029 = vsel %vm956, %v1027, %v1028
        %v1030 = vrot.slane %v904, 2
        %v1031 = vsel %vm956, %v1028, %v1030
        %v1032 = vrot.slane %v905, 2
        %v1033 = vrot.slane %v906, 2
        %v1034 = vsel %vm956, %v1032, %v1033
        %v1035 = vrot.slane %v907, 2
        %v1036 = vsel %vm956, %v1033, %v1035
        %v1085 = vadd.f32 %v808, %v957
        %v1086 = vadd.f32 %v809, %v959
        %v1087 = vadd.f32 %v810, %v961
        %v1088 = vadd.f32 %v811, %v962
        %v1089 = vadd.f32 %v812, %v964
        %v1090 = vadd.f32 %v813, %v966
        %v1091 = vadd.f32 %v814, %v967
        %v1092 = vadd.f32 %v815, %v969
        %v1093 = vadd.f32 %v816, %v971
        %v1094 = vadd.f32 %v817, %v972
        %v1095 = vadd.f32 %v818, %v974
        %v1096 = vadd.f32 %v819, %v976
        %v1097 = vadd.f32 %v820, %v977
        %v1098 = vadd.f32 %v821, %v979
        %v1099 = vadd.f32 %v822, %v981
        %v1100 = vadd.f32 %v823, %v982
        %v1101 = vadd.f32 %v824, %v984
        %v1102 = vadd.f32 %v825, %v986
        %v1103 = vadd.f32 %v826, %v987
        %v1104 = vadd.f32 %v827, %v989
        %v1105 = vadd.f32 %v828, %v991
        %v1106 = vadd.f32 %v829, %v992
        %v1107 = vadd.f32 %v830, %v994
        %v1108 = vadd.f32 %v831, %v996
        %v1109 = vadd.f32 %v832, %v997
        %v1110 = vadd.f32 %v833, %v999
        %v1111 = vadd.f32 %v834, %v1001
        %v1112 = vadd.f32 %v835, %v1002
        %v1113 = vadd.f32 %v836, %v1004
        %v1114 = vadd.f32 %v837, %v1006
        %v1115 = vadd.f32 %v838, %v1007
        %v1116 = vadd.f32 %v839, %v1009
        %v1117 = vadd.f32 %v840, %v1011
        %v1118 = vadd.f32 %v841, %v1012
        %v1119 = vadd.f32 %v842, %v1014
        %v1120 = vadd.f32 %v843, %v1016
        %v1121 = vadd.f32 %v844, %v1017
        %v1122 = vadd.f32 %v845, %v1019
        %v1123 = vadd.f32 %v846, %v1021
        %v1124 = vadd.f32 %v847, %v1022
        %v1125 = vadd.f32 %v848, %v1024
        %v1126 = vadd.f32 %v849, %v1026
        %v1127 = vadd.f32 %v850, %v1027
        %v1128 = vadd.f32 %v851, %v1029
        %v1129 = vadd.f32 %v852, %v1031
        %v1130 = vadd.f32 %v853, %v1032
        %v1131 = vadd.f32 %v854, %v1034
        %v1132 = vadd.f32 %v855, %v1036
        %v1133 = vld [vmem:[%s443] sm:$0xff]
        %v1134 = vld [vmem:[%s443 + $0x8] sm:$0xff]
        %v1135 = vld [vmem:[%s443 + $0x10] sm:$0xff]
        %v1136 = vld [vmem:[%s443 + $0x18] sm:$0xff]
        %v1137 = vld [vmem:[%s443 + $0x20] sm:$0xff]
        %v1138 = vld [vmem:[%s443 + $0x28] sm:$0xff]
        %v1139 = vld [vmem:[%s443 + $0x30] sm:$0xff]
        %v1140 = vld [vmem:[%s443 + $0x38] sm:$0xff]
        %v1141 = vld [vmem:[%s443 + $0x40] sm:$0xff]
        %v1142 = vld [vmem:[%s443 + $0x48] sm:$0xff]
        %v1143 = vld [vmem:[%s443 + $0x50] sm:$0xff]
        %v1144 = vld [vmem:[%s443 + $0x58] sm:$0xff]
        %v1145 = vld [vmem:[%s443 + $0x60] sm:$0xff]
        %v1146 = vld [vmem:[%s443 + $0x68] sm:$0xff]
        %v1147 = vld [vmem:[%s443 + $0x70] sm:$0xff]
        %v1148 = vld [vmem:[%s443 + $0x78] sm:$0xff]
        %v1149 = vld [vmem:[%s443 + $0x80] sm:$0xff]
        %v1150 = vld [vmem:[%s443 + $0x88] sm:$0xff]
        %v1151 = vld [vmem:[%s443 + $0x90] sm:$0xff]
        %v1152 = vld [vmem:[%s443 + $0x98] sm:$0xff]
        %v1153 = vld [vmem:[%s443 + $0xa0] sm:$0xff]
        %v1154 = vld [vmem:[%s443 + $0xa8] sm:$0xff]
        %v1155 = vld [vmem:[%s443 + $0xb0] sm:$0xff]
        %v1156 = vld [vmem:[%s443 + $0xb8] sm:$0xff]
        %v1157 = vld [vmem:[%s443 + $0xc0] sm:$0xff]
        %v1158 = vld [vmem:[%s443 + $0xc8] sm:$0xff]
        %v1159 = vld [vmem:[%s443 + $0xd0] sm:$0xff]
        %v1160 = vld [vmem:[%s443 + $0xd8] sm:$0xff]
        %v1161 = vld [vmem:[%s443 + $0xe0] sm:$0xff]
        %v1162 = vld [vmem:[%s443 + $0xe8] sm:$0xff]
        %v1163 = vld [vmem:[%s443 + $0xf0] sm:$0xff]
        %v1164 = vld [vmem:[%s443 + $0xf8] sm:$0xff]
        %v1165 = vld [vmem:[%s443 + $0x100] sm:$0xff]
        %v1166 = vld [vmem:[%s443 + $0x108] sm:$0xff]
        %v1167 = vld [vmem:[%s443 + $0x110] sm:$0xff]
        %v1168 = vld [vmem:[%s443 + $0x118] sm:$0xff]
        %v1169 = vld [vmem:[%s443 + $0x120] sm:$0xff]
        %v1170 = vld [vmem:[%s443 + $0x128] sm:$0xff]
        %v1171 = vld [vmem:[%s443 + $0x130] sm:$0xff]
        %v1172 = vld [vmem:[%s443 + $0x138] sm:$0xff]
        %v1173 = vld [vmem:[%s443 + $0x140] sm:$0xff]
        %v1174 = vld [vmem:[%s443 + $0x148] sm:$0xff]
        %v1175 = vld [vmem:[%s443 + $0x150] sm:$0xff]
        %v1176 = vld [vmem:[%s443 + $0x158] sm:$0xff]
        %v1177 = vld [vmem:[%s443 + $0x160] sm:$0xff]
        %v1178 = vld [vmem:[%s443 + $0x168] sm:$0xff]
        %v1179 = vld [vmem:[%s443 + $0x170] sm:$0xff]
        %v1180 = vld [vmem:[%s443 + $0x178] sm:$0xff]
        %v1181 = vld [vmem:[%s443 + $0x180] sm:$0xff]
        %v1182 = vld [vmem:[%s443 + $0x188] sm:$0xff]
        %v1183 = vld [vmem:[%s443 + $0x190] sm:$0xff]
        %v1184 = vld [vmem:[%s443 + $0x198] sm:$0xff]
        %v1185 = vld [vmem:[%s443 + $0x1a0] sm:$0xff]
        %v1186 = vld [vmem:[%s443 + $0x1a8] sm:$0xff]
        %v1187 = vld [vmem:[%s443 + $0x1b0] sm:$0xff]
        %v1188 = vld [vmem:[%s443 + $0x1b8] sm:$0xff]
        %v1189 = vld [vmem:[%s443 + $0x1c0] sm:$0xff]
        %v1190 = vld [vmem:[%s443 + $0x1c8] sm:$0xff]
        %v1191 = vld [vmem:[%s443 + $0x1d0] sm:$0xff]
        %v1192 = vld [vmem:[%s443 + $0x1d8] sm:$0xff]
        %v1193 = vld [vmem:[%s443 + $0x1e0] sm:$0xff]
        %v1194 = vld [vmem:[%s443 + $0x1e8] sm:$0xff]
        %v1195 = vld [vmem:[%s443 + $0x1f0] sm:$0xff]
        %v1196 = vld [vmem:[%s443 + $0x1f8] sm:$0xff]
        %v1197 = vlaneseq
        %v1198 = vshrl.u32 %v1197, 7
        %v1199 = vsub.s32 3, %v1198
        %v1200 = vrot.slane %v477, %v1199
        %v1201 = vmul.f32 %v1133, %v1200
        %v1202 = vmul.f32 %v1134, %v1200
        %v1203 = vmul.f32 %v1135, %v1200
        %v1204 = vmul.f32 %v1137, %v1200
        %v1205 = vmul.f32 %v1138, %v1200
        %v1206 = vmul.f32 %v1139, %v1200
        %v1207 = vmul.f32 %v1141, %v1200
        %v1208 = vmul.f32 %v1142, %v1200
        %v1209 = vmul.f32 %v1143, %v1200
        %v1210 = vmul.f32 %v1145, %v1200
        %v1211 = vmul.f32 %v1146, %v1200
        %v1212 = vmul.f32 %v1147, %v1200
        %v1213 = vmul.f32 %v1149, %v1200
        %v1214 = vmul.f32 %v1150, %v1200
        %v1215 = vmul.f32 %v1151, %v1200
        %v1216 = vmul.f32 %v1153, %v1200
        %v1217 = vmul.f32 %v1154, %v1200
        %v1218 = vmul.f32 %v1155, %v1200
        %v1219 = vmul.f32 %v1157, %v1200
        %v1220 = vmul.f32 %v1158, %v1200
        %v1221 = vmul.f32 %v1159, %v1200
        %v1222 = vmul.f32 %v1161, %v1200
        %v1223 = vmul.f32 %v1162, %v1200
        %v1224 = vmul.f32 %v1163, %v1200
        %v1225 = vmul.f32 %v1165, %v1200
        %v1226 = vmul.f32 %v1166, %v1200
        %v1227 = vmul.f32 %v1167, %v1200
        %v1228 = vmul.f32 %v1169, %v1200
        %v1229 = vmul.f32 %v1170, %v1200
        %v1230 = vmul.f32 %v1171, %v1200
        %v1231 = vmul.f32 %v1173, %v1200
        %v1232 = vmul.f32 %v1174, %v1200
        %v1233 = vmul.f32 %v1175, %v1200
        %v1234 = vmul.f32 %v1177, %v1200
        %v1235 = vmul.f32 %v1178, %v1200
        %v1236 = vmul.f32 %v1179, %v1200
        %v1237 = vmul.f32 %v1181, %v1200
        %v1238 = vmul.f32 %v1182, %v1200
        %v1239 = vmul.f32 %v1183, %v1200
        %v1240 = vmul.f32 %v1185, %v1200
        %v1241 = vmul.f32 %v1186, %v1200
        %v1242 = vmul.f32 %v1187, %v1200
        %v1243 = vmul.f32 %v1189, %v1200
        %v1244 = vmul.f32 %v1190, %v1200
        %v1245 = vmul.f32 %v1191, %v1200
        %v1246 = vmul.f32 %v1193, %v1200
        %v1247 = vmul.f32 %v1194, %v1200
        %v1248 = vmul.f32 %v1195, %v1200
        %v1249 = vadd.f32 %v1085, %v1201
        %v1250 = vadd.f32 %v1086, %v1202
        %v1251 = vadd.f32 %v1087, %v1203
        %v1252 = vadd.f32 %v1088, %v1204
        %v1253 = vadd.f32 %v1089, %v1205
        %v1254 = vadd.f32 %v1090, %v1206
        %v1255 = vadd.f32 %v1091, %v1207
        %v1256 = vadd.f32 %v1092, %v1208
        %v1257 = vadd.f32 %v1093, %v1209
        %v1258 = vadd.f32 %v1094, %v1210
        %v1259 = vadd.f32 %v1095, %v1211
        %v1260 = vadd.f32 %v1096, %v1212
        %v1261 = vadd.f32 %v1097, %v1213
        %v1262 = vadd.f32 %v1098, %v1214
        %v1263 = vadd.f32 %v1099, %v1215
        %v1264 = vadd.f32 %v1100, %v1216
        %v1265 = vadd.f32 %v1101, %v1217
        %v1266 = vadd.f32 %v1102, %v1218
        %v1267 = vadd.f32 %v1103, %v1219
        %v1268 = vadd.f32 %v1104, %v1220
        %v1269 = vadd.f32 %v1105, %v1221
        %v1270 = vadd.f32 %v1106, %v1222
        %v1271 = vadd.f32 %v1107, %v1223
        %v1272 = vadd.f32 %v1108, %v1224
        %v1273 = vadd.f32 %v1109, %v1225
        %v1274 = vadd.f32 %v1110, %v1226
        %v1275 = vadd.f32 %v1111, %v1227
        %v1276 = vadd.f32 %v1112, %v1228
        %v1277 = vadd.f32 %v1113, %v1229
        %v1278 = vadd.f32 %v1114, %v1230
        %v1279 = vadd.f32 %v1115, %v1231
        %v1280 = vadd.f32 %v1116, %v1232
        %v1281 = vadd.f32 %v1117, %v1233
        %v1282 = vadd.f32 %v1118, %v1234
        %v1283 = vadd.f32 %v1119, %v1235
        %v1284 = vadd.f32 %v1120, %v1236
        %v1285 = vadd.f32 %v1121, %v1237
        %v1286 = vadd.f32 %v1122, %v1238
        %v1287 = vadd.f32 %v1123, %v1239
        %v1288 = vadd.f32 %v1124, %v1240
        %v1289 = vadd.f32 %v1125, %v1241
        %v1290 = vadd.f32 %v1126, %v1242
        %v1291 = vadd.f32 %v1127, %v1243
        %v1292 = vadd.f32 %v1128, %v1244
        %v1293 = vadd.f32 %v1129, %v1245
        %v1294 = vadd.f32 %v1130, %v1246
        %v1295 = vadd.f32 %v1131, %v1247
        %v1296 = vadd.f32 %v1132, %v1248
        %v1297 = vlaneseq
        %v1298 = vshrl.u32 %v1297, 7
        %v1299 = vsub.s32 4, %v1298
        %v1300 = vrot.slane %v477, %v1299
        %v1301 = vmul.f32 %v1134, %v1300
        %v1302 = vmul.f32 %v1135, %v1300
        %v1303 = vmul.f32 %v1138, %v1300
        %v1304 = vmul.f32 %v1139, %v1300
        %v1305 = vmul.f32 %v1142, %v1300
        %v1306 = vmul.f32 %v1143, %v1300
        %v1307 = vmul.f32 %v1146, %v1300
        %v1308 = vmul.f32 %v1147, %v1300
        %v1309 = vmul.f32 %v1150, %v1300
        %v1310 = vmul.f32 %v1151, %v1300
        %v1311 = vmul.f32 %v1154, %v1300
        %v1312 = vmul.f32 %v1155, %v1300
        %v1313 = vmul.f32 %v1158, %v1300
        %v1314 = vmul.f32 %v1159, %v1300
        %v1315 = vmul.f32 %v1162, %v1300
        %v1316 = vmul.f32 %v1163, %v1300
        %v1317 = vmul.f32 %v1166, %v1300
        %v1318 = vmul.f32 %v1167, %v1300
        %v1319 = vmul.f32 %v1170, %v1300
        %v1320 = vmul.f32 %v1171, %v1300
        %v1321 = vmul.f32 %v1174, %v1300
        %v1322 = vmul.f32 %v1175, %v1300
        %v1323 = vmul.f32 %v1178, %v1300
        %v1324 = vmul.f32 %v1179, %v1300
        %v1325 = vmul.f32 %v1182, %v1300
        %v1326 = vmul.f32 %v1183, %v1300
        %v1327 = vmul.f32 %v1186, %v1300
        %v1328 = vmul.f32 %v1187, %v1300
        %v1329 = vmul.f32 %v1190, %v1300
        %v1330 = vmul.f32 %v1191, %v1300
        %v1331 = vmul.f32 %v1194, %v1300
        %v1332 = vmul.f32 %v1195, %v1300
        %v1365 = vrot.slane %v1301, 1
        %v1366 = vrot.slane %v1302, 1
        %v1367 = vsel %vm711, %v1365, %v1366
        %v1368 = vrot.slane %v1303, 1
        %v1369 = vrot.slane %v1304, 1
        %v1370 = vsel %vm711, %v1368, %v1369
        %v1371 = vrot.slane %v1305, 1
        %v1372 = vrot.slane %v1306, 1
        %v1373 = vsel %vm711, %v1371, %v1372
        %v1374 = vrot.slane %v1307, 1
        %v1375 = vrot.slane %v1308, 1
        %v1376 = vsel %vm711, %v1374, %v1375
        %v1377 = vrot.slane %v1309, 1
        %v1378 = vrot.slane %v1310, 1
        %v1379 = vsel %vm711, %v1377, %v1378
        %v1380 = vrot.slane %v1311, 1
        %v1381 = vrot.slane %v1312, 1
        %v1382 = vsel %vm711, %v1380, %v1381
        %v1383 = vrot.slane %v1313, 1
        %v1384 = vrot.slane %v1314, 1
        %v1385 = vsel %vm711, %v1383, %v1384
        %v1386 = vrot.slane %v1315, 1
        %v1387 = vrot.slane %v1316, 1
        %v1388 = vsel %vm711, %v1386, %v1387
        %v1389 = vrot.slane %v1317, 1
        %v1390 = vrot.slane %v1318, 1
        %v1391 = vsel %vm711, %v1389, %v1390
        %v1392 = vrot.slane %v1319, 1
        %v1393 = vrot.slane %v1320, 1
        %v1394 = vsel %vm711, %v1392, %v1393
        %v1395 = vrot.slane %v1321, 1
        %v1396 = vrot.slane %v1322, 1
        %v1397 = vsel %vm711, %v1395, %v1396
        %v1398 = vrot.slane %v1323, 1
        %v1399 = vrot.slane %v1324, 1
        %v1400 = vsel %vm711, %v1398, %v1399
        %v1401 = vrot.slane %v1325, 1
        %v1402 = vrot.slane %v1326, 1
        %v1403 = vsel %vm711, %v1401, %v1402
        %v1404 = vrot.slane %v1327, 1
        %v1405 = vrot.slane %v1328, 1
        %v1406 = vsel %vm711, %v1404, %v1405
        %v1407 = vrot.slane %v1329, 1
        %v1408 = vrot.slane %v1330, 1
        %v1409 = vsel %vm711, %v1407, %v1408
        %v1410 = vrot.slane %v1331, 1
        %v1411 = vrot.slane %v1332, 1
        %v1412 = vsel %vm711, %v1410, %v1411
        %v1461 = vadd.f32 %v1249, %v1365
        %v1462 = vadd.f32 %v1250, %v1367
        %v1463 = vadd.f32 %v1251, %v1366
        %v1464 = vadd.f32 %v1252, %v1368
        %v1465 = vadd.f32 %v1253, %v1370
        %v1466 = vadd.f32 %v1254, %v1369
        %v1467 = vadd.f32 %v1255, %v1371
        %v1468 = vadd.f32 %v1256, %v1373
        %v1469 = vadd.f32 %v1257, %v1372
        %v1470 = vadd.f32 %v1258, %v1374
        %v1471 = vadd.f32 %v1259, %v1376
        %v1472 = vadd.f32 %v1260, %v1375
        %v1473 = vadd.f32 %v1261, %v1377
        %v1474 = vadd.f32 %v1262, %v1379
        %v1475 = vadd.f32 %v1263, %v1378
        %v1476 = vadd.f32 %v1264, %v1380
        %v1477 = vadd.f32 %v1265, %v1382
        %v1478 = vadd.f32 %v1266, %v1381
        %v1479 = vadd.f32 %v1267, %v1383
        %v1480 = vadd.f32 %v1268, %v1385
        %v1481 = vadd.f32 %v1269, %v1384
        %v1482 = vadd.f32 %v1270, %v1386
        %v1483 = vadd.f32 %v1271, %v1388
        %v1484 = vadd.f32 %v1272, %v1387
        %v1485 = vadd.f32 %v1273, %v1389
        %v1486 = vadd.f32 %v1274, %v1391
        %v1487 = vadd.f32 %v1275, %v1390
        %v1488 = vadd.f32 %v1276, %v1392
        %v1489 = vadd.f32 %v1277, %v1394
        %v1490 = vadd.f32 %v1278, %v1393
        %v1491 = vadd.f32 %v1279, %v1395
        %v1492 = vadd.f32 %v1280, %v1397
        %v1493 = vadd.f32 %v1281, %v1396
        %v1494 = vadd.f32 %v1282, %v1398
        %v1495 = vadd.f32 %v1283, %v1400
        %v1496 = vadd.f32 %v1284, %v1399
        %v1497 = vadd.f32 %v1285, %v1401
        %v1498 = vadd.f32 %v1286, %v1403
        %v1499 = vadd.f32 %v1287, %v1402
        %v1500 = vadd.f32 %v1288, %v1404
        %v1501 = vadd.f32 %v1289, %v1406
        %v1502 = vadd.f32 %v1290, %v1405
        %v1503 = vadd.f32 %v1291, %v1407
        %v1504 = vadd.f32 %v1292, %v1409
        %v1505 = vadd.f32 %v1293, %v1408
        %v1506 = vadd.f32 %v1294, %v1410
        %v1507 = vadd.f32 %v1295, %v1412
        %v1508 = vadd.f32 %v1296, %v1411
        %v1509 = vlaneseq
        %v1510 = vshrl.u32 %v1509, 7
        %v1511 = vsub.s32 5, %v1510
        %v1512 = vrot.slane %v477, %v1511
        %v1513 = vmul.f32 %v1134, %v1512
        %v1514 = vmul.f32 %v1135, %v1512
        %v1515 = vmul.f32 %v1136, %v1512
        %v1516 = vmul.f32 %v1138, %v1512
        %v1517 = vmul.f32 %v1139, %v1512
        %v1518 = vmul.f32 %v1140, %v1512
        %v1519 = vmul.f32 %v1142, %v1512
        %v1520 = vmul.f32 %v1143, %v1512
        %v1521 = vmul.f32 %v1144, %v1512
        %v1522 = vmul.f32 %v1146, %v1512
        %v1523 = vmul.f32 %v1147, %v1512
        %v1524 = vmul.f32 %v1148, %v1512
        %v1525 = vmul.f32 %v1150, %v1512
        %v1526 = vmul.f32 %v1151, %v1512
        %v1527 = vmul.f32 %v1152, %v1512
        %v1528 = vmul.f32 %v1154, %v1512
        %v1529 = vmul.f32 %v1155, %v1512
        %v1530 = vmul.f32 %v1156, %v1512
        %v1531 = vmul.f32 %v1158, %v1512
        %v1532 = vmul.f32 %v1159, %v1512
        %v1533 = vmul.f32 %v1160, %v1512
        %v1534 = vmul.f32 %v1162, %v1512
        %v1535 = vmul.f32 %v1163, %v1512
        %v1536 = vmul.f32 %v1164, %v1512
        %v1537 = vmul.f32 %v1166, %v1512
        %v1538 = vmul.f32 %v1167, %v1512
        %v1539 = vmul.f32 %v1168, %v1512
        %v1540 = vmul.f32 %v1170, %v1512
        %v1541 = vmul.f32 %v1171, %v1512
        %v1542 = vmul.f32 %v1172, %v1512
        %v1543 = vmul.f32 %v1174, %v1512
        %v1544 = vmul.f32 %v1175, %v1512
        %v1545 = vmul.f32 %v1176, %v1512
        %v1546 = vmul.f32 %v1178, %v1512
        %v1547 = vmul.f32 %v1179, %v1512
        %v1548 = vmul.f32 %v1180, %v1512
        %v1549 = vmul.f32 %v1182, %v1512
        %v1550 = vmul.f32 %v1183, %v1512
        %v1551 = vmul.f32 %v1184, %v1512
        %v1552 = vmul.f32 %v1186, %v1512
        %v1553 = vmul.f32 %v1187, %v1512
        %v1554 = vmul.f32 %v1188, %v1512
        %v1555 = vmul.f32 %v1190, %v1512
        %v1556 = vmul.f32 %v1191, %v1512
        %v1557 = vmul.f32 %v1192, %v1512
        %v1558 = vmul.f32 %v1194, %v1512
        %v1559 = vmul.f32 %v1195, %v1512
        %v1560 = vmul.f32 %v1196, %v1512
        %v1609 = vrot.slane %v1513, 2
        %v1610 = vrot.slane %v1514, 2
        %v1611 = vsel %vm956, %v1609, %v1610
        %v1612 = vrot.slane %v1515, 2
        %v1613 = vsel %vm956, %v1610, %v1612
        %v1614 = vrot.slane %v1516, 2
        %v1615 = vrot.slane %v1517, 2
        %v1616 = vsel %vm956, %v1614, %v1615
        %v1617 = vrot.slane %v1518, 2
        %v1618 = vsel %vm956, %v1615, %v1617
        %v1619 = vrot.slane %v1519, 2
        %v1620 = vrot.slane %v1520, 2
        %v1621 = vsel %vm956, %v1619, %v1620
        %v1622 = vrot.slane %v1521, 2
        %v1623 = vsel %vm956, %v1620, %v1622
        %v1624 = vrot.slane %v1522, 2
        %v1625 = vrot.slane %v1523, 2
        %v1626 = vsel %vm956, %v1624, %v1625
        %v1627 = vrot.slane %v1524, 2
        %v1628 = vsel %vm956, %v1625, %v1627
        %v1629 = vrot.slane %v1525, 2
        %v1630 = vrot.slane %v1526, 2
        %v1631 = vsel %vm956, %v1629, %v1630
        %v1632 = vrot.slane %v1527, 2
        %v1633 = vsel %vm956, %v1630, %v1632
        %v1634 = vrot.slane %v1528, 2
        %v1635 = vrot.slane %v1529, 2
        %v1636 = vsel %vm956, %v1634, %v1635
        %v1637 = vrot.slane %v1530, 2
        %v1638 = vsel %vm956, %v1635, %v1637
        %v1639 = vrot.slane %v1531, 2
        %v1640 = vrot.slane %v1532, 2
        %v1641 = vsel %vm956, %v1639, %v1640
        %v1642 = vrot.slane %v1533, 2
        %v1643 = vsel %vm956, %v1640, %v1642
        %v1644 = vrot.slane %v1534, 2
        %v1645 = vrot.slane %v1535, 2
        %v1646 = vsel %vm956, %v1644, %v1645
        %v1647 = vrot.slane %v1536, 2
        %v1648 = vsel %vm956, %v1645, %v1647
        %v1649 = vrot.slane %v1537, 2
        %v1650 = vrot.slane %v1538, 2
        %v1651 = vsel %vm956, %v1649, %v1650
        %v1652 = vrot.slane %v1539, 2
        %v1653 = vsel %vm956, %v1650, %v1652
        %v1654 = vrot.slane %v1540, 2
        %v1655 = vrot.slane %v1541, 2
        %v1656 = vsel %vm956, %v1654, %v1655
        %v1657 = vrot.slane %v1542, 2
        %v1658 = vsel %vm956, %v1655, %v1657
        %v1659 = vrot.slane %v1543, 2
        %v1660 = vrot.slane %v1544, 2
        %v1661 = vsel %vm956, %v1659, %v1660
        %v1662 = vrot.slane %v1545, 2
        %v1663 = vsel %vm956, %v1660, %v1662
        %v1664 = vrot.slane %v1546, 2
        %v1665 = vrot.slane %v1547, 2
        %v1666 = vsel %vm956, %v1664, %v1665
        %v1667 = vrot.slane %v1548, 2
        %v1668 = vsel %vm956, %v1665, %v1667
        %v1669 = vrot.slane %v1549, 2
        %v1670 = vrot.slane %v1550, 2
        %v1671 = vsel %vm956, %v1669, %v1670
        %v1672 = vrot.slane %v1551, 2
        %v1673 = vsel %vm956, %v1670, %v1672
        %v1674 = vrot.slane %v1552, 2
        %v1675 = vrot.slane %v1553, 2
        %v1676 = vsel %vm956, %v1674, %v1675
        %v1677 = vrot.slane %v1554, 2
        %v1678 = vsel %vm956, %v1675, %v1677
        %v1679 = vrot.slane %v1555, 2
        %v1680 = vrot.slane %v1556, 2
        %v1681 = vsel %vm956, %v1679, %v1680
        %v1682 = vrot.slane %v1557, 2
        %v1683 = vsel %vm956, %v1680, %v1682
        %v1684 = vrot.slane %v1558, 2
        %v1685 = vrot.slane %v1559, 2
        %v1686 = vsel %vm956, %v1684, %v1685
        %v1687 = vrot.slane %v1560, 2
        %v1688 = vsel %vm956, %v1685, %v1687
        %v1737 = vadd.f32 %v1461, %v1609
        %v1738 = vadd.f32 %v1462, %v1611
        %v1739 = vadd.f32 %v1463, %v1613
        %v1740 = vadd.f32 %v1464, %v1614
        %v1741 = vadd.f32 %v1465, %v1616
        %v1742 = vadd.f32 %v1466, %v1618
        %v1743 = vadd.f32 %v1467, %v1619
        %v1744 = vadd.f32 %v1468, %v1621
        %v1745 = vadd.f32 %v1469, %v1623
        %v1746 = vadd.f32 %v1470, %v1624
        %v1747 = vadd.f32 %v1471, %v1626
        %v1748 = vadd.f32 %v1472, %v1628
        %v1749 = vadd.f32 %v1473, %v1629
        %v1750 = vadd.f32 %v1474, %v1631
        %v1751 = vadd.f32 %v1475, %v1633
        %v1752 = vadd.f32 %v1476, %v1634
        %v1753 = vadd.f32 %v1477, %v1636
        %v1754 = vadd.f32 %v1478, %v1638
        %v1755 = vadd.f32 %v1479, %v1639
        %v1756 = vadd.f32 %v1480, %v1641
        %v1757 = vadd.f32 %v1481, %v1643
        %v1758 = vadd.f32 %v1482, %v1644
        %v1759 = vadd.f32 %v1483, %v1646
        %v1760 = vadd.f32 %v1484, %v1648
        %v1761 = vadd.f32 %v1485, %v1649
        %v1762 = vadd.f32 %v1486, %v1651
        %v1763 = vadd.f32 %v1487, %v1653
        %v1764 = vadd.f32 %v1488, %v1654
        %v1765 = vadd.f32 %v1489, %v1656
        %v1766 = vadd.f32 %v1490, %v1658
        %v1767 = vadd.f32 %v1491, %v1659
        %v1768 = vadd.f32 %v1492, %v1661
        %v1769 = vadd.f32 %v1493, %v1663
        %v1770 = vadd.f32 %v1494, %v1664
        %v1771 = vadd.f32 %v1495, %v1666
        %v1772 = vadd.f32 %v1496, %v1668
        %v1773 = vadd.f32 %v1497, %v1669
        %v1774 = vadd.f32 %v1498, %v1671
        %v1775 = vadd.f32 %v1499, %v1673
        %v1776 = vadd.f32 %v1500, %v1674
        %v1777 = vadd.f32 %v1501, %v1676
        %v1778 = vadd.f32 %v1502, %v1678
        %v1779 = vadd.f32 %v1503, %v1679
        %v1780 = vadd.f32 %v1504, %v1681
        %v1781 = vadd.f32 %v1505, %v1683
        %v1782 = vadd.f32 %v1506, %v1684
        %v1783 = vadd.f32 %v1507, %v1686
        %v1784 = vadd.f32 %v1508, %v1688
        %s1785 = scalar_lea.vmem [#allocation2], 64
        %v1786 = vld [vmem:[%s1785] sm:$0xff]
        %v1787 = vld [vmem:[%s1785 + $0x8] sm:$0xff]
        %v1788 = vld [vmem:[%s1785 + $0x10] sm:$0xff]
        %v1789 = vld [vmem:[%s1785 + $0x18] sm:$0xff]
        %v1790 = vld [vmem:[%s1785 + $0x20] sm:$0xff]
        %v1791 = vld [vmem:[%s1785 + $0x28] sm:$0xff]
        %v1792 = vld [vmem:[%s1785 + $0x30] sm:$0xff]
        %v1793 = vld [vmem:[%s1785 + $0x38] sm:$0xff]
        %v1794 = vld [vmem:[%s1785 + $0x40] sm:$0xff]
        %v1795 = vld [vmem:[%s1785 + $0x48] sm:$0xff]
        %v1796 = vld [vmem:[%s1785 + $0x50] sm:$0xff]
        %v1797 = vld [vmem:[%s1785 + $0x58] sm:$0xff]
        %v1798 = vld [vmem:[%s1785 + $0x60] sm:$0xff]
        %v1799 = vld [vmem:[%s1785 + $0x68] sm:$0xff]
        %v1800 = vld [vmem:[%s1785 + $0x70] sm:$0xff]
        %v1801 = vld [vmem:[%s1785 + $0x78] sm:$0xff]
        %v1802 = vld [vmem:[%s1785 + $0x80] sm:$0xff]
        %v1803 = vld [vmem:[%s1785 + $0x88] sm:$0xff]
        %v1804 = vld [vmem:[%s1785 + $0x90] sm:$0xff]
        %v1805 = vld [vmem:[%s1785 + $0x98] sm:$0xff]
        %v1806 = vld [vmem:[%s1785 + $0xa0] sm:$0xff]
        %v1807 = vld [vmem:[%s1785 + $0xa8] sm:$0xff]
        %v1808 = vld [vmem:[%s1785 + $0xb0] sm:$0xff]
        %v1809 = vld [vmem:[%s1785 + $0xb8] sm:$0xff]
        %v1810 = vld [vmem:[%s1785 + $0xc0] sm:$0xff]
        %v1811 = vld [vmem:[%s1785 + $0xc8] sm:$0xff]
        %v1812 = vld [vmem:[%s1785 + $0xd0] sm:$0xff]
        %v1813 = vld [vmem:[%s1785 + $0xd8] sm:$0xff]
        %v1814 = vld [vmem:[%s1785 + $0xe0] sm:$0xff]
        %v1815 = vld [vmem:[%s1785 + $0xe8] sm:$0xff]
        %v1816 = vld [vmem:[%s1785 + $0xf0] sm:$0xff]
        %v1817 = vld [vmem:[%s1785 + $0xf8] sm:$0xff]
        %v1818 = vld [vmem:[%s1785 + $0x100] sm:$0xff]
        %v1819 = vld [vmem:[%s1785 + $0x108] sm:$0xff]
        %v1820 = vld [vmem:[%s1785 + $0x110] sm:$0xff]
        %v1821 = vld [vmem:[%s1785 + $0x118] sm:$0xff]
        %v1822 = vld [vmem:[%s1785 + $0x120] sm:$0xff]
        %v1823 = vld [vmem:[%s1785 + $0x128] sm:$0xff]
        %v1824 = vld [vmem:[%s1785 + $0x130] sm:$0xff]
        %v1825 = vld [vmem:[%s1785 + $0x138] sm:$0xff]
        %v1826 = vld [vmem:[%s1785 + $0x140] sm:$0xff]
        %v1827 = vld [vmem:[%s1785 + $0x148] sm:$0xff]
        %v1828 = vld [vmem:[%s1785 + $0x150] sm:$0xff]
        %v1829 = vld [vmem:[%s1785 + $0x158] sm:$0xff]
        %v1830 = vld [vmem:[%s1785 + $0x160] sm:$0xff]
        %v1831 = vld [vmem:[%s1785 + $0x168] sm:$0xff]
        %v1832 = vld [vmem:[%s1785 + $0x170] sm:$0xff]
        %v1833 = vld [vmem:[%s1785 + $0x178] sm:$0xff]
        %v1834 = vld [vmem:[%s1785 + $0x180] sm:$0xff]
        %v1835 = vld [vmem:[%s1785 + $0x188] sm:$0xff]
        %v1836 = vld [vmem:[%s1785 + $0x190] sm:$0xff]
        %v1837 = vld [vmem:[%s1785 + $0x198] sm:$0xff]
        %v1838 = vld [vmem:[%s1785 + $0x1a0] sm:$0xff]
        %v1839 = vld [vmem:[%s1785 + $0x1a8] sm:$0xff]
        %v1840 = vld [vmem:[%s1785 + $0x1b0] sm:$0xff]
        %v1841 = vld [vmem:[%s1785 + $0x1b8] sm:$0xff]
        %v1842 = vld [vmem:[%s1785 + $0x1c0] sm:$0xff]
        %v1843 = vld [vmem:[%s1785 + $0x1c8] sm:$0xff]
        %v1844 = vld [vmem:[%s1785 + $0x1d0] sm:$0xff]
        %v1845 = vld [vmem:[%s1785 + $0x1d8] sm:$0xff]
        %v1846 = vld [vmem:[%s1785 + $0x1e0] sm:$0xff]
        %v1847 = vld [vmem:[%s1785 + $0x1e8] sm:$0xff]
        %v1848 = vld [vmem:[%s1785 + $0x1f0] sm:$0xff]
        %v1849 = vld [vmem:[%s1785 + $0x1f8] sm:$0xff]
        %v1850 = vlaneseq
        %v1851 = vshrl.u32 %v1850, 7
        %v1852 = vsub.s32 6, %v1851
        %v1853 = vrot.slane %v477, %v1852
        %v1854 = vmul.f32 %v1786, %v1853
        %v1855 = vmul.f32 %v1787, %v1853
        %v1856 = vmul.f32 %v1788, %v1853
        %v1857 = vmul.f32 %v1790, %v1853
        %v1858 = vmul.f32 %v1791, %v1853
        %v1859 = vmul.f32 %v1792, %v1853
        %v1860 = vmul.f32 %v1794, %v1853
        %v1861 = vmul.f32 %v1795, %v1853
        %v1862 = vmul.f32 %v1796, %v1853
        %v1863 = vmul.f32 %v1798, %v1853
        %v1864 = vmul.f32 %v1799, %v1853
        %v1865 = vmul.f32 %v1800, %v1853
        %v1866 = vmul.f32 %v1802, %v1853
        %v1867 = vmul.f32 %v1803, %v1853
        %v1868 = vmul.f32 %v1804, %v1853
        %v1869 = vmul.f32 %v1806, %v1853
        %v1870 = vmul.f32 %v1807, %v1853
        %v1871 = vmul.f32 %v1808, %v1853
        %v1872 = vmul.f32 %v1810, %v1853
        %v1873 = vmul.f32 %v1811, %v1853
        %v1874 = vmul.f32 %v1812, %v1853
        %v1875 = vmul.f32 %v1814, %v1853
        %v1876 = vmul.f32 %v1815, %v1853
        %v1877 = vmul.f32 %v1816, %v1853
        %v1878 = vmul.f32 %v1818, %v1853
        %v1879 = vmul.f32 %v1819, %v1853
        %v1880 = vmul.f32 %v1820, %v1853
        %v1881 = vmul.f32 %v1822, %v1853
        %v1882 = vmul.f32 %v1823, %v1853
        %v1883 = vmul.f32 %v1824, %v1853
        %v1884 = vmul.f32 %v1826, %v1853
        %v1885 = vmul.f32 %v1827, %v1853
        %v1886 = vmul.f32 %v1828, %v1853
        %v1887 = vmul.f32 %v1830, %v1853
        %v1888 = vmul.f32 %v1831, %v1853
        %v1889 = vmul.f32 %v1832, %v1853
        %v1890 = vmul.f32 %v1834, %v1853
        %v1891 = vmul.f32 %v1835, %v1853
        %v1892 = vmul.f32 %v1836, %v1853
        %v1893 = vmul.f32 %v1838, %v1853
        %v1894 = vmul.f32 %v1839, %v1853
        %v1895 = vmul.f32 %v1840, %v1853
        %v1896 = vmul.f32 %v1842, %v1853
        %v1897 = vmul.f32 %v1843, %v1853
        %v1898 = vmul.f32 %v1844, %v1853
        %v1899 = vmul.f32 %v1846, %v1853
        %v1900 = vmul.f32 %v1847, %v1853
        %v1901 = vmul.f32 %v1848, %v1853
        %v1902 = vadd.f32 %v1737, %v1854
        %v1903 = vadd.f32 %v1738, %v1855
        %v1904 = vadd.f32 %v1739, %v1856
        %v1905 = vadd.f32 %v1740, %v1857
        %v1906 = vadd.f32 %v1741, %v1858
        %v1907 = vadd.f32 %v1742, %v1859
        %v1908 = vadd.f32 %v1743, %v1860
        %v1909 = vadd.f32 %v1744, %v1861
        %v1910 = vadd.f32 %v1745, %v1862
        %v1911 = vadd.f32 %v1746, %v1863
        %v1912 = vadd.f32 %v1747, %v1864
        %v1913 = vadd.f32 %v1748, %v1865
        %v1914 = vadd.f32 %v1749, %v1866
        %v1915 = vadd.f32 %v1750, %v1867
        %v1916 = vadd.f32 %v1751, %v1868
        %v1917 = vadd.f32 %v1752, %v1869
        %v1918 = vadd.f32 %v1753, %v1870
        %v1919 = vadd.f32 %v1754, %v1871
        %v1920 = vadd.f32 %v1755, %v1872
        %v1921 = vadd.f32 %v1756, %v1873
        %v1922 = vadd.f32 %v1757, %v1874
        %v1923 = vadd.f32 %v1758, %v1875
        %v1924 = vadd.f32 %v1759, %v1876
        %v1925 = vadd.f32 %v1760, %v1877
        %v1926 = vadd.f32 %v1761, %v1878
        %v1927 = vadd.f32 %v1762, %v1879
        %v1928 = vadd.f32 %v1763, %v1880
        %v1929 = vadd.f32 %v1764, %v1881
        %v1930 = vadd.f32 %v1765, %v1882
        %v1931 = vadd.f32 %v1766, %v1883
        %v1932 = vadd.f32 %v1767, %v1884
        %v1933 = vadd.f32 %v1768, %v1885
        %v1934 = vadd.f32 %v1769, %v1886
        %v1935 = vadd.f32 %v1770, %v1887
        %v1936 = vadd.f32 %v1771, %v1888
        %v1937 = vadd.f32 %v1772, %v1889
        %v1938 = vadd.f32 %v1773, %v1890
        %v1939 = vadd.f32 %v1774, %v1891
        %v1940 = vadd.f32 %v1775, %v1892
        %v1941 = vadd.f32 %v1776, %v1893
        %v1942 = vadd.f32 %v1777, %v1894
        %v1943 = vadd.f32 %v1778, %v1895
        %v1944 = vadd.f32 %v1779, %v1896
        %v1945 = vadd.f32 %v1780, %v1897
        %v1946 = vadd.f32 %v1781, %v1898
        %v1947 = vadd.f32 %v1782, %v1899
        %v1948 = vadd.f32 %v1783, %v1900
        %v1949 = vadd.f32 %v1784, %v1901
        %v1950 = vlaneseq
        %v1951 = vshrl.u32 %v1950, 7
        %v1952 = vsub.s32 7, %v1951
        %v1953 = vrot.slane %v477, %v1952
        %v1954 = vmul.f32 %v1787, %v1953
        %v1955 = vmul.f32 %v1788, %v1953
        %v1956 = vmul.f32 %v1791, %v1953
        %v1957 = vmul.f32 %v1792, %v1953
        %v1958 = vmul.f32 %v1795, %v1953
        %v1959 = vmul.f32 %v1796, %v1953
        %v1960 = vmul.f32 %v1799, %v1953
        %v1961 = vmul.f32 %v1800, %v1953
        %v1962 = vmul.f32 %v1803, %v1953
        %v1963 = vmul.f32 %v1804, %v1953
        %v1964 = vmul.f32 %v1807, %v1953
        %v1965 = vmul.f32 %v1808, %v1953
        %v1966 = vmul.f32 %v1811, %v1953
        %v1967 = vmul.f32 %v1812, %v1953
        %v1968 = vmul.f32 %v1815, %v1953
        %v1969 = vmul.f32 %v1816, %v1953
        %v1970 = vmul.f32 %v1819, %v1953
        %v1971 = vmul.f32 %v1820, %v1953
        %v1972 = vmul.f32 %v1823, %v1953
        %v1973 = vmul.f32 %v1824, %v1953
        %v1974 = vmul.f32 %v1827, %v1953
        %v1975 = vmul.f32 %v1828, %v1953
        %v1976 = vmul.f32 %v1831, %v1953
        %v1977 = vmul.f32 %v1832, %v1953
        %v1978 = vmul.f32 %v1835, %v1953
        %v1979 = vmul.f32 %v1836, %v1953
        %v1980 = vmul.f32 %v1839, %v1953
        %v1981 = vmul.f32 %v1840, %v1953
        %v1982 = vmul.f32 %v1843, %v1953
        %v1983 = vmul.f32 %v1844, %v1953
        %v1984 = vmul.f32 %v1847, %v1953
        %v1985 = vmul.f32 %v1848, %v1953
        %v2018 = vrot.slane %v1954, 1
        %v2019 = vrot.slane %v1955, 1
        %v2020 = vsel %vm711, %v2018, %v2019
        %v2021 = vrot.slane %v1956, 1
        %v2022 = vrot.slane %v1957, 1
        %v2023 = vsel %vm711, %v2021, %v2022
        %v2024 = vrot.slane %v1958, 1
        %v2025 = vrot.slane %v1959, 1
        %v2026 = vsel %vm711, %v2024, %v2025
        %v2027 = vrot.slane %v1960, 1
        %v2028 = vrot.slane %v1961, 1
        %v2029 = vsel %vm711, %v2027, %v2028
        %v2030 = vrot.slane %v1962, 1
        %v2031 = vrot.slane %v1963, 1
        %v2032 = vsel %vm711, %v2030, %v2031
        %v2033 = vrot.slane %v1964, 1
        %v2034 = vrot.slane %v1965, 1
        %v2035 = vsel %vm711, %v2033, %v2034
        %v2036 = vrot.slane %v1966, 1
        %v2037 = vrot.slane %v1967, 1
        %v2038 = vsel %vm711, %v2036, %v2037
        %v2039 = vrot.slane %v1968, 1
        %v2040 = vrot.slane %v1969, 1
        %v2041 = vsel %vm711, %v2039, %v2040
        %v2042 = vrot.slane %v1970, 1
        %v2043 = vrot.slane %v1971, 1
        %v2044 = vsel %vm711, %v2042, %v2043
        %v2045 = vrot.slane %v1972, 1
        %v2046 = vrot.slane %v1973, 1
        %v2047 = vsel %vm711, %v2045, %v2046
        %v2048 = vrot.slane %v1974, 1
        %v2049 = vrot.slane %v1975, 1
        %v2050 = vsel %vm711, %v2048, %v2049
        %v2051 = vrot.slane %v1976, 1
        %v2052 = vrot.slane %v1977, 1
        %v2053 = vsel %vm711, %v2051, %v2052
        %v2054 = vrot.slane %v1978, 1
        %v2055 = vrot.slane %v1979, 1
        %v2056 = vsel %vm711, %v2054, %v2055
        %v2057 = vrot.slane %v1980, 1
        %v2058 = vrot.slane %v1981, 1
        %v2059 = vsel %vm711, %v2057, %v2058
        %v2060 = vrot.slane %v1982, 1
        %v2061 = vrot.slane %v1983, 1
        %v2062 = vsel %vm711, %v2060, %v2061
        %v2063 = vrot.slane %v1984, 1
        %v2064 = vrot.slane %v1985, 1
        %v2065 = vsel %vm711, %v2063, %v2064
        %v2114 = vadd.f32 %v1902, %v2018
        %v2115 = vadd.f32 %v1903, %v2020
        %v2116 = vadd.f32 %v1904, %v2019
        %v2117 = vadd.f32 %v1905, %v2021
        %v2118 = vadd.f32 %v1906, %v2023
        %v2119 = vadd.f32 %v1907, %v2022
        %v2120 = vadd.f32 %v1908, %v2024
        %v2121 = vadd.f32 %v1909, %v2026
        %v2122 = vadd.f32 %v1910, %v2025
        %v2123 = vadd.f32 %v1911, %v2027
        %v2124 = vadd.f32 %v1912, %v2029
        %v2125 = vadd.f32 %v1913, %v2028
        %v2126 = vadd.f32 %v1914, %v2030
        %v2127 = vadd.f32 %v1915, %v2032
        %v2128 = vadd.f32 %v1916, %v2031
        %v2129 = vadd.f32 %v1917, %v2033
        %v2130 = vadd.f32 %v1918, %v2035
        %v2131 = vadd.f32 %v1919, %v2034
        %v2132 = vadd.f32 %v1920, %v2036
        %v2133 = vadd.f32 %v1921, %v2038
        %v2134 = vadd.f32 %v1922, %v2037
        %v2135 = vadd.f32 %v1923, %v2039
        %v2136 = vadd.f32 %v1924, %v2041
        %v2137 = vadd.f32 %v1925, %v2040
        %v2138 = vadd.f32 %v1926, %v2042
        %v2139 = vadd.f32 %v1927, %v2044
        %v2140 = vadd.f32 %v1928, %v2043
        %v2141 = vadd.f32 %v1929, %v2045
        %v2142 = vadd.f32 %v1930, %v2047
        %v2143 = vadd.f32 %v1931, %v2046
        %v2144 = vadd.f32 %v1932, %v2048
        %v2145 = vadd.f32 %v1933, %v2050
        %v2146 = vadd.f32 %v1934, %v2049
        %v2147 = vadd.f32 %v1935, %v2051
        %v2148 = vadd.f32 %v1936, %v2053
        %v2149 = vadd.f32 %v1937, %v2052
        %v2150 = vadd.f32 %v1938, %v2054
        %v2151 = vadd.f32 %v1939, %v2056
        %v2152 = vadd.f32 %v1940, %v2055
        %v2153 = vadd.f32 %v1941, %v2057
        %v2154 = vadd.f32 %v1942, %v2059
        %v2155 = vadd.f32 %v1943, %v2058
        %v2156 = vadd.f32 %v1944, %v2060
        %v2157 = vadd.f32 %v1945, %v2062
        %v2158 = vadd.f32 %v1946, %v2061
        %v2159 = vadd.f32 %v1947, %v2063
        %v2160 = vadd.f32 %v1948, %v2065
        %v2161 = vadd.f32 %v1949, %v2064
        %v2162 = vlaneseq
        %v2163 = vshrl.u32 %v2162, 7
        %v2164 = vsub.s32 0, %v2163
        %v2165 = vrot.slane %v478, %v2164
        %v2166 = vmul.f32 %v1787, %v2165
        %v2167 = vmul.f32 %v1788, %v2165
        %v2168 = vmul.f32 %v1789, %v2165
        %v2169 = vmul.f32 %v1791, %v2165
        %v2170 = vmul.f32 %v1792, %v2165
        %v2171 = vmul.f32 %v1793, %v2165
        %v2172 = vmul.f32 %v1795, %v2165
        %v2173 = vmul.f32 %v1796, %v2165
        %v2174 = vmul.f32 %v1797, %v2165
        %v2175 = vmul.f32 %v1799, %v2165
        %v2176 = vmul.f32 %v1800, %v2165
        %v2177 = vmul.f32 %v1801, %v2165
        %v2178 = vmul.f32 %v1803, %v2165
        %v2179 = vmul.f32 %v1804, %v2165
        %v2180 = vmul.f32 %v1805, %v2165
        %v2181 = vmul.f32 %v1807, %v2165
        %v2182 = vmul.f32 %v1808, %v2165
        %v2183 = vmul.f32 %v1809, %v2165
        %v2184 = vmul.f32 %v1811, %v2165
        %v2185 = vmul.f32 %v1812, %v2165
        %v2186 = vmul.f32 %v1813, %v2165
        %v2187 = vmul.f32 %v1815, %v2165
        %v2188 = vmul.f32 %v1816, %v2165
        %v2189 = vmul.f32 %v1817, %v2165
        %v2190 = vmul.f32 %v1819, %v2165
        %v2191 = vmul.f32 %v1820, %v2165
        %v2192 = vmul.f32 %v1821, %v2165
        %v2193 = vmul.f32 %v1823, %v2165
        %v2194 = vmul.f32 %v1824, %v2165
        %v2195 = vmul.f32 %v1825, %v2165
        %v2196 = vmul.f32 %v1827, %v2165
        %v2197 = vmul.f32 %v1828, %v2165
        %v2198 = vmul.f32 %v1829, %v2165
        %v2199 = vmul.f32 %v1831, %v2165
        %v2200 = vmul.f32 %v1832, %v2165
        %v2201 = vmul.f32 %v1833, %v2165
        %v2202 = vmul.f32 %v1835, %v2165
        %v2203 = vmul.f32 %v1836, %v2165
        %v2204 = vmul.f32 %v1837, %v2165
        %v2205 = vmul.f32 %v1839, %v2165
        %v2206 = vmul.f32 %v1840, %v2165
        %v2207 = vmul.f32 %v1841, %v2165
        %v2208 = vmul.f32 %v1843, %v2165
        %v2209 = vmul.f32 %v1844, %v2165
        %v2210 = vmul.f32 %v1845, %v2165
        %v2211 = vmul.f32 %v1847, %v2165
        %v2212 = vmul.f32 %v1848, %v2165
        %v2213 = vmul.f32 %v1849, %v2165
        %v2262 = vrot.slane %v2166, 2
        %v2263 = vrot.slane %v2167, 2
        %v2264 = vsel %vm956, %v2262, %v2263
        %v2265 = vrot.slane %v2168, 2
        %v2266 = vsel %vm956, %v2263, %v2265
        %v2267 = vrot.slane %v2169, 2
        %v2268 = vrot.slane %v2170, 2
        %v2269 = vsel %vm956, %v2267, %v2268
        %v2270 = vrot.slane %v2171, 2
        %v2271 = vsel %vm956, %v2268, %v2270
        %v2272 = vrot.slane %v2172, 2
        %v2273 = vrot.slane %v2173, 2
        %v2274 = vsel %vm956, %v2272, %v2273
        %v2275 = vrot.slane %v2174, 2
        %v2276 = vsel %vm956, %v2273, %v2275
        %v2277 = vrot.slane %v2175, 2
        %v2278 = vrot.slane %v2176, 2
        %v2279 = vsel %vm956, %v2277, %v2278
        %v2280 = vrot.slane %v2177, 2
        %v2281 = vsel %vm956, %v2278, %v2280
        %v2282 = vrot.slane %v2178, 2
        %v2283 = vrot.slane %v2179, 2
        %v2284 = vsel %vm956, %v2282, %v2283
        %v2285 = vrot.slane %v2180, 2
        %v2286 = vsel %vm956, %v2283, %v2285
        %v2287 = vrot.slane %v2181, 2
        %v2288 = vrot.slane %v2182, 2
        %v2289 = vsel %vm956, %v2287, %v2288
        %v2290 = vrot.slane %v2183, 2
        %v2291 = vsel %vm956, %v2288, %v2290
        %v2292 = vrot.slane %v2184, 2
        %v2293 = vrot.slane %v2185, 2
        %v2294 = vsel %vm956, %v2292, %v2293
        %v2295 = vrot.slane %v2186, 2
        %v2296 = vsel %vm956, %v2293, %v2295
        %v2297 = vrot.slane %v2187, 2
        %v2298 = vrot.slane %v2188, 2
        %v2299 = vsel %vm956, %v2297, %v2298
        %v2300 = vrot.slane %v2189, 2
        %v2301 = vsel %vm956, %v2298, %v2300
        %v2302 = vrot.slane %v2190, 2
        %v2303 = vrot.slane %v2191, 2
        %v2304 = vsel %vm956, %v2302, %v2303
        %v2305 = vrot.slane %v2192, 2
        %v2306 = vsel %vm956, %v2303, %v2305
        %v2307 = vrot.slane %v2193, 2
        %v2308 = vrot.slane %v2194, 2
        %v2309 = vsel %vm956, %v2307, %v2308
        %v2310 = vrot.slane %v2195, 2
        %v2311 = vsel %vm956, %v2308, %v2310
        %v2312 = vrot.slane %v2196, 2
        %v2313 = vrot.slane %v2197, 2
        %v2314 = vsel %vm956, %v2312, %v2313
        %v2315 = vrot.slane %v2198, 2
        %v2316 = vsel %vm956, %v2313, %v2315
        %v2317 = vrot.slane %v2199, 2
        %v2318 = vrot.slane %v2200, 2
        %v2319 = vsel %vm956, %v2317, %v2318
        %v2320 = vrot.slane %v2201, 2
        %v2321 = vsel %vm956, %v2318, %v2320
        %v2322 = vrot.slane %v2202, 2
        %v2323 = vrot.slane %v2203, 2
        %v2324 = vsel %vm956, %v2322, %v2323
        %v2325 = vrot.slane %v2204, 2
        %v2326 = vsel %vm956, %v2323, %v2325
        %v2327 = vrot.slane %v2205, 2
        %v2328 = vrot.slane %v2206, 2
        %v2329 = vsel %vm956, %v2327, %v2328
        %v2330 = vrot.slane %v2207, 2
        %v2331 = vsel %vm956, %v2328, %v2330
        %v2332 = vrot.slane %v2208, 2
        %v2333 = vrot.slane %v2209, 2
        %v2334 = vsel %vm956, %v2332, %v2333
        %v2335 = vrot.slane %v2210, 2
        %v2336 = vsel %vm956, %v2333, %v2335
        %v2337 = vrot.slane %v2211, 2
        %v2338 = vrot.slane %v2212, 2
        %v2339 = vsel %vm956, %v2337, %v2338
        %v2340 = vrot.slane %v2213, 2
        %v2341 = vsel %vm956, %v2338, %v2340
        %v2390 = vadd.f32 %v2114, %v2262
        %v2391 = vadd.f32 %v2115, %v2264
        %v2392 = vadd.f32 %v2116, %v2266
        %v2393 = vadd.f32 %v2117, %v2267
        %v2394 = vadd.f32 %v2118, %v2269
        %v2395 = vadd.f32 %v2119, %v2271
        %v2396 = vadd.f32 %v2120, %v2272
        %v2397 = vadd.f32 %v2121, %v2274
        %v2398 = vadd.f32 %v2122, %v2276
        %v2399 = vadd.f32 %v2123, %v2277
        %v2400 = vadd.f32 %v2124, %v2279
        %v2401 = vadd.f32 %v2125, %v2281
        %v2402 = vadd.f32 %v2126, %v2282
        %v2403 = vadd.f32 %v2127, %v2284
        %v2404 = vadd.f32 %v2128, %v2286
        %v2405 = vadd.f32 %v2129, %v2287
        %v2406 = vadd.f32 %v2130, %v2289
        %v2407 = vadd.f32 %v2131, %v2291
        %v2408 = vadd.f32 %v2132, %v2292
        %v2409 = vadd.f32 %v2133, %v2294
        %v2410 = vadd.f32 %v2134, %v2296
        %v2411 = vadd.f32 %v2135, %v2297
        %v2412 = vadd.f32 %v2136, %v2299
        %v2413 = vadd.f32 %v2137, %v2301
        %v2414 = vadd.f32 %v2138, %v2302
        %v2415 = vadd.f32 %v2139, %v2304
        %v2416 = vadd.f32 %v2140, %v2306
        %v2417 = vadd.f32 %v2141, %v2307
        %v2418 = vadd.f32 %v2142, %v2309
        %v2419 = vadd.f32 %v2143, %v2311
        %v2420 = vadd.f32 %v2144, %v2312
        %v2421 = vadd.f32 %v2145, %v2314
        %v2422 = vadd.f32 %v2146, %v2316
        %v2423 = vadd.f32 %v2147, %v2317
        %v2424 = vadd.f32 %v2148, %v2319
        %v2425 = vadd.f32 %v2149, %v2321
        %v2426 = vadd.f32 %v2150, %v2322
        %v2427 = vadd.f32 %v2151, %v2324
        %v2428 = vadd.f32 %v2152, %v2326
        %v2429 = vadd.f32 %v2153, %v2327
        %v2430 = vadd.f32 %v2154, %v2329
        %v2431 = vadd.f32 %v2155, %v2331
        %v2432 = vadd.f32 %v2156, %v2332
        %v2433 = vadd.f32 %v2157, %v2334
        %v2434 = vadd.f32 %v2158, %v2336
        %v2435 = vadd.f32 %v2159, %v2337
        %v2436 = vadd.f32 %v2160, %v2339
        %v2437 = vadd.f32 %v2161, %v2341
        %v2438 = vld [vmem:[%s2] sm:$0x3]
        %vm2487 = vcmask 1040384
        %v2488 = vrot.slane %v2390, 7
        %v2489 = vrot.slane %v2391, 7
        %v2490 = vsel %vm2487, %v2488, %v2489
        %v2491 = vrot.slane %v2392, 7
        %v2492 = vsel %vm2487, %v2489, %v2491
        %v2493 = vrot.slane %v2393, 7
        %v2494 = vrot.slane %v2394, 7
        %v2495 = vsel %vm2487, %v2493, %v2494
        %v2496 = vrot.slane %v2395, 7
        %v2497 = vsel %vm2487, %v2494, %v2496
        %v2498 = vrot.slane %v2396, 7
        %v2499 = vrot.slane %v2397, 7
        %v2500 = vsel %vm2487, %v2498, %v2499
        %v2501 = vrot.slane %v2398, 7
        %v2502 = vsel %vm2487, %v2499, %v2501
        %v2503 = vrot.slane %v2399, 7
        %v2504 = vrot.slane %v2400, 7
        %v2505 = vsel %vm2487, %v2503, %v2504
        %v2506 = vrot.slane %v2401, 7
        %v2507 = vsel %vm2487, %v2504, %v2506
        %v2508 = vrot.slane %v2402, 7
        %v2509 = vrot.slane %v2403, 7
        %v2510 = vsel %vm2487, %v2508, %v2509
        %v2511 = vrot.slane %v2404, 7
        %v2512 = vsel %vm2487, %v2509, %v2511
        %v2513 = vrot.slane %v2405, 7
        %v2514 = vrot.slane %v2406, 7
        %v2515 = vsel %vm2487, %v2513, %v2514
        %v2516 = vrot.slane %v2407, 7
        %v2517 = vsel %vm2487, %v2514, %v2516
        %v2518 = vrot.slane %v2408, 7
        %v2519 = vrot.slane %v2409, 7
        %v2520 = vsel %vm2487, %v2518, %v2519
        %v2521 = vrot.slane %v2410, 7
        %v2522 = vsel %vm2487, %v2519, %v2521
        %v2523 = vrot.slane %v2411, 7
        %v2524 = vrot.slane %v2412, 7
        %v2525 = vsel %vm2487, %v2523, %v2524
        %v2526 = vrot.slane %v2413, 7
        %v2527 = vsel %vm2487, %v2524, %v2526
        %v2528 = vrot.slane %v2414, 7
        %v2529 = vrot.slane %v2415, 7
        %v2530 = vsel %vm2487, %v2528, %v2529
        %v2531 = vrot.slane %v2416, 7
        %v2532 = vsel %vm2487, %v2529, %v2531
        %v2533 = vrot.slane %v2417, 7
        %v2534 = vrot.slane %v2418, 7
        %v2535 = vsel %vm2487, %v2533, %v2534
        %v2536 = vrot.slane %v2419, 7
        %v2537 = vsel %vm2487, %v2534, %v2536
        %v2538 = vrot.slane %v2420, 7
        %v2539 = vrot.slane %v2421, 7
        %v2540 = vsel %vm2487, %v2538, %v2539
        %v2541 = vrot.slane %v2422, 7
        %v2542 = vsel %vm2487, %v2539, %v2541
        %v2543 = vrot.slane %v2423, 7
        %v2544 = vrot.slane %v2424, 7
        %v2545 = vsel %vm2487, %v2543, %v2544
        %v2546 = vrot.slane %v2425, 7
        %v2547 = vsel %vm2487, %v2544, %v2546
        %v2548 = vrot.slane %v2426, 7
        %v2549 = vrot.slane %v2427, 7
        %v2550 = vsel %vm2487, %v2548, %v2549
        %v2551 = vrot.slane %v2428, 7
        %v2552 = vsel %vm2487, %v2549, %v2551
        %v2553 = vrot.slane %v2429, 7
        %v2554 = vrot.slane %v2430, 7
        %v2555 = vsel %vm2487, %v2553, %v2554
        %v2556 = vrot.slane %v2431, 7
        %v2557 = vsel %vm2487, %v2554, %v2556
        %v2558 = vrot.slane %v2432, 7
        %v2559 = vrot.slane %v2433, 7
        %v2560 = vsel %vm2487, %v2558, %v2559
        %v2561 = vrot.slane %v2434, 7
        %v2562 = vsel %vm2487, %v2559, %v2561
        %v2563 = vrot.slane %v2435, 7
        %v2564 = vrot.slane %v2436, 7
        %v2565 = vsel %vm2487, %v2563, %v2564
        %v2566 = vrot.slane %v2437, 7
        %v2567 = vsel %vm2487, %v2564, %v2566
        %v2600 = vpack.c.bf16 %v2492, %v2490
        %v2601 = vpack.c.bf16 %v2497, %v2495
        %v2602 = vpack.c.bf16 %v2502, %v2500
        %v2603 = vpack.c.bf16 %v2507, %v2505
        %v2604 = vpack.c.bf16 %v2512, %v2510
        %v2605 = vpack.c.bf16 %v2517, %v2515
        %v2606 = vpack.c.bf16 %v2522, %v2520
        %v2607 = vpack.c.bf16 %v2527, %v2525
        %v2608 = vpack.c.bf16 %v2532, %v2530
        %v2609 = vpack.c.bf16 %v2537, %v2535
        %v2610 = vpack.c.bf16 %v2542, %v2540
        %v2611 = vpack.c.bf16 %v2547, %v2545
        %v2612 = vpack.c.bf16 %v2552, %v2550
        %v2613 = vpack.c.bf16 %v2557, %v2555
        %v2614 = vpack.c.bf16 %v2562, %v2560
        %v2615 = vpack.c.bf16 %v2567, %v2565
        %v2616 = vld [vmem:[%s3] sm:$0x1]
        %v2618 = vlaneseq
        %v2619 = vshrl.u32 %v2618, 7
        %v2620 = vsub.s32 0, %v2619
        %v2621 = vrot.slane %v2616, %v2620
        %v2624 = vsel %vm444, %v2600, 0
        %v2627 = vsel %vm444, %v2601, 0
        %v2630 = vsel %vm444, %v2602, 0
        %v2633 = vsel %vm444, %v2603, 0
        %v2636 = vsel %vm444, %v2604, 0
        %v2639 = vsel %vm444, %v2605, 0
        %v2642 = vsel %vm444, %v2606, 0
        %v2645 = vsel %vm444, %v2607, 0
        %v2648 = vsel %vm444, %v2608, 0
        %v2651 = vsel %vm444, %v2609, 0
        %v2654 = vsel %vm444, %v2610, 0
        %v2657 = vsel %vm444, %v2611, 0
        %v2660 = vsel %vm444, %v2612, 0
        %v2663 = vsel %vm444, %v2613, 0
        %v2666 = vsel %vm444, %v2614, 0
        %v2669 = vsel %vm444, %v2615, 0
        %vm2671 = vcmask 1041408
        %v2673 = vsel %vm2671, %v2438, 0
        %2675 = vmatprep.subr.bf16.mxu0 0
        %2676 = vmatpush1.bf16.msra.mxu0 %v2673
        %2677 = vmatprep.subr.bf16.mxu0 0
        %2678 = vmatpush1.bf16.msra.mxu0 0
        %2679 = vmatprep.subr.bf16.mxu0 0
        %2680 = vmatpush1.bf16.msra.mxu0 0
        %2681 = vmatprep.subr.bf16.mxu0 0
        %2682 = vmatpush1.bf16.msra.mxu0 0
        %2683 = vmatprep.subr.bf16.mxu0 0
        %2684 = vmatpush1.bf16.msra.mxu0 0
        %2685 = vmatprep.subr.bf16.mxu0 0
        %2686 = vmatpush1.bf16.msra.mxu0 0
        %2687 = vmatprep.subr.bf16.mxu0 0
        %2688 = vmatpush1.bf16.msra.mxu0 0
        %2689 = vmatprep.subr.bf16.mxu0 0
        %2690 = vmatpush1.bf16.msra.mxu0 0
        %2691 = vmatprep.subr.bf16.mxu0 0
        %2692 = vmatpush1.bf16.msra.mxu0 0
        %2693 = vmatprep.subr.bf16.mxu0 0
        %2694 = vmatpush1.bf16.msra.mxu0 0
        %2695 = vmatprep.subr.bf16.mxu0 0
        %2696 = vmatpush1.bf16.msra.mxu0 0
        %2697 = vmatprep.subr.bf16.mxu0 0
        %2698 = vmatpush1.bf16.msra.mxu0 0
        %2699 = vmatprep.subr.bf16.mxu0 0
        %2700 = vmatpush1.bf16.msra.mxu0 0
        %2701 = vmatprep.subr.bf16.mxu0 0
        %2702 = vmatpush1.bf16.msra.mxu0 0
        %2703 = vmatprep.subr.bf16.mxu0 0
        %2704 = vmatpush1.bf16.msra.mxu0 0
        %2705 = vmatprep.subr.bf16.mxu0 0
        %2706 = vmatpush1.bf16.msra.mxu0 0
        %2707 = vmatprep.mubr.bf16.mxu0 0
        %2708 = vmatmul.mubr.bf16.gmra.mrb[0].mxu0 %v2624
        %v2709 = vpop.f32.mrb[0].mxu0
        %v2710 = vadd.f32 %v2621, %v2709
        %v2711 = vpop.f32.mrb[0].mxu0
        %v2712 = vpop.f32.mrb[0].mxu0
        %v2713 = vadd.f32 %v2621, %v2712
        %v2714 = vpop.f32.mrb[0].mxu0
        %2715 = vmatprep.mubr.bf16.mxu0 0
        %2716 = vmatmul.mubr.bf16.gmra.mrb[0].mxu0 %v2627
        %v2717 = vpop.f32.mrb[0].mxu0
        %v2718 = vadd.f32 %v2621, %v2717
        %v2719 = vpop.f32.mrb[0].mxu0
        %v2720 = vpop.f32.mrb[0].mxu0
        %v2721 = vadd.f32 %v2621, %v2720
        %v2722 = vpop.f32.mrb[0].mxu0
        %2723 = vmatprep.mubr.bf16.mxu0 0
        %2724 = vmatmul.mubr.bf16.gmra.mrb[0].mxu0 %v2630
        %v2725 = vpop.f32.mrb[0].mxu0
        %v2726 = vadd.f32 %v2621, %v2725
        %v2727 = vpop.f32.mrb[0].mxu0
        %v2728 = vpop.f32.mrb[0].mxu0
        %v2729 = vadd.f32 %v2621, %v2728
        %v2730 = vpop.f32.mrb[0].mxu0
        %2731 = vmatprep.mubr.bf16.mxu0 0
        %2732 = vmatmul.mubr.bf16.gmra.mrb[0].mxu0 %v2633
        %v2733 = vpop.f32.mrb[0].mxu0
        %v2734 = vadd.f32 %v2621, %v2733
        %v2735 = vpop.f32.mrb[0].mxu0
        %v2736 = vpop.f32.mrb[0].mxu0
        %v2737 = vadd.f32 %v2621, %v2736
        %v2738 = vpop.f32.mrb[0].mxu0
        %2739 = vmatprep.mubr.bf16.mxu0 0
        %2740 = vmatmul.mubr.bf16.gmra.mrb[0].mxu0 %v2636
        %v2741 = vpop.f32.mrb[0].mxu0
        %v2742 = vadd.f32 %v2621, %v2741
        %v2743 = vpop.f32.mrb[0].mxu0
        %v2744 = vpop.f32.mrb[0].mxu0
        %v2745 = vadd.f32 %v2621, %v2744
        %v2746 = vpop.f32.mrb[0].mxu0
        %2747 = vmatprep.mubr.bf16.mxu0 0
        %2748 = vmatmul.mubr.bf16.gmra.mrb[0].mxu0 %v2639
        %v2749 = vpop.f32.mrb[0].mxu0
        %v2750 = vadd.f32 %v2621, %v2749
        %v2751 = vpop.f32.mrb[0].mxu0
        %v2752 = vpop.f32.mrb[0].mxu0
        %v2753 = vadd.f32 %v2621, %v2752
        %v2754 = vpop.f32.mrb[0].mxu0
        %2755 = vmatprep.mubr.bf16.mxu0 0
        %2756 = vmatmul.mubr.bf16.gmra.mrb[0].mxu0 %v2642
        %v2757 = vpop.f32.mrb[0].mxu0
        %v2758 = vadd.f32 %v2621, %v2757
        %v2759 = vpop.f32.mrb[0].mxu0
        %v2760 = vpop.f32.mrb[0].mxu0
        %v2761 = vadd.f32 %v2621, %v2760
        %v2762 = vpop.f32.mrb[0].mxu0
        %2763 = vmatprep.mubr.bf16.mxu0 0
        %2764 = vmatmul.mubr.bf16.gmra.mrb[0].mxu0 %v2645
        %v2765 = vpop.f32.mrb[0].mxu0
        %v2766 = vadd.f32 %v2621, %v2765
        %v2767 = vpop.f32.mrb[0].mxu0
        %v2768 = vpop.f32.mrb[0].mxu0
        %v2769 = vadd.f32 %v2621, %v2768
        %v2770 = vpop.f32.mrb[0].mxu0
        %2771 = vmatprep.mubr.bf16.mxu0 0
        %2772 = vmatmul.mubr.bf16.gmra.mrb[0].mxu0 %v2648
        %v2773 = vpop.f32.mrb[0].mxu0
        %v2774 = vadd.f32 %v2621, %v2773
        %v2775 = vpop.f32.mrb[0].mxu0
        %v2776 = vpop.f32.mrb[0].mxu0
        %v2777 = vadd.f32 %v2621, %v2776
        %v2778 = vpop.f32.mrb[0].mxu0
        %2779 = vmatprep.mubr.bf16.mxu0 0
        %2780 = vmatmul.mubr.bf16.gmra.mrb[0].mxu0 %v2651
        %v2781 = vpop.f32.mrb[0].mxu0
        %v2782 = vadd.f32 %v2621, %v2781
        %v2783 = vpop.f32.mrb[0].mxu0
        %v2784 = vpop.f32.mrb[0].mxu0
        %v2785 = vadd.f32 %v2621, %v2784
        %v2786 = vpop.f32.mrb[0].mxu0
        %2787 = vmatprep.mubr.bf16.mxu0 0
        %2788 = vmatmul.mubr.bf16.gmra.mrb[0].mxu0 %v2654
        %v2789 = vpop.f32.mrb[0].mxu0
        %v2790 = vadd.f32 %v2621, %v2789
        %v2791 = vpop.f32.mrb[0].mxu0
        %v2792 = vpop.f32.mrb[0].mxu0
        %v2793 = vadd.f32 %v2621, %v2792
        %v2794 = vpop.f32.mrb[0].mxu0
        %2795 = vmatprep.mubr.bf16.mxu0 0
        %2796 = vmatmul.mubr.bf16.gmra.mrb[0].mxu0 %v2657
        %v2797 = vpop.f32.mrb[0].mxu0
        %v2798 = vadd.f32 %v2621, %v2797
        %v2799 = vpop.f32.mrb[0].mxu0
        %v2800 = vpop.f32.mrb[0].mxu0
        %v2801 = vadd.f32 %v2621, %v2800
        %v2802 = vpop.f32.mrb[0].mxu0
        %2803 = vmatprep.mubr.bf16.mxu0 0
        %2804 = vmatmul.mubr.bf16.gmra.mrb[0].mxu0 %v2660
        %v2805 = vpop.f32.mrb[0].mxu0
        %v2806 = vadd.f32 %v2621, %v2805
        %v2807 = vpop.f32.mrb[0].mxu0
        %v2808 = vpop.f32.mrb[0].mxu0
        %v2809 = vadd.f32 %v2621, %v2808
        %v2810 = vpop.f32.mrb[0].mxu0
        %2811 = vmatprep.mubr.bf16.mxu0 0
        %2812 = vmatmul.mubr.bf16.gmra.mrb[0].mxu0 %v2663
        %v2813 = vpop.f32.mrb[0].mxu0
        %v2814 = vadd.f32 %v2621, %v2813
        %v2815 = vpop.f32.mrb[0].mxu0
        %v2816 = vpop.f32.mrb[0].mxu0
        %v2817 = vadd.f32 %v2621, %v2816
        %v2818 = vpop.f32.mrb[0].mxu0
        %2819 = vmatprep.mubr.bf16.mxu0 0
        %2820 = vmatmul.mubr.bf16.gmra.mrb[0].mxu0 %v2666
        %v2821 = vpop.f32.mrb[0].mxu0
        %v2822 = vadd.f32 %v2621, %v2821
        %v2823 = vpop.f32.mrb[0].mxu0
        %v2824 = vpop.f32.mrb[0].mxu0
        %v2825 = vadd.f32 %v2621, %v2824
        %v2826 = vpop.f32.mrb[0].mxu0
        %2827 = vmatprep.mubr.bf16.mxu0 0
        %2828 = vmatmul.mubr.bf16.gmra.mrb[0].mxu0 %v2669
        %v2829 = vpop.f32.mrb[0].mxu0
        %v2830 = vadd.f32 %v2621, %v2829
        %v2831 = vpop.f32.mrb[0].mxu0
        %v2832 = vpop.f32.mrb[0].mxu0
        %v2833 = vadd.f32 %v2621, %v2832
        %v2834 = vpop.f32.mrb[0].mxu0
        %2835 = vdwg.mxu0
        %v2836 = vmax.f32 %v2710, 0.0
        %v2837 = vmax.f32 %v2713, 0.0
        %v2838 = vmax.f32 %v2718, 0.0
        %v2839 = vmax.f32 %v2721, 0.0
        %v2840 = vmax.f32 %v2726, 0.0
        %v2841 = vmax.f32 %v2729, 0.0
        %v2842 = vmax.f32 %v2734, 0.0
        %v2843 = vmax.f32 %v2737, 0.0
        %v2844 = vmax.f32 %v2742, 0.0
        %v2845 = vmax.f32 %v2745, 0.0
        %v2846 = vmax.f32 %v2750, 0.0
        %v2847 = vmax.f32 %v2753, 0.0
        %v2848 = vmax.f32 %v2758, 0.0
        %v2849 = vmax.f32 %v2761, 0.0
        %v2850 = vmax.f32 %v2766, 0.0
        %v2851 = vmax.f32 %v2769, 0.0
        %v2852 = vmax.f32 %v2774, 0.0
        %v2853 = vmax.f32 %v2777, 0.0
        %v2854 = vmax.f32 %v2782, 0.0
        %v2855 = vmax.f32 %v2785, 0.0
        %v2856 = vmax.f32 %v2790, 0.0
        %v2857 = vmax.f32 %v2793, 0.0
        %v2858 = vmax.f32 %v2798, 0.0
        %v2859 = vmax.f32 %v2801, 0.0
        %v2860 = vmax.f32 %v2806, 0.0
        %v2861 = vmax.f32 %v2809, 0.0
        %v2862 = vmax.f32 %v2814, 0.0
        %v2863 = vmax.f32 %v2817, 0.0
        %v2864 = vmax.f32 %v2822, 0.0
        %v2865 = vmax.f32 %v2825, 0.0
        %v2866 = vmax.f32 %v2830, 0.0
        %v2867 = vmax.f32 %v2833, 0.0
        %2868 = vst.msk [vmem:[%s443 + $0x8] sm:$0xff] %vm332, %v2836
        %2869 = vst.msk [vmem:[%s443 + $0x10] sm:$0xff] %vm332, %v2837
        %2870 = vst.msk [vmem:[%s443 + $0x28] sm:$0xff] %vm332, %v2838
        %2871 = vst.msk [vmem:[%s443 + $0x30] sm:$0xff] %vm332, %v2839
        %2872 = vst.msk [vmem:[%s443 + $0x48] sm:$0xff] %vm332, %v2840
        %2873 = vst.msk [vmem:[%s443 + $0x50] sm:$0xff] %vm332, %v2841
        %2874 = vst.msk [vmem:[%s443 + $0x68] sm:$0xff] %vm332, %v2842
        %2875 = vst.msk [vmem:[%s443 + $0x70] sm:$0xff] %vm332, %v2843
        %2876 = vst.msk [vmem:[%s443 + $0x88] sm:$0xff] %vm332, %v2844
        %2877 = vst.msk [vmem:[%s443 + $0x90] sm:$0xff] %vm332, %v2845
        %2878 = vst.msk [vmem:[%s443 + $0xa8] sm:$0xff] %vm332, %v2846
        %2879 = vst.msk [vmem:[%s443 + $0xb0] sm:$0xff] %vm332, %v2847
        %2880 = vst.msk [vmem:[%s443 + $0xc8] sm:$0xff] %vm332, %v2848
        %2881 = vst.msk [vmem:[%s443 + $0xd0] sm:$0xff] %vm332, %v2849
        %2882 = vst.msk [vmem:[%s443 + $0xe8] sm:$0xff] %vm332, %v2850
        %2883 = vst.msk [vmem:[%s443 + $0xf0] sm:$0xff] %vm332, %v2851
        %2884 = vst.msk [vmem:[%s443 + $0x108] sm:$0xff] %vm332, %v2852
        %2885 = vst.msk [vmem:[%s443 + $0x110] sm:$0xff] %vm332, %v2853
        %2886 = vst.msk [vmem:[%s443 + $0x128] sm:$0xff] %vm332, %v2854
        %2887 = vst.msk [vmem:[%s443 + $0x130] sm:$0xff] %vm332, %v2855
        %2888 = vst.msk [vmem:[%s443 + $0x148] sm:$0xff] %vm332, %v2856
        %2889 = vst.msk [vmem:[%s443 + $0x150] sm:$0xff] %vm332, %v2857
        %2890 = vst.msk [vmem:[%s443 + $0x168] sm:$0xff] %vm332, %v2858
        %2891 = vst.msk [vmem:[%s443 + $0x170] sm:$0xff] %vm332, %v2859
        %2892 = vst.msk [vmem:[%s443 + $0x188] sm:$0xff] %vm332, %v2860
        %2893 = vst.msk [vmem:[%s443 + $0x190] sm:$0xff] %vm332, %v2861
        %2894 = vst.msk [vmem:[%s443 + $0x1a8] sm:$0xff] %vm332, %v2862
        %2895 = vst.msk [vmem:[%s443 + $0x1b0] sm:$0xff] %vm332, %v2863
        %2896 = vst.msk [vmem:[%s443 + $0x1c8] sm:$0xff] %vm332, %v2864
        %2897 = vst.msk [vmem:[%s443 + $0x1d0] sm:$0xff] %vm332, %v2865
        %2898 = vst.msk [vmem:[%s443 + $0x1e8] sm:$0xff] %vm332, %v2866
        %2899 = vst.msk [vmem:[%s443 + $0x1f0] sm:$0xff] %vm332, %v2867
        %v2900 = vld [vmem:[%s4] sm:$0xff]
        %v2901 = vld [vmem:[%s4 + $0x8] sm:$0x1]
        %v2902 = vld [vmem:[#allocation2] sm:$0xff]
        %v2903 = vld [vmem:[#allocation2 + $0x8] sm:$0xff]
        %v2904 = vld [vmem:[#allocation2 + $0x10] sm:$0xff]
        %v2905 = vld [vmem:[#allocation2 + $0x18] sm:$0xff]
        %v2906 = vld [vmem:[#allocation2 + $0x20] sm:$0xff]
        %v2907 = vld [vmem:[#allocation2 + $0x28] sm:$0xff]
        %v2908 = vld [vmem:[#allocation2 + $0x30] sm:$0xff]
        %v2909 = vld [vmem:[#allocation2 + $0x38] sm:$0xff]
        %v2910 = vld [vmem:[#allocation2 + $0x40] sm:$0xff]
        %v2911 = vld [vmem:[#allocation2 + $0x48] sm:$0xff]
        %v2912 = vld [vmem:[#allocation2 + $0x50] sm:$0xff]
        %v2913 = vld [vmem:[#allocation2 + $0x58] sm:$0xff]
        %v2914 = vld [vmem:[#allocation2 + $0x60] sm:$0xff]
        %v2915 = vld [vmem:[#allocation2 + $0x68] sm:$0xff]
        %v2916 = vld [vmem:[#allocation2 + $0x70] sm:$0xff]
        %v2917 = vld [vmem:[#allocation2 + $0x78] sm:$0xff]
        %v2918 = vld [vmem:[#allocation2 + $0x80] sm:$0xff]
        %v2919 = vld [vmem:[#allocation2 + $0x88] sm:$0xff]
        %v2920 = vld [vmem:[#allocation2 + $0x90] sm:$0xff]
        %v2921 = vld [vmem:[#allocation2 + $0x98] sm:$0xff]
        %v2922 = vld [vmem:[#allocation2 + $0xa0] sm:$0xff]
        %v2923 = vld [vmem:[#allocation2 + $0xa8] sm:$0xff]
        %v2924 = vld [vmem:[#allocation2 + $0xb0] sm:$0xff]
        %v2925 = vld [vmem:[#allocation2 + $0xb8] sm:$0xff]
        %v2926 = vld [vmem:[#allocation2 + $0xc0] sm:$0xff]
        %v2927 = vld [vmem:[#allocation2 + $0xc8] sm:$0xff]
        %v2928 = vld [vmem:[#allocation2 + $0xd0] sm:$0xff]
        %v2929 = vld [vmem:[#allocation2 + $0xd8] sm:$0xff]
        %v2930 = vld [vmem:[#allocation2 + $0xe0] sm:$0xff]
        %v2931 = vld [vmem:[#allocation2 + $0xe8] sm:$0xff]
        %v2932 = vld [vmem:[#allocation2 + $0xf0] sm:$0xff]
        %v2933 = vld [vmem:[#allocation2 + $0xf8] sm:$0xff]
        %v2934 = vld [vmem:[#allocation2 + $0x100] sm:$0xff]
        %v2935 = vld [vmem:[#allocation2 + $0x108] sm:$0xff]
        %v2936 = vld [vmem:[#allocation2 + $0x110] sm:$0xff]
        %v2937 = vld [vmem:[#allocation2 + $0x118] sm:$0xff]
        %v2938 = vld [vmem:[#allocation2 + $0x120] sm:$0xff]
        %v2939 = vld [vmem:[#allocation2 + $0x128] sm:$0xff]
        %v2940 = vld [vmem:[#allocation2 + $0x130] sm:$0xff]
        %v2941 = vld [vmem:[#allocation2 + $0x138] sm:$0xff]
        %v2942 = vld [vmem:[#allocation2 + $0x140] sm:$0xff]
        %v2943 = vld [vmem:[#allocation2 + $0x148] sm:$0xff]
        %v2944 = vld [vmem:[#allocation2 + $0x150] sm:$0xff]
        %v2945 = vld [vmem:[#allocation2 + $0x158] sm:$0xff]
        %v2946 = vld [vmem:[#allocation2 + $0x160] sm:$0xff]
        %v2947 = vld [vmem:[#allocation2 + $0x168] sm:$0xff]
        %v2948 = vld [vmem:[#allocation2 + $0x170] sm:$0xff]
        %v2949 = vld [vmem:[#allocation2 + $0x178] sm:$0xff]
        %v2950 = vld [vmem:[#allocation2 + $0x180] sm:$0xff]
        %v2951 = vld [vmem:[#allocation2 + $0x188] sm:$0xff]
        %v2952 = vld [vmem:[#allocation2 + $0x190] sm:$0xff]
        %v2953 = vld [vmem:[#allocation2 + $0x198] sm:$0xff]
        %v2954 = vld [vmem:[#allocation2 + $0x1a0] sm:$0xff]
        %v2955 = vld [vmem:[#allocation2 + $0x1a8] sm:$0xff]
        %v2956 = vld [vmem:[#allocation2 + $0x1b0] sm:$0xff]
        %v2957 = vld [vmem:[#allocation2 + $0x1b8] sm:$0xff]
        %v2958 = vld [vmem:[#allocation2 + $0x1c0] sm:$0xff]
        %v2959 = vld [vmem:[#allocation2 + $0x1c8] sm:$0xff]
        %v2960 = vld [vmem:[#allocation2 + $0x1d0] sm:$0xff]
        %v2961 = vld [vmem:[#allocation2 + $0x1d8] sm:$0xff]
        %v2962 = vld [vmem:[#allocation2 + $0x1e0] sm:$0xff]
        %v2963 = vld [vmem:[#allocation2 + $0x1e8] sm:$0xff]
        %v2964 = vld [vmem:[#allocation2 + $0x1f0] sm:$0xff]
        %v2965 = vld [vmem:[#allocation2 + $0x1f8] sm:$0xff]
        %v2966 = vlaneseq
        %v2967 = vshrl.u32 %v2966, 7
        %v2968 = vsub.s32 0, %v2967
        %v2969 = vrot.slane %v2900, %v2968
        %v2970 = vmul.f32 %v2902, %v2969
        %v2971 = vmul.f32 %v2903, %v2969
        %v2972 = vmul.f32 %v2904, %v2969
        %v2973 = vmul.f32 %v2906, %v2969
        %v2974 = vmul.f32 %v2907, %v2969
        %v2975 = vmul.f32 %v2908, %v2969
        %v2976 = vmul.f32 %v2910, %v2969
        %v2977 = vmul.f32 %v2911, %v2969
        %v2978 = vmul.f32 %v2912, %v2969
        %v2979 = vmul.f32 %v2914, %v2969
        %v2980 = vmul.f32 %v2915, %v2969
        %v2981 = vmul.f32 %v2916, %v2969
        %v2982 = vmul.f32 %v2918, %v2969
        %v2983 = vmul.f32 %v2919, %v2969
        %v2984 = vmul.f32 %v2920, %v2969
        %v2985 = vmul.f32 %v2922, %v2969
        %v2986 = vmul.f32 %v2923, %v2969
        %v2987 = vmul.f32 %v2924, %v2969
        %v2988 = vmul.f32 %v2926, %v2969
        %v2989 = vmul.f32 %v2927, %v2969
        %v2990 = vmul.f32 %v2928, %v2969
        %v2991 = vmul.f32 %v2930, %v2969
        %v2992 = vmul.f32 %v2931, %v2969
        %v2993 = vmul.f32 %v2932, %v2969
        %v2994 = vmul.f32 %v2934, %v2969
        %v2995 = vmul.f32 %v2935, %v2969
        %v2996 = vmul.f32 %v2936, %v2969
        %v2997 = vmul.f32 %v2938, %v2969
        %v2998 = vmul.f32 %v2939, %v2969
        %v2999 = vmul.f32 %v2940, %v2969
        %v3000 = vmul.f32 %v2942, %v2969
        %v3001 = vmul.f32 %v2943, %v2969
        %v3002 = vmul.f32 %v2944, %v2969
        %v3003 = vmul.f32 %v2946, %v2969
        %v3004 = vmul.f32 %v2947, %v2969
        %v3005 = vmul.f32 %v2948, %v2969
        %v3006 = vmul.f32 %v2950, %v2969
        %v3007 = vmul.f32 %v2951, %v2969
        %v3008 = vmul.f32 %v2952, %v2969
        %v3009 = vmul.f32 %v2954, %v2969
        %v3010 = vmul.f32 %v2955, %v2969
        %v3011 = vmul.f32 %v2956, %v2969
        %v3012 = vmul.f32 %v2958, %v2969
        %v3013 = vmul.f32 %v2959, %v2969
        %v3014 = vmul.f32 %v2960, %v2969
        %v3015 = vmul.f32 %v2962, %v2969
        %v3016 = vmul.f32 %v2963, %v2969
        %v3017 = vmul.f32 %v2964, %v2969
        %v3018 = vadd.f32 %v2970, 0.0
        %v3019 = vadd.f32 %v2971, 0.0
        %v3020 = vadd.f32 %v2972, 0.0
        %v3021 = vadd.f32 %v2973, 0.0
        %v3022 = vadd.f32 %v2974, 0.0
        %v3023 = vadd.f32 %v2975, 0.0
        %v3024 = vadd.f32 %v2976, 0.0
        %v3025 = vadd.f32 %v2977, 0.0
        %v3026 = vadd.f32 %v2978, 0.0
        %v3027 = vadd.f32 %v2979, 0.0
        %v3028 = vadd.f32 %v2980, 0.0
        %v3029 = vadd.f32 %v2981, 0.0
        %v3030 = vadd.f32 %v2982, 0.0
        %v3031 = vadd.f32 %v2983, 0.0
        %v3032 = vadd.f32 %v2984, 0.0
        %v3033 = vadd.f32 %v2985, 0.0
        %v3034 = vadd.f32 %v2986, 0.0
        %v3035 = vadd.f32 %v2987, 0.0
        %v3036 = vadd.f32 %v2988, 0.0
        %v3037 = vadd.f32 %v2989, 0.0
        %v3038 = vadd.f32 %v2990, 0.0
        %v3039 = vadd.f32 %v2991, 0.0
        %v3040 = vadd.f32 %v2992, 0.0
        %v3041 = vadd.f32 %v2993, 0.0
        %v3042 = vadd.f32 %v2994, 0.0
        %v3043 = vadd.f32 %v2995, 0.0
        %v3044 = vadd.f32 %v2996, 0.0
        %v3045 = vadd.f32 %v2997, 0.0
        %v3046 = vadd.f32 %v2998, 0.0
        %v3047 = vadd.f32 %v2999, 0.0
        %v3048 = vadd.f32 %v3000, 0.0
        %v3049 = vadd.f32 %v3001, 0.0
        %v3050 = vadd.f32 %v3002, 0.0
        %v3051 = vadd.f32 %v3003, 0.0
        %v3052 = vadd.f32 %v3004, 0.0
        %v3053 = vadd.f32 %v3005, 0.0
        %v3054 = vadd.f32 %v3006, 0.0
        %v3055 = vadd.f32 %v3007, 0.0
        %v3056 = vadd.f32 %v3008, 0.0
        %v3057 = vadd.f32 %v3009, 0.0
        %v3058 = vadd.f32 %v3010, 0.0
        %v3059 = vadd.f32 %v3011, 0.0
        %v3060 = vadd.f32 %v3012, 0.0
        %v3061 = vadd.f32 %v3013, 0.0
        %v3062 = vadd.f32 %v3014, 0.0
        %v3063 = vadd.f32 %v3015, 0.0
        %v3064 = vadd.f32 %v3016, 0.0
        %v3065 = vadd.f32 %v3017, 0.0
        %v3066 = vlaneseq
        %v3067 = vshrl.u32 %v3066, 7
        %v3068 = vsub.s32 1, %v3067
        %v3069 = vrot.slane %v2900, %v3068
        %v3070 = vmul.f32 %v2903, %v3069
        %v3071 = vmul.f32 %v2904, %v3069
        %v3072 = vmul.f32 %v2907, %v3069
        %v3073 = vmul.f32 %v2908, %v3069
        %v3074 = vmul.f32 %v2911, %v3069
        %v3075 = vmul.f32 %v2912, %v3069
        %v3076 = vmul.f32 %v2915, %v3069
        %v3077 = vmul.f32 %v2916, %v3069
        %v3078 = vmul.f32 %v2919, %v3069
        %v3079 = vmul.f32 %v2920, %v3069
        %v3080 = vmul.f32 %v2923, %v3069
        %v3081 = vmul.f32 %v2924, %v3069
        %v3082 = vmul.f32 %v2927, %v3069
        %v3083 = vmul.f32 %v2928, %v3069
        %v3084 = vmul.f32 %v2931, %v3069
        %v3085 = vmul.f32 %v2932, %v3069
        %v3086 = vmul.f32 %v2935, %v3069
        %v3087 = vmul.f32 %v2936, %v3069
        %v3088 = vmul.f32 %v2939, %v3069
        %v3089 = vmul.f32 %v2940, %v3069
        %v3090 = vmul.f32 %v2943, %v3069
        %v3091 = vmul.f32 %v2944, %v3069
        %v3092 = vmul.f32 %v2947, %v3069
        %v3093 = vmul.f32 %v2948, %v3069
        %v3094 = vmul.f32 %v2951, %v3069
        %v3095 = vmul.f32 %v2952, %v3069
        %v3096 = vmul.f32 %v2955, %v3069
        %v3097 = vmul.f32 %v2956, %v3069
        %v3098 = vmul.f32 %v2959, %v3069
        %v3099 = vmul.f32 %v2960, %v3069
        %v3100 = vmul.f32 %v2963, %v3069
        %v3101 = vmul.f32 %v2964, %v3069
        %v3134 = vrot.slane %v3070, 1
        %v3135 = vrot.slane %v3071, 1
        %v3136 = vsel %vm711, %v3134, %v3135
        %v3137 = vrot.slane %v3072, 1
        %v3138 = vrot.slane %v3073, 1
        %v3139 = vsel %vm711, %v3137, %v3138
        %v3140 = vrot.slane %v3074, 1
        %v3141 = vrot.slane %v3075, 1
        %v3142 = vsel %vm711, %v3140, %v3141
        %v3143 = vrot.slane %v3076, 1
        %v3144 = vrot.slane %v3077, 1
        %v3145 = vsel %vm711, %v3143, %v3144
        %v3146 = vrot.slane %v3078, 1
        %v3147 = vrot.slane %v3079, 1
        %v3148 = vsel %vm711, %v3146, %v3147
        %v3149 = vrot.slane %v3080, 1
        %v3150 = vrot.slane %v3081, 1
        %v3151 = vsel %vm711, %v3149, %v3150
        %v3152 = vrot.slane %v3082, 1
        %v3153 = vrot.slane %v3083, 1
        %v3154 = vsel %vm711, %v3152, %v3153
        %v3155 = vrot.slane %v3084, 1
        %v3156 = vrot.slane %v3085, 1
        %v3157 = vsel %vm711, %v3155, %v3156
        %v3158 = vrot.slane %v3086, 1
        %v3159 = vrot.slane %v3087, 1
        %v3160 = vsel %vm711, %v3158, %v3159
        %v3161 = vrot.slane %v3088, 1
        %v3162 = vrot.slane %v3089, 1
        %v3163 = vsel %vm711, %v3161, %v3162
        %v3164 = vrot.slane %v3090, 1
        %v3165 = vrot.slane %v3091, 1
        %v3166 = vsel %vm711, %v3164, %v3165
        %v3167 = vrot.slane %v3092, 1
        %v3168 = vrot.slane %v3093, 1
        %v3169 = vsel %vm711, %v3167, %v3168
        %v3170 = vrot.slane %v3094, 1
        %v3171 = vrot.slane %v3095, 1
        %v3172 = vsel %vm711, %v3170, %v3171
        %v3173 = vrot.slane %v3096, 1
        %v3174 = vrot.slane %v3097, 1
        %v3175 = vsel %vm711, %v3173, %v3174
        %v3176 = vrot.slane %v3098, 1
        %v3177 = vrot.slane %v3099, 1
        %v3178 = vsel %vm711, %v3176, %v3177
        %v3179 = vrot.slane %v3100, 1
        %v3180 = vrot.slane %v3101, 1
        %v3181 = vsel %vm711, %v3179, %v3180
        %v3230 = vadd.f32 %v3018, %v3134
        %v3231 = vadd.f32 %v3019, %v3136
        %v3232 = vadd.f32 %v3020, %v3135
        %v3233 = vadd.f32 %v3021, %v3137
        %v3234 = vadd.f32 %v3022, %v3139
        %v3235 = vadd.f32 %v3023, %v3138
        %v3236 = vadd.f32 %v3024, %v3140
        %v3237 = vadd.f32 %v3025, %v3142
        %v3238 = vadd.f32 %v3026, %v3141
        %v3239 = vadd.f32 %v3027, %v3143
        %v3240 = vadd.f32 %v3028, %v3145
        %v3241 = vadd.f32 %v3029, %v3144
        %v3242 = vadd.f32 %v3030, %v3146
        %v3243 = vadd.f32 %v3031, %v3148
        %v3244 = vadd.f32 %v3032, %v3147
        %v3245 = vadd.f32 %v3033, %v3149
        %v3246 = vadd.f32 %v3034, %v3151
        %v3247 = vadd.f32 %v3035, %v3150
        %v3248 = vadd.f32 %v3036, %v3152
        %v3249 = vadd.f32 %v3037, %v3154
        %v3250 = vadd.f32 %v3038, %v3153
        %v3251 = vadd.f32 %v3039, %v3155
        %v3252 = vadd.f32 %v3040, %v3157
        %v3253 = vadd.f32 %v3041, %v3156
        %v3254 = vadd.f32 %v3042, %v3158
        %v3255 = vadd.f32 %v3043, %v3160
        %v3256 = vadd.f32 %v3044, %v3159
        %v3257 = vadd.f32 %v3045, %v3161
        %v3258 = vadd.f32 %v3046, %v3163
        %v3259 = vadd.f32 %v3047, %v3162
        %v3260 = vadd.f32 %v3048, %v3164
        %v3261 = vadd.f32 %v3049, %v3166
        %v3262 = vadd.f32 %v3050, %v3165
        %v3263 = vadd.f32 %v3051, %v3167
        %v3264 = vadd.f32 %v3052, %v3169
        %v3265 = vadd.f32 %v3053, %v3168
        %v3266 = vadd.f32 %v3054, %v3170
        %v3267 = vadd.f32 %v3055, %v3172
        %v3268 = vadd.f32 %v3056, %v3171
        %v3269 = vadd.f32 %v3057, %v3173
        %v3270 = vadd.f32 %v3058, %v3175
        %v3271 = vadd.f32 %v3059, %v3174
        %v3272 = vadd.f32 %v3060, %v3176
        %v3273 = vadd.f32 %v3061, %v3178
        %v3274 = vadd.f32 %v3062, %v3177
        %v3275 = vadd.f32 %v3063, %v3179
        %v3276 = vadd.f32 %v3064, %v3181
        %v3277 = vadd.f32 %v3065, %v3180
        %v3278 = vlaneseq
        %v3279 = vshrl.u32 %v3278, 7
        %v3280 = vsub.s32 2, %v3279
        %v3281 = vrot.slane %v2900, %v3280
        %v3282 = vmul.f32 %v2903, %v3281
        %v3283 = vmul.f32 %v2904, %v3281
        %v3284 = vmul.f32 %v2905, %v3281
        %v3285 = vmul.f32 %v2907, %v3281
        %v3286 = vmul.f32 %v2908, %v3281
        %v3287 = vmul.f32 %v2909, %v3281
        %v3288 = vmul.f32 %v2911, %v3281
        %v3289 = vmul.f32 %v2912, %v3281
        %v3290 = vmul.f32 %v2913, %v3281
        %v3291 = vmul.f32 %v2915, %v3281
        %v3292 = vmul.f32 %v2916, %v3281
        %v3293 = vmul.f32 %v2917, %v3281
        %v3294 = vmul.f32 %v2919, %v3281
        %v3295 = vmul.f32 %v2920, %v3281
        %v3296 = vmul.f32 %v2921, %v3281
        %v3297 = vmul.f32 %v2923, %v3281
        %v3298 = vmul.f32 %v2924, %v3281
        %v3299 = vmul.f32 %v2925, %v3281
        %v3300 = vmul.f32 %v2927, %v3281
        %v3301 = vmul.f32 %v2928, %v3281
        %v3302 = vmul.f32 %v2929, %v3281
        %v3303 = vmul.f32 %v2931, %v3281
        %v3304 = vmul.f32 %v2932, %v3281
        %v3305 = vmul.f32 %v2933, %v3281
        %v3306 = vmul.f32 %v2935, %v3281
        %v3307 = vmul.f32 %v2936, %v3281
        %v3308 = vmul.f32 %v2937, %v3281
        %v3309 = vmul.f32 %v2939, %v3281
        %v3310 = vmul.f32 %v2940, %v3281
        %v3311 = vmul.f32 %v2941, %v3281
        %v3312 = vmul.f32 %v2943, %v3281
        %v3313 = vmul.f32 %v2944, %v3281
        %v3314 = vmul.f32 %v2945, %v3281
        %v3315 = vmul.f32 %v2947, %v3281
        %v3316 = vmul.f32 %v2948, %v3281
        %v3317 = vmul.f32 %v2949, %v3281
        %v3318 = vmul.f32 %v2951, %v3281
        %v3319 = vmul.f32 %v2952, %v3281
        %v3320 = vmul.f32 %v2953, %v3281
        %v3321 = vmul.f32 %v2955, %v3281
        %v3322 = vmul.f32 %v2956, %v3281
        %v3323 = vmul.f32 %v2957, %v3281
        %v3324 = vmul.f32 %v2959, %v3281
        %v3325 = vmul.f32 %v2960, %v3281
        %v3326 = vmul.f32 %v2961, %v3281
        %v3327 = vmul.f32 %v2963, %v3281
        %v3328 = vmul.f32 %v2964, %v3281
        %v3329 = vmul.f32 %v2965, %v3281
        %v3378 = vrot.slane %v3282, 2
        %v3379 = vrot.slane %v3283, 2
        %v3380 = vsel %vm956, %v3378, %v3379
        %v3381 = vrot.slane %v3284, 2
        %v3382 = vsel %vm956, %v3379, %v3381
        %v3383 = vrot.slane %v3285, 2
        %v3384 = vrot.slane %v3286, 2
        %v3385 = vsel %vm956, %v3383, %v3384
        %v3386 = vrot.slane %v3287, 2
        %v3387 = vsel %vm956, %v3384, %v3386
        %v3388 = vrot.slane %v3288, 2
        %v3389 = vrot.slane %v3289, 2
        %v3390 = vsel %vm956, %v3388, %v3389
        %v3391 = vrot.slane %v3290, 2
        %v3392 = vsel %vm956, %v3389, %v3391
        %v3393 = vrot.slane %v3291, 2
        %v3394 = vrot.slane %v3292, 2
        %v3395 = vsel %vm956, %v3393, %v3394
        %v3396 = vrot.slane %v3293, 2
        %v3397 = vsel %vm956, %v3394, %v3396
        %v3398 = vrot.slane %v3294, 2
        %v3399 = vrot.slane %v3295, 2
        %v3400 = vsel %vm956, %v3398, %v3399
        %v3401 = vrot.slane %v3296, 2
        %v3402 = vsel %vm956, %v3399, %v3401
        %v3403 = vrot.slane %v3297, 2
        %v3404 = vrot.slane %v3298, 2
        %v3405 = vsel %vm956, %v3403, %v3404
        %v3406 = vrot.slane %v3299, 2
        %v3407 = vsel %vm956, %v3404, %v3406
        %v3408 = vrot.slane %v3300, 2
        %v3409 = vrot.slane %v3301, 2
        %v3410 = vsel %vm956, %v3408, %v3409
        %v3411 = vrot.slane %v3302, 2
        %v3412 = vsel %vm956, %v3409, %v3411
        %v3413 = vrot.slane %v3303, 2
        %v3414 = vrot.slane %v3304, 2
        %v3415 = vsel %vm956, %v3413, %v3414
        %v3416 = vrot.slane %v3305, 2
        %v3417 = vsel %vm956, %v3414, %v3416
        %v3418 = vrot.slane %v3306, 2
        %v3419 = vrot.slane %v3307, 2
        %v3420 = vsel %vm956, %v3418, %v3419
        %v3421 = vrot.slane %v3308, 2
        %v3422 = vsel %vm956, %v3419, %v3421
        %v3423 = vrot.slane %v3309, 2
        %v3424 = vrot.slane %v3310, 2
        %v3425 = vsel %vm956, %v3423, %v3424
        %v3426 = vrot.slane %v3311, 2
        %v3427 = vsel %vm956, %v3424, %v3426
        %v3428 = vrot.slane %v3312, 2
        %v3429 = vrot.slane %v3313, 2
        %v3430 = vsel %vm956, %v3428, %v3429
        %v3431 = vrot.slane %v3314, 2
        %v3432 = vsel %vm956, %v3429, %v3431
        %v3433 = vrot.slane %v3315, 2
        %v3434 = vrot.slane %v3316, 2
        %v3435 = vsel %vm956, %v3433, %v3434
        %v3436 = vrot.slane %v3317, 2
        %v3437 = vsel %vm956, %v3434, %v3436
        %v3438 = vrot.slane %v3318, 2
        %v3439 = vrot.slane %v3319, 2
        %v3440 = vsel %vm956, %v3438, %v3439
        %v3441 = vrot.slane %v3320, 2
        %v3442 = vsel %vm956, %v3439, %v3441
        %v3443 = vrot.slane %v3321, 2
        %v3444 = vrot.slane %v3322, 2
        %v3445 = vsel %vm956, %v3443, %v3444
        %v3446 = vrot.slane %v3323, 2
        %v3447 = vsel %vm956, %v3444, %v3446
        %v3448 = vrot.slane %v3324, 2
        %v3449 = vrot.slane %v3325, 2
        %v3450 = vsel %vm956, %v3448, %v3449
        %v3451 = vrot.slane %v3326, 2
        %v3452 = vsel %vm956, %v3449, %v3451
        %v3453 = vrot.slane %v3327, 2
        %v3454 = vrot.slane %v3328, 2
        %v3455 = vsel %vm956, %v3453, %v3454
        %v3456 = vrot.slane %v3329, 2
        %v3457 = vsel %vm956, %v3454, %v3456
        %v3506 = vadd.f32 %v3230, %v3378
        %v3507 = vadd.f32 %v3231, %v3380
        %v3508 = vadd.f32 %v3232, %v3382
        %v3509 = vadd.f32 %v3233, %v3383
        %v3510 = vadd.f32 %v3234, %v3385
        %v3511 = vadd.f32 %v3235, %v3387
        %v3512 = vadd.f32 %v3236, %v3388
        %v3513 = vadd.f32 %v3237, %v3390
        %v3514 = vadd.f32 %v3238, %v3392
        %v3515 = vadd.f32 %v3239, %v3393
        %v3516 = vadd.f32 %v3240, %v3395
        %v3517 = vadd.f32 %v3241, %v3397
        %v3518 = vadd.f32 %v3242, %v3398
        %v3519 = vadd.f32 %v3243, %v3400
        %v3520 = vadd.f32 %v3244, %v3402
        %v3521 = vadd.f32 %v3245, %v3403
        %v3522 = vadd.f32 %v3246, %v3405
        %v3523 = vadd.f32 %v3247, %v3407
        %v3524 = vadd.f32 %v3248, %v3408
        %v3525 = vadd.f32 %v3249, %v3410
        %v3526 = vadd.f32 %v3250, %v3412
        %v3527 = vadd.f32 %v3251, %v3413
        %v3528 = vadd.f32 %v3252, %v3415
        %v3529 = vadd.f32 %v3253, %v3417
        %v3530 = vadd.f32 %v3254, %v3418
        %v3531 = vadd.f32 %v3255, %v3420
        %v3532 = vadd.f32 %v3256, %v3422
        %v3533 = vadd.f32 %v3257, %v3423
        %v3534 = vadd.f32 %v3258, %v3425
        %v3535 = vadd.f32 %v3259, %v3427
        %v3536 = vadd.f32 %v3260, %v3428
        %v3537 = vadd.f32 %v3261, %v3430
        %v3538 = vadd.f32 %v3262, %v3432
        %v3539 = vadd.f32 %v3263, %v3433
        %v3540 = vadd.f32 %v3264, %v3435
        %v3541 = vadd.f32 %v3265, %v3437
        %v3542 = vadd.f32 %v3266, %v3438
        %v3543 = vadd.f32 %v3267, %v3440
        %v3544 = vadd.f32 %v3268, %v3442
        %v3545 = vadd.f32 %v3269, %v3443
        %v3546 = vadd.f32 %v3270, %v3445
        %v3547 = vadd.f32 %v3271, %v3447
        %v3548 = vadd.f32 %v3272, %v3448
        %v3549 = vadd.f32 %v3273, %v3450
        %v3550 = vadd.f32 %v3274, %v3452
        %v3551 = vadd.f32 %v3275, %v3453
        %v3552 = vadd.f32 %v3276, %v3455
        %v3553 = vadd.f32 %v3277, %v3457
        %v3554 = vld [vmem:[%s443] sm:$0xff]
        %v3555 = vld [vmem:[%s443 + $0x8] sm:$0xff]
        %v3556 = vld [vmem:[%s443 + $0x10] sm:$0xff]
        %v3557 = vld [vmem:[%s443 + $0x18] sm:$0xff]
        %v3558 = vld [vmem:[%s443 + $0x20] sm:$0xff]
        %v3559 = vld [vmem:[%s443 + $0x28] sm:$0xff]
        %v3560 = vld [vmem:[%s443 + $0x30] sm:$0xff]
        %v3561 = vld [vmem:[%s443 + $0x38] sm:$0xff]
        %v3562 = vld [vmem:[%s443 + $0x40] sm:$0xff]
        %v3563 = vld [vmem:[%s443 + $0x48] sm:$0xff]
        %v3564 = vld [vmem:[%s443 + $0x50] sm:$0xff]
        %v3565 = vld [vmem:[%s443 + $0x58] sm:$0xff]
        %v3566 = vld [vmem:[%s443 + $0x60] sm:$0xff]
        %v3567 = vld [vmem:[%s443 + $0x68] sm:$0xff]
        %v3568 = vld [vmem:[%s443 + $0x70] sm:$0xff]
        %v3569 = vld [vmem:[%s443 + $0x78] sm:$0xff]
        %v3570 = vld [vmem:[%s443 + $0x80] sm:$0xff]
        %v3571 = vld [vmem:[%s443 + $0x88] sm:$0xff]
        %v3572 = vld [vmem:[%s443 + $0x90] sm:$0xff]
        %v3573 = vld [vmem:[%s443 + $0x98] sm:$0xff]
        %v3574 = vld [vmem:[%s443 + $0xa0] sm:$0xff]
        %v3575 = vld [vmem:[%s443 + $0xa8] sm:$0xff]
        %v3576 = vld [vmem:[%s443 + $0xb0] sm:$0xff]
        %v3577 = vld [vmem:[%s443 + $0xb8] sm:$0xff]
        %v3578 = vld [vmem:[%s443 + $0xc0] sm:$0xff]
        %v3579 = vld [vmem:[%s443 + $0xc8] sm:$0xff]
        %v3580 = vld [vmem:[%s443 + $0xd0] sm:$0xff]
        %v3581 = vld [vmem:[%s443 + $0xd8] sm:$0xff]
        %v3582 = vld [vmem:[%s443 + $0xe0] sm:$0xff]
        %v3583 = vld [vmem:[%s443 + $0xe8] sm:$0xff]
        %v3584 = vld [vmem:[%s443 + $0xf0] sm:$0xff]
        %v3585 = vld [vmem:[%s443 + $0xf8] sm:$0xff]
        %v3586 = vld [vmem:[%s443 + $0x100] sm:$0xff]
        %v3587 = vld [vmem:[%s443 + $0x108] sm:$0xff]
        %v3588 = vld [vmem:[%s443 + $0x110] sm:$0xff]
        %v3589 = vld [vmem:[%s443 + $0x118] sm:$0xff]
        %v3590 = vld [vmem:[%s443 + $0x120] sm:$0xff]
        %v3591 = vld [vmem:[%s443 + $0x128] sm:$0xff]
        %v3592 = vld [vmem:[%s443 + $0x130] sm:$0xff]
        %v3593 = vld [vmem:[%s443 + $0x138] sm:$0xff]
        %v3594 = vld [vmem:[%s443 + $0x140] sm:$0xff]
        %v3595 = vld [vmem:[%s443 + $0x148] sm:$0xff]
        %v3596 = vld [vmem:[%s443 + $0x150] sm:$0xff]
        %v3597 = vld [vmem:[%s443 + $0x158] sm:$0xff]
        %v3598 = vld [vmem:[%s443 + $0x160] sm:$0xff]
        %v3599 = vld [vmem:[%s443 + $0x168] sm:$0xff]
        %v3600 = vld [vmem:[%s443 + $0x170] sm:$0xff]
        %v3601 = vld [vmem:[%s443 + $0x178] sm:$0xff]
        %v3602 = vld [vmem:[%s443 + $0x180] sm:$0xff]
        %v3603 = vld [vmem:[%s443 + $0x188] sm:$0xff]
        %v3604 = vld [vmem:[%s443 + $0x190] sm:$0xff]
        %v3605 = vld [vmem:[%s443 + $0x198] sm:$0xff]
        %v3606 = vld [vmem:[%s443 + $0x1a0] sm:$0xff]
        %v3607 = vld [vmem:[%s443 + $0x1a8] sm:$0xff]
        %v3608 = vld [vmem:[%s443 + $0x1b0] sm:$0xff]
        %v3609 = vld [vmem:[%s443 + $0x1b8] sm:$0xff]
        %v3610 = vld [vmem:[%s443 + $0x1c0] sm:$0xff]
        %v3611 = vld [vmem:[%s443 + $0x1c8] sm:$0xff]
        %v3612 = vld [vmem:[%s443 + $0x1d0] sm:$0xff]
        %v3613 = vld [vmem:[%s443 + $0x1d8] sm:$0xff]
        %v3614 = vld [vmem:[%s443 + $0x1e0] sm:$0xff]
        %v3615 = vld [vmem:[%s443 + $0x1e8] sm:$0xff]
        %v3616 = vld [vmem:[%s443 + $0x1f0] sm:$0xff]
        %v3617 = vld [vmem:[%s443 + $0x1f8] sm:$0xff]
        %v3618 = vlaneseq
        %v3619 = vshrl.u32 %v3618, 7
        %v3620 = vsub.s32 3, %v3619
        %v3621 = vrot.slane %v2900, %v3620
        %v3622 = vmul.f32 %v3554, %v3621
        %v3623 = vmul.f32 %v3555, %v3621
        %v3624 = vmul.f32 %v3556, %v3621
        %v3625 = vmul.f32 %v3558, %v3621
        %v3626 = vmul.f32 %v3559, %v3621
        %v3627 = vmul.f32 %v3560, %v3621
        %v3628 = vmul.f32 %v3562, %v3621
        %v3629 = vmul.f32 %v3563, %v3621
        %v3630 = vmul.f32 %v3564, %v3621
        %v3631 = vmul.f32 %v3566, %v3621
        %v3632 = vmul.f32 %v3567, %v3621
        %v3633 = vmul.f32 %v3568, %v3621
        %v3634 = vmul.f32 %v3570, %v3621
        %v3635 = vmul.f32 %v3571, %v3621
        %v3636 = vmul.f32 %v3572, %v3621
        %v3637 = vmul.f32 %v3574, %v3621
        %v3638 = vmul.f32 %v3575, %v3621
        %v3639 = vmul.f32 %v3576, %v3621
        %v3640 = vmul.f32 %v3578, %v3621
        %v3641 = vmul.f32 %v3579, %v3621
        %v3642 = vmul.f32 %v3580, %v3621
        %v3643 = vmul.f32 %v3582, %v3621
        %v3644 = vmul.f32 %v3583, %v3621
        %v3645 = vmul.f32 %v3584, %v3621
        %v3646 = vmul.f32 %v3586, %v3621
        %v3647 = vmul.f32 %v3587, %v3621
        %v3648 = vmul.f32 %v3588, %v3621
        %v3649 = vmul.f32 %v3590, %v3621
        %v3650 = vmul.f32 %v3591, %v3621
        %v3651 = vmul.f32 %v3592, %v3621
        %v3652 = vmul.f32 %v3594, %v3621
        %v3653 = vmul.f32 %v3595, %v3621
        %v3654 = vmul.f32 %v3596, %v3621
        %v3655 = vmul.f32 %v3598, %v3621
        %v3656 = vmul.f32 %v3599, %v3621
        %v3657 = vmul.f32 %v3600, %v3621
        %v3658 = vmul.f32 %v3602, %v3621
        %v3659 = vmul.f32 %v3603, %v3621
        %v3660 = vmul.f32 %v3604, %v3621
        %v3661 = vmul.f32 %v3606, %v3621
        %v3662 = vmul.f32 %v3607, %v3621
        %v3663 = vmul.f32 %v3608, %v3621
        %v3664 = vmul.f32 %v3610, %v3621
        %v3665 = vmul.f32 %v3611, %v3621
        %v3666 = vmul.f32 %v3612, %v3621
        %v3667 = vmul.f32 %v3614, %v3621
        %v3668 = vmul.f32 %v3615, %v3621
        %v3669 = vmul.f32 %v3616, %v3621
        %v3670 = vadd.f32 %v3506, %v3622
        %v3671 = vadd.f32 %v3507, %v3623
        %v3672 = vadd.f32 %v3508, %v3624
        %v3673 = vadd.f32 %v3509, %v3625
        %v3674 = vadd.f32 %v3510, %v3626
        %v3675 = vadd.f32 %v3511, %v3627
        %v3676 = vadd.f32 %v3512, %v3628
        %v3677 = vadd.f32 %v3513, %v3629
        %v3678 = vadd.f32 %v3514, %v3630
        %v3679 = vadd.f32 %v3515, %v3631
        %v3680 = vadd.f32 %v3516, %v3632
        %v3681 = vadd.f32 %v3517, %v3633
        %v3682 = vadd.f32 %v3518, %v3634
        %v3683 = vadd.f32 %v3519, %v3635
        %v3684 = vadd.f32 %v3520, %v3636
        %v3685 = vadd.f32 %v3521, %v3637
        %v3686 = vadd.f32 %v3522, %v3638
        %v3687 = vadd.f32 %v3523, %v3639
        %v3688 = vadd.f32 %v3524, %v3640
        %v3689 = vadd.f32 %v3525, %v3641
        %v3690 = vadd.f32 %v3526, %v3642
        %v3691 = vadd.f32 %v3527, %v3643
        %v3692 = vadd.f32 %v3528, %v3644
        %v3693 = vadd.f32 %v3529, %v3645
        %v3694 = vadd.f32 %v3530, %v3646
        %v3695 = vadd.f32 %v3531, %v3647
        %v3696 = vadd.f32 %v3532, %v3648
        %v3697 = vadd.f32 %v3533, %v3649
        %v3698 = vadd.f32 %v3534, %v3650
        %v3699 = vadd.f32 %v3535, %v3651
        %v3700 = vadd.f32 %v3536, %v3652
        %v3701 = vadd.f32 %v3537, %v3653
        %v3702 = vadd.f32 %v3538, %v3654
        %v3703 = vadd.f32 %v3539, %v3655
        %v3704 = vadd.f32 %v3540, %v3656
        %v3705 = vadd.f32 %v3541, %v3657
        %v3706 = vadd.f32 %v3542, %v3658
        %v3707 = vadd.f32 %v3543, %v3659
        %v3708 = vadd.f32 %v3544, %v3660
        %v3709 = vadd.f32 %v3545, %v3661
        %v3710 = vadd.f32 %v3546, %v3662
        %v3711 = vadd.f32 %v3547, %v3663
        %v3712 = vadd.f32 %v3548, %v3664
        %v3713 = vadd.f32 %v3549, %v3665
        %v3714 = vadd.f32 %v3550, %v3666
        %v3715 = vadd.f32 %v3551, %v3667
        %v3716 = vadd.f32 %v3552, %v3668
        %v3717 = vadd.f32 %v3553, %v3669
        %v3718 = vlaneseq
        %v3719 = vshrl.u32 %v3718, 7
        %v3720 = vsub.s32 4, %v3719
        %v3721 = vrot.slane %v2900, %v3720
        %v3722 = vmul.f32 %v3555, %v3721
        %v3723 = vmul.f32 %v3556, %v3721
        %v3724 = vmul.f32 %v3559, %v3721
        %v3725 = vmul.f32 %v3560, %v3721
        %v3726 = vmul.f32 %v3563, %v3721
        %v3727 = vmul.f32 %v3564, %v3721
        %v3728 = vmul.f32 %v3567, %v3721
        %v3729 = vmul.f32 %v3568, %v3721
        %v3730 = vmul.f32 %v3571, %v3721
        %v3731 = vmul.f32 %v3572, %v3721
        %v3732 = vmul.f32 %v3575, %v3721
        %v3733 = vmul.f32 %v3576, %v3721
        %v3734 = vmul.f32 %v3579, %v3721
        %v3735 = vmul.f32 %v3580, %v3721
        %v3736 = vmul.f32 %v3583, %v3721
        %v3737 = vmul.f32 %v3584, %v3721
        %v3738 = vmul.f32 %v3587, %v3721
        %v3739 = vmul.f32 %v3588, %v3721
        %v3740 = vmul.f32 %v3591, %v3721
        %v3741 = vmul.f32 %v3592, %v3721
        %v3742 = vmul.f32 %v3595, %v3721
        %v3743 = vmul.f32 %v3596, %v3721
        %v3744 = vmul.f32 %v3599, %v3721
        %v3745 = vmul.f32 %v3600, %v3721
        %v3746 = vmul.f32 %v3603, %v3721
        %v3747 = vmul.f32 %v3604, %v3721
        %v3748 = vmul.f32 %v3607, %v3721
        %v3749 = vmul.f32 %v3608, %v3721
        %v3750 = vmul.f32 %v3611, %v3721
        %v3751 = vmul.f32 %v3612, %v3721
        %v3752 = vmul.f32 %v3615, %v3721
        %v3753 = vmul.f32 %v3616, %v3721
        %v3786 = vrot.slane %v3722, 1
        %v3787 = vrot.slane %v3723, 1
        %v3788 = vsel %vm711, %v3786, %v3787
        %v3789 = vrot.slane %v3724, 1
        %v3790 = vrot.slane %v3725, 1
        %v3791 = vsel %vm711, %v3789, %v3790
        %v3792 = vrot.slane %v3726, 1
        %v3793 = vrot.slane %v3727, 1
        %v3794 = vsel %vm711, %v3792, %v3793
        %v3795 = vrot.slane %v3728, 1
        %v3796 = vrot.slane %v3729, 1
        %v3797 = vsel %vm711, %v3795, %v3796
        %v3798 = vrot.slane %v3730, 1
        %v3799 = vrot.slane %v3731, 1
        %v3800 = vsel %vm711, %v3798, %v3799
        %v3801 = vrot.slane %v3732, 1
        %v3802 = vrot.slane %v3733, 1
        %v3803 = vsel %vm711, %v3801, %v3802
        %v3804 = vrot.slane %v3734, 1
        %v3805 = vrot.slane %v3735, 1
        %v3806 = vsel %vm711, %v3804, %v3805
        %v3807 = vrot.slane %v3736, 1
        %v3808 = vrot.slane %v3737, 1
        %v3809 = vsel %vm711, %v3807, %v3808
        %v3810 = vrot.slane %v3738, 1
        %v3811 = vrot.slane %v3739, 1
        %v3812 = vsel %vm711, %v3810, %v3811
        %v3813 = vrot.slane %v3740, 1
        %v3814 = vrot.slane %v3741, 1
        %v3815 = vsel %vm711, %v3813, %v3814
        %v3816 = vrot.slane %v3742, 1
        %v3817 = vrot.slane %v3743, 1
        %v3818 = vsel %vm711, %v3816, %v3817
        %v3819 = vrot.slane %v3744, 1
        %v3820 = vrot.slane %v3745, 1
        %v3821 = vsel %vm711, %v3819, %v3820
        %v3822 = vrot.slane %v3746, 1
        %v3823 = vrot.slane %v3747, 1
        %v3824 = vsel %vm711, %v3822, %v3823
        %v3825 = vrot.slane %v3748, 1
        %v3826 = vrot.slane %v3749, 1
        %v3827 = vsel %vm711, %v3825, %v3826
        %v3828 = vrot.slane %v3750, 1
        %v3829 = vrot.slane %v3751, 1
        %v3830 = vsel %vm711, %v3828, %v3829
        %v3831 = vrot.slane %v3752, 1
        %v3832 = vrot.slane %v3753, 1
        %v3833 = vsel %vm711, %v3831, %v3832
        %v3882 = vadd.f32 %v3670, %v3786
        %v3883 = vadd.f32 %v3671, %v3788
        %v3884 = vadd.f32 %v3672, %v3787
        %v3885 = vadd.f32 %v3673, %v3789
        %v3886 = vadd.f32 %v3674, %v3791
        %v3887 = vadd.f32 %v3675, %v3790
        %v3888 = vadd.f32 %v3676, %v3792
        %v3889 = vadd.f32 %v3677, %v3794
        %v3890 = vadd.f32 %v3678, %v3793
        %v3891 = vadd.f32 %v3679, %v3795
        %v3892 = vadd.f32 %v3680, %v3797
        %v3893 = vadd.f32 %v3681, %v3796
        %v3894 = vadd.f32 %v3682, %v3798
        %v3895 = vadd.f32 %v3683, %v3800
        %v3896 = vadd.f32 %v3684, %v3799
        %v3897 = vadd.f32 %v3685, %v3801
        %v3898 = vadd.f32 %v3686, %v3803
        %v3899 = vadd.f32 %v3687, %v3802
        %v3900 = vadd.f32 %v3688, %v3804
        %v3901 = vadd.f32 %v3689, %v3806
        %v3902 = vadd.f32 %v3690, %v3805
        %v3903 = vadd.f32 %v3691, %v3807
        %v3904 = vadd.f32 %v3692, %v3809
        %v3905 = vadd.f32 %v3693, %v3808
        %v3906 = vadd.f32 %v3694, %v3810
        %v3907 = vadd.f32 %v3695, %v3812
        %v3908 = vadd.f32 %v3696, %v3811
        %v3909 = vadd.f32 %v3697, %v3813
        %v3910 = vadd.f32 %v3698, %v3815
        %v3911 = vadd.f32 %v3699, %v3814
        %v3912 = vadd.f32 %v3700, %v3816
        %v3913 = vadd.f32 %v3701, %v3818
        %v3914 = vadd.f32 %v3702, %v3817
        %v3915 = vadd.f32 %v3703, %v3819
        %v3916 = vadd.f32 %v3704, %v3821
        %v3917 = vadd.f32 %v3705, %v3820
        %v3918 = vadd.f32 %v3706, %v3822
        %v3919 = vadd.f32 %v3707, %v3824
        %v3920 = vadd.f32 %v3708, %v3823
        %v3921 = vadd.f32 %v3709, %v3825
        %v3922 = vadd.f32 %v3710, %v3827
        %v3923 = vadd.f32 %v3711, %v3826
        %v3924 = vadd.f32 %v3712, %v3828
        %v3925 = vadd.f32 %v3713, %v3830
        %v3926 = vadd.f32 %v3714, %v3829
        %v3927 = vadd.f32 %v3715, %v3831
        %v3928 = vadd.f32 %v3716, %v3833
        %v3929 = vadd.f32 %v3717, %v3832
        %v3930 = vlaneseq
        %v3931 = vshrl.u32 %v3930, 7
        %v3932 = vsub.s32 5, %v3931
        %v3933 = vrot.slane %v2900, %v3932
        %v3934 = vmul.f32 %v3555, %v3933
        %v3935 = vmul.f32 %v3556, %v3933
        %v3936 = vmul.f32 %v3557, %v3933
        %v3937 = vmul.f32 %v3559, %v3933
        %v3938 = vmul.f32 %v3560, %v3933
        %v3939 = vmul.f32 %v3561, %v3933
        %v3940 = vmul.f32 %v3563, %v3933
        %v3941 = vmul.f32 %v3564, %v3933
        %v3942 = vmul.f32 %v3565, %v3933
        %v3943 = vmul.f32 %v3567, %v3933
        %v3944 = vmul.f32 %v3568, %v3933
        %v3945 = vmul.f32 %v3569, %v3933
        %v3946 = vmul.f32 %v3571, %v3933
        %v3947 = vmul.f32 %v3572, %v3933
        %v3948 = vmul.f32 %v3573, %v3933
        %v3949 = vmul.f32 %v3575, %v3933
        %v3950 = vmul.f32 %v3576, %v3933
        %v3951 = vmul.f32 %v3577, %v3933
        %v3952 = vmul.f32 %v3579, %v3933
        %v3953 = vmul.f32 %v3580, %v3933
        %v3954 = vmul.f32 %v3581, %v3933
        %v3955 = vmul.f32 %v3583, %v3933
        %v3956 = vmul.f32 %v3584, %v3933
        %v3957 = vmul.f32 %v3585, %v3933
        %v3958 = vmul.f32 %v3587, %v3933
        %v3959 = vmul.f32 %v3588, %v3933
        %v3960 = vmul.f32 %v3589, %v3933
        %v3961 = vmul.f32 %v3591, %v3933
        %v3962 = vmul.f32 %v3592, %v3933
        %v3963 = vmul.f32 %v3593, %v3933
        %v3964 = vmul.f32 %v3595, %v3933
        %v3965 = vmul.f32 %v3596, %v3933
        %v3966 = vmul.f32 %v3597, %v3933
        %v3967 = vmul.f32 %v3599, %v3933
        %v3968 = vmul.f32 %v3600, %v3933
        %v3969 = vmul.f32 %v3601, %v3933
        %v3970 = vmul.f32 %v3603, %v3933
        %v3971 = vmul.f32 %v3604, %v3933
        %v3972 = vmul.f32 %v3605, %v3933
        %v3973 = vmul.f32 %v3607, %v3933
        %v3974 = vmul.f32 %v3608, %v3933
        %v3975 = vmul.f32 %v3609, %v3933
        %v3976 = vmul.f32 %v3611, %v3933
        %v3977 = vmul.f32 %v3612, %v3933
        %v3978 = vmul.f32 %v3613, %v3933
        %v3979 = vmul.f32 %v3615, %v3933
        %v3980 = vmul.f32 %v3616, %v3933
        %v3981 = vmul.f32 %v3617, %v3933
        %v4030 = vrot.slane %v3934, 2
        %v4031 = vrot.slane %v3935, 2
        %v4032 = vsel %vm956, %v4030, %v4031
        %v4033 = vrot.slane %v3936, 2
        %v4034 = vsel %vm956, %v4031, %v4033
        %v4035 = vrot.slane %v3937, 2
        %v4036 = vrot.slane %v3938, 2
        %v4037 = vsel %vm956, %v4035, %v4036
        %v4038 = vrot.slane %v3939, 2
        %v4039 = vsel %vm956, %v4036, %v4038
        %v4040 = vrot.slane %v3940, 2
        %v4041 = vrot.slane %v3941, 2
        %v4042 = vsel %vm956, %v4040, %v4041
        %v4043 = vrot.slane %v3942, 2
        %v4044 = vsel %vm956, %v4041, %v4043
        %v4045 = vrot.slane %v3943, 2
        %v4046 = vrot.slane %v3944, 2
        %v4047 = vsel %vm956, %v4045, %v4046
        %v4048 = vrot.slane %v3945, 2
        %v4049 = vsel %vm956, %v4046, %v4048
        %v4050 = vrot.slane %v3946, 2
        %v4051 = vrot.slane %v3947, 2
        %v4052 = vsel %vm956, %v4050, %v4051
        %v4053 = vrot.slane %v3948, 2
        %v4054 = vsel %vm956, %v4051, %v4053
        %v4055 = vrot.slane %v3949, 2
        %v4056 = vrot.slane %v3950, 2
        %v4057 = vsel %vm956, %v4055, %v4056
        %v4058 = vrot.slane %v3951, 2
        %v4059 = vsel %vm956, %v4056, %v4058
        %v4060 = vrot.slane %v3952, 2
        %v4061 = vrot.slane %v3953, 2
        %v4062 = vsel %vm956, %v4060, %v4061
        %v4063 = vrot.slane %v3954, 2
        %v4064 = vsel %vm956, %v4061, %v4063
        %v4065 = vrot.slane %v3955, 2
        %v4066 = vrot.slane %v3956, 2
        %v4067 = vsel %vm956, %v4065, %v4066
        %v4068 = vrot.slane %v3957, 2
        %v4069 = vsel %vm956, %v4066, %v4068
        %v4070 = vrot.slane %v3958, 2
        %v4071 = vrot.slane %v3959, 2
        %v4072 = vsel %vm956, %v4070, %v4071
        %v4073 = vrot.slane %v3960, 2
        %v4074 = vsel %vm956, %v4071, %v4073
        %v4075 = vrot.slane %v3961, 2
        %v4076 = vrot.slane %v3962, 2
        %v4077 = vsel %vm956, %v4075, %v4076
        %v4078 = vrot.slane %v3963, 2
        %v4079 = vsel %vm956, %v4076, %v4078
        %v4080 = vrot.slane %v3964, 2
        %v4081 = vrot.slane %v3965, 2
        %v4082 = vsel %vm956, %v4080, %v4081
        %v4083 = vrot.slane %v3966, 2
        %v4084 = vsel %vm956, %v4081, %v4083
        %v4085 = vrot.slane %v3967, 2
        %v4086 = vrot.slane %v3968, 2
        %v4087 = vsel %vm956, %v4085, %v4086
        %v4088 = vrot.slane %v3969, 2
        %v4089 = vsel %vm956, %v4086, %v4088
        %v4090 = vrot.slane %v3970, 2
        %v4091 = vrot.slane %v3971, 2
        %v4092 = vsel %vm956, %v4090, %v4091
        %v4093 = vrot.slane %v3972, 2
        %v4094 = vsel %vm956, %v4091, %v4093
        %v4095 = vrot.slane %v3973, 2
        %v4096 = vrot.slane %v3974, 2
        %v4097 = vsel %vm956, %v4095, %v4096
        %v4098 = vrot.slane %v3975, 2
        %v4099 = vsel %vm956, %v4096, %v4098
        %v4100 = vrot.slane %v3976, 2
        %v4101 = vrot.slane %v3977, 2
        %v4102 = vsel %vm956, %v4100, %v4101
        %v4103 = vrot.slane %v3978, 2
        %v4104 = vsel %vm956, %v4101, %v4103
        %v4105 = vrot.slane %v3979, 2
        %v4106 = vrot.slane %v3980, 2
        %v4107 = vsel %vm956, %v4105, %v4106
        %v4108 = vrot.slane %v3981, 2
        %v4109 = vsel %vm956, %v4106, %v4108
        %v4158 = vadd.f32 %v3882, %v4030
        %v4159 = vadd.f32 %v3883, %v4032
        %v4160 = vadd.f32 %v3884, %v4034
        %v4161 = vadd.f32 %v3885, %v4035
        %v4162 = vadd.f32 %v3886, %v4037
        %v4163 = vadd.f32 %v3887, %v4039
        %v4164 = vadd.f32 %v3888, %v4040
        %v4165 = vadd.f32 %v3889, %v4042
        %v4166 = vadd.f32 %v3890, %v4044
        %v4167 = vadd.f32 %v3891, %v4045
        %v4168 = vadd.f32 %v3892, %v4047
        %v4169 = vadd.f32 %v3893, %v4049
        %v4170 = vadd.f32 %v3894, %v4050
        %v4171 = vadd.f32 %v3895, %v4052
        %v4172 = vadd.f32 %v3896, %v4054
        %v4173 = vadd.f32 %v3897, %v4055
        %v4174 = vadd.f32 %v3898, %v4057
        %v4175 = vadd.f32 %v3899, %v4059
        %v4176 = vadd.f32 %v3900, %v4060
        %v4177 = vadd.f32 %v3901, %v4062
        %v4178 = vadd.f32 %v3902, %v4064
        %v4179 = vadd.f32 %v3903, %v4065
        %v4180 = vadd.f32 %v3904, %v4067
        %v4181 = vadd.f32 %v3905, %v4069
        %v4182 = vadd.f32 %v3906, %v4070
        %v4183 = vadd.f32 %v3907, %v4072
        %v4184 = vadd.f32 %v3908, %v4074
        %v4185 = vadd.f32 %v3909, %v4075
        %v4186 = vadd.f32 %v3910, %v4077
        %v4187 = vadd.f32 %v3911, %v4079
        %v4188 = vadd.f32 %v3912, %v4080
        %v4189 = vadd.f32 %v3913, %v4082
        %v4190 = vadd.f32 %v3914, %v4084
        %v4191 = vadd.f32 %v3915, %v4085
        %v4192 = vadd.f32 %v3916, %v4087
        %v4193 = vadd.f32 %v3917, %v4089
        %v4194 = vadd.f32 %v3918, %v4090
        %v4195 = vadd.f32 %v3919, %v4092
        %v4196 = vadd.f32 %v3920, %v4094
        %v4197 = vadd.f32 %v3921, %v4095
        %v4198 = vadd.f32 %v3922, %v4097
        %v4199 = vadd.f32 %v3923, %v4099
        %v4200 = vadd.f32 %v3924, %v4100
        %v4201 = vadd.f32 %v3925, %v4102
        %v4202 = vadd.f32 %v3926, %v4104
        %v4203 = vadd.f32 %v3927, %v4105
        %v4204 = vadd.f32 %v3928, %v4107
        %v4205 = vadd.f32 %v3929, %v4109
        %v4206 = vld [vmem:[%s1785] sm:$0xff]
        %v4207 = vld [vmem:[%s1785 + $0x8] sm:$0xff]
        %v4208 = vld [vmem:[%s1785 + $0x10] sm:$0xff]
        %v4209 = vld [vmem:[%s1785 + $0x18] sm:$0xff]
        %v4210 = vld [vmem:[%s1785 + $0x20] sm:$0xff]
        %v4211 = vld [vmem:[%s1785 + $0x28] sm:$0xff]
        %v4212 = vld [vmem:[%s1785 + $0x30] sm:$0xff]
        %v4213 = vld [vmem:[%s1785 + $0x38] sm:$0xff]
        %v4214 = vld [vmem:[%s1785 + $0x40] sm:$0xff]
        %v4215 = vld [vmem:[%s1785 + $0x48] sm:$0xff]
        %v4216 = vld [vmem:[%s1785 + $0x50] sm:$0xff]
        %v4217 = vld [vmem:[%s1785 + $0x58] sm:$0xff]
        %v4218 = vld [vmem:[%s1785 + $0x60] sm:$0xff]
        %v4219 = vld [vmem:[%s1785 + $0x68] sm:$0xff]
        %v4220 = vld [vmem:[%s1785 + $0x70] sm:$0xff]
        %v4221 = vld [vmem:[%s1785 + $0x78] sm:$0xff]
        %v4222 = vld [vmem:[%s1785 + $0x80] sm:$0xff]
        %v4223 = vld [vmem:[%s1785 + $0x88] sm:$0xff]
        %v4224 = vld [vmem:[%s1785 + $0x90] sm:$0xff]
        %v4225 = vld [vmem:[%s1785 + $0x98] sm:$0xff]
        %v4226 = vld [vmem:[%s1785 + $0xa0] sm:$0xff]
        %v4227 = vld [vmem:[%s1785 + $0xa8] sm:$0xff]
        %v4228 = vld [vmem:[%s1785 + $0xb0] sm:$0xff]
        %v4229 = vld [vmem:[%s1785 + $0xb8] sm:$0xff]
        %v4230 = vld [vmem:[%s1785 + $0xc0] sm:$0xff]
        %v4231 = vld [vmem:[%s1785 + $0xc8] sm:$0xff]
        %v4232 = vld [vmem:[%s1785 + $0xd0] sm:$0xff]
        %v4233 = vld [vmem:[%s1785 + $0xd8] sm:$0xff]
        %v4234 = vld [vmem:[%s1785 + $0xe0] sm:$0xff]
        %v4235 = vld [vmem:[%s1785 + $0xe8] sm:$0xff]
        %v4236 = vld [vmem:[%s1785 + $0xf0] sm:$0xff]
        %v4237 = vld [vmem:[%s1785 + $0xf8] sm:$0xff]
        %v4238 = vld [vmem:[%s1785 + $0x100] sm:$0xff]
        %v4239 = vld [vmem:[%s1785 + $0x108] sm:$0xff]
        %v4240 = vld [vmem:[%s1785 + $0x110] sm:$0xff]
        %v4241 = vld [vmem:[%s1785 + $0x118] sm:$0xff]
        %v4242 = vld [vmem:[%s1785 + $0x120] sm:$0xff]
        %v4243 = vld [vmem:[%s1785 + $0x128] sm:$0xff]
        %v4244 = vld [vmem:[%s1785 + $0x130] sm:$0xff]
        %v4245 = vld [vmem:[%s1785 + $0x138] sm:$0xff]
        %v4246 = vld [vmem:[%s1785 + $0x140] sm:$0xff]
        %v4247 = vld [vmem:[%s1785 + $0x148] sm:$0xff]
        %v4248 = vld [vmem:[%s1785 + $0x150] sm:$0xff]
        %v4249 = vld [vmem:[%s1785 + $0x158] sm:$0xff]
        %v4250 = vld [vmem:[%s1785 + $0x160] sm:$0xff]
        %v4251 = vld [vmem:[%s1785 + $0x168] sm:$0xff]
        %v4252 = vld [vmem:[%s1785 + $0x170] sm:$0xff]
        %v4253 = vld [vmem:[%s1785 + $0x178] sm:$0xff]
        %v4254 = vld [vmem:[%s1785 + $0x180] sm:$0xff]
        %v4255 = vld [vmem:[%s1785 + $0x188] sm:$0xff]
        %v4256 = vld [vmem:[%s1785 + $0x190] sm:$0xff]
        %v4257 = vld [vmem:[%s1785 + $0x198] sm:$0xff]
        %v4258 = vld [vmem:[%s1785 + $0x1a0] sm:$0xff]
        %v4259 = vld [vmem:[%s1785 + $0x1a8] sm:$0xff]
        %v4260 = vld [vmem:[%s1785 + $0x1b0] sm:$0xff]
        %v4261 = vld [vmem:[%s1785 + $0x1b8] sm:$0xff]
        %v4262 = vld [vmem:[%s1785 + $0x1c0] sm:$0xff]
        %v4263 = vld [vmem:[%s1785 + $0x1c8] sm:$0xff]
        %v4264 = vld [vmem:[%s1785 + $0x1d0] sm:$0xff]
        %v4265 = vld [vmem:[%s1785 + $0x1d8] sm:$0xff]
        %v4266 = vld [vmem:[%s1785 + $0x1e0] sm:$0xff]
        %v4267 = vld [vmem:[%s1785 + $0x1e8] sm:$0xff]
        %v4268 = vld [vmem:[%s1785 + $0x1f0] sm:$0xff]
        %v4269 = vld [vmem:[%s1785 + $0x1f8] sm:$0xff]
        %v4270 = vlaneseq
        %v4271 = vshrl.u32 %v4270, 7
        %v4272 = vsub.s32 6, %v4271
        %v4273 = vrot.slane %v2900, %v4272
        %v4274 = vmul.f32 %v4206, %v4273
        %v4275 = vmul.f32 %v4207, %v4273
        %v4276 = vmul.f32 %v4208, %v4273
        %v4277 = vmul.f32 %v4210, %v4273
        %v4278 = vmul.f32 %v4211, %v4273
        %v4279 = vmul.f32 %v4212, %v4273
        %v4280 = vmul.f32 %v4214, %v4273
        %v4281 = vmul.f32 %v4215, %v4273
        %v4282 = vmul.f32 %v4216, %v4273
        %v4283 = vmul.f32 %v4218, %v4273
        %v4284 = vmul.f32 %v4219, %v4273
        %v4285 = vmul.f32 %v4220, %v4273
        %v4286 = vmul.f32 %v4222, %v4273
        %v4287 = vmul.f32 %v4223, %v4273
        %v4288 = vmul.f32 %v4224, %v4273
        %v4289 = vmul.f32 %v4226, %v4273
        %v4290 = vmul.f32 %v4227, %v4273
        %v4291 = vmul.f32 %v4228, %v4273
        %v4292 = vmul.f32 %v4230, %v4273
        %v4293 = vmul.f32 %v4231, %v4273
        %v4294 = vmul.f32 %v4232, %v4273
        %v4295 = vmul.f32 %v4234, %v4273
        %v4296 = vmul.f32 %v4235, %v4273
        %v4297 = vmul.f32 %v4236, %v4273
        %v4298 = vmul.f32 %v4238, %v4273
        %v4299 = vmul.f32 %v4239, %v4273
        %v4300 = vmul.f32 %v4240, %v4273
        %v4301 = vmul.f32 %v4242, %v4273
        %v4302 = vmul.f32 %v4243, %v4273
        %v4303 = vmul.f32 %v4244, %v4273
        %v4304 = vmul.f32 %v4246, %v4273
        %v4305 = vmul.f32 %v4247, %v4273
        %v4306 = vmul.f32 %v4248, %v4273
        %v4307 = vmul.f32 %v4250, %v4273
        %v4308 = vmul.f32 %v4251, %v4273
        %v4309 = vmul.f32 %v4252, %v4273
        %v4310 = vmul.f32 %v4254, %v4273
        %v4311 = vmul.f32 %v4255, %v4273
        %v4312 = vmul.f32 %v4256, %v4273
        %v4313 = vmul.f32 %v4258, %v4273
        %v4314 = vmul.f32 %v4259, %v4273
        %v4315 = vmul.f32 %v4260, %v4273
        %v4316 = vmul.f32 %v4262, %v4273
        %v4317 = vmul.f32 %v4263, %v4273
        %v4318 = vmul.f32 %v4264, %v4273
        %v4319 = vmul.f32 %v4266, %v4273
        %v4320 = vmul.f32 %v4267, %v4273
        %v4321 = vmul.f32 %v4268, %v4273
        %v4322 = vadd.f32 %v4158, %v4274
        %v4323 = vadd.f32 %v4159, %v4275
        %v4324 = vadd.f32 %v4160, %v4276
        %v4325 = vadd.f32 %v4161, %v4277
        %v4326 = vadd.f32 %v4162, %v4278
        %v4327 = vadd.f32 %v4163, %v4279
        %v4328 = vadd.f32 %v4164, %v4280
        %v4329 = vadd.f32 %v4165, %v4281
        %v4330 = vadd.f32 %v4166, %v4282
        %v4331 = vadd.f32 %v4167, %v4283
        %v4332 = vadd.f32 %v4168, %v4284
        %v4333 = vadd.f32 %v4169, %v4285
        %v4334 = vadd.f32 %v4170, %v4286
        %v4335 = vadd.f32 %v4171, %v4287
        %v4336 = vadd.f32 %v4172, %v4288
        %v4337 = vadd.f32 %v4173, %v4289
        %v4338 = vadd.f32 %v4174, %v4290
        %v4339 = vadd.f32 %v4175, %v4291
        %v4340 = vadd.f32 %v4176, %v4292
        %v4341 = vadd.f32 %v4177, %v4293
        %v4342 = vadd.f32 %v4178, %v4294
        %v4343 = vadd.f32 %v4179, %v4295
        %v4344 = vadd.f32 %v4180, %v4296
        %v4345 = vadd.f32 %v4181, %v4297
        %v4346 = vadd.f32 %v4182, %v4298
        %v4347 = vadd.f32 %v4183, %v4299
        %v4348 = vadd.f32 %v4184, %v4300
        %v4349 = vadd.f32 %v4185, %v4301
        %v4350 = vadd.f32 %v4186, %v4302
        %v4351 = vadd.f32 %v4187, %v4303
        %v4352 = vadd.f32 %v4188, %v4304
        %v4353 = vadd.f32 %v4189, %v4305
        %v4354 = vadd.f32 %v4190, %v4306
        %v4355 = vadd.f32 %v4191, %v4307
        %v4356 = vadd.f32 %v4192, %v4308
        %v4357 = vadd.f32 %v4193, %v4309
        %v4358 = vadd.f32 %v4194, %v4310
        %v4359 = vadd.f32 %v4195, %v4311
        %v4360 = vadd.f32 %v4196, %v4312
        %v4361 = vadd.f32 %v4197, %v4313
        %v4362 = vadd.f32 %v4198, %v4314
        %v4363 = vadd.f32 %v4199, %v4315
        %v4364 = vadd.f32 %v4200, %v4316
        %v4365 = vadd.f32 %v4201, %v4317
        %v4366 = vadd.f32 %v4202, %v4318
        %v4367 = vadd.f32 %v4203, %v4319
        %v4368 = vadd.f32 %v4204, %v4320
        %v4369 = vadd.f32 %v4205, %v4321
        %v4370 = vlaneseq
        %v4371 = vshrl.u32 %v4370, 7
        %v4372 = vsub.s32 7, %v4371
        %v4373 = vrot.slane %v2900, %v4372
        %v4374 = vmul.f32 %v4207, %v4373
        %v4375 = vmul.f32 %v4208, %v4373
        %v4376 = vmul.f32 %v4211, %v4373
        %v4377 = vmul.f32 %v4212, %v4373
        %v4378 = vmul.f32 %v4215, %v4373
        %v4379 = vmul.f32 %v4216, %v4373
        %v4380 = vmul.f32 %v4219, %v4373
        %v4381 = vmul.f32 %v4220, %v4373
        %v4382 = vmul.f32 %v4223, %v4373
        %v4383 = vmul.f32 %v4224, %v4373
        %v4384 = vmul.f32 %v4227, %v4373
        %v4385 = vmul.f32 %v4228, %v4373
        %v4386 = vmul.f32 %v4231, %v4373
        %v4387 = vmul.f32 %v4232, %v4373
        %v4388 = vmul.f32 %v4235, %v4373
        %v4389 = vmul.f32 %v4236, %v4373
        %v4390 = vmul.f32 %v4239, %v4373
        %v4391 = vmul.f32 %v4240, %v4373
        %v4392 = vmul.f32 %v4243, %v4373
        %v4393 = vmul.f32 %v4244, %v4373
        %v4394 = vmul.f32 %v4247, %v4373
        %v4395 = vmul.f32 %v4248, %v4373
        %v4396 = vmul.f32 %v4251, %v4373
        %v4397 = vmul.f32 %v4252, %v4373
        %v4398 = vmul.f32 %v4255, %v4373
        %v4399 = vmul.f32 %v4256, %v4373
        %v4400 = vmul.f32 %v4259, %v4373
        %v4401 = vmul.f32 %v4260, %v4373
        %v4402 = vmul.f32 %v4263, %v4373
        %v4403 = vmul.f32 %v4264, %v4373
        %v4404 = vmul.f32 %v4267, %v4373
        %v4405 = vmul.f32 %v4268, %v4373
        %v4438 = vrot.slane %v4374, 1
        %v4439 = vrot.slane %v4375, 1
        %v4440 = vsel %vm711, %v4438, %v4439
        %v4441 = vrot.slane %v4376, 1
        %v4442 = vrot.slane %v4377, 1
        %v4443 = vsel %vm711, %v4441, %v4442
        %v4444 = vrot.slane %v4378, 1
        %v4445 = vrot.slane %v4379, 1
        %v4446 = vsel %vm711, %v4444, %v4445
        %v4447 = vrot.slane %v4380, 1
        %v4448 = vrot.slane %v4381, 1
        %v4449 = vsel %vm711, %v4447, %v4448
        %v4450 = vrot.slane %v4382, 1
        %v4451 = vrot.slane %v4383, 1
        %v4452 = vsel %vm711, %v4450, %v4451
        %v4453 = vrot.slane %v4384, 1
        %v4454 = vrot.slane %v4385, 1
        %v4455 = vsel %vm711, %v4453, %v4454
        %v4456 = vrot.slane %v4386, 1
        %v4457 = vrot.slane %v4387, 1
        %v4458 = vsel %vm711, %v4456, %v4457
        %v4459 = vrot.slane %v4388, 1
        %v4460 = vrot.slane %v4389, 1
        %v4461 = vsel %vm711, %v4459, %v4460
        %v4462 = vrot.slane %v4390, 1
        %v4463 = vrot.slane %v4391, 1
        %v4464 = vsel %vm711, %v4462, %v4463
        %v4465 = vrot.slane %v4392, 1
        %v4466 = vrot.slane %v4393, 1
        %v4467 = vsel %vm711, %v4465, %v4466
        %v4468 = vrot.slane %v4394, 1
        %v4469 = vrot.slane %v4395, 1
        %v4470 = vsel %vm711, %v4468, %v4469
        %v4471 = vrot.slane %v4396, 1
        %v4472 = vrot.slane %v4397, 1
        %v4473 = vsel %vm711, %v4471, %v4472
        %v4474 = vrot.slane %v4398, 1
        %v4475 = vrot.slane %v4399, 1
        %v4476 = vsel %vm711, %v4474, %v4475
        %v4477 = vrot.slane %v4400, 1
        %v4478 = vrot.slane %v4401, 1
        %v4479 = vsel %vm711, %v4477, %v4478
        %v4480 = vrot.slane %v4402, 1
        %v4481 = vrot.slane %v4403, 1
        %v4482 = vsel %vm711, %v4480, %v4481
        %v4483 = vrot.slane %v4404, 1
        %v4484 = vrot.slane %v4405, 1
        %v4485 = vsel %vm711, %v4483, %v4484
        %v4534 = vadd.f32 %v4322, %v4438
        %v4535 = vadd.f32 %v4323, %v4440
        %v4536 = vadd.f32 %v4324, %v4439
        %v4537 = vadd.f32 %v4325, %v4441
        %v4538 = vadd.f32 %v4326, %v4443
        %v4539 = vadd.f32 %v4327, %v4442
        %v4540 = vadd.f32 %v4328, %v4444
        %v4541 = vadd.f32 %v4329, %v4446
        %v4542 = vadd.f32 %v4330, %v4445
        %v4543 = vadd.f32 %v4331, %v4447
        %v4544 = vadd.f32 %v4332, %v4449
        %v4545 = vadd.f32 %v4333, %v4448
        %v4546 = vadd.f32 %v4334, %v4450
        %v4547 = vadd.f32 %v4335, %v4452
        %v4548 = vadd.f32 %v4336, %v4451
        %v4549 = vadd.f32 %v4337, %v4453
        %v4550 = vadd.f32 %v4338, %v4455
        %v4551 = vadd.f32 %v4339, %v4454
        %v4552 = vadd.f32 %v4340, %v4456
        %v4553 = vadd.f32 %v4341, %v4458
        %v4554 = vadd.f32 %v4342, %v4457
        %v4555 = vadd.f32 %v4343, %v4459
        %v4556 = vadd.f32 %v4344, %v4461
        %v4557 = vadd.f32 %v4345, %v4460
        %v4558 = vadd.f32 %v4346, %v4462
        %v4559 = vadd.f32 %v4347, %v4464
        %v4560 = vadd.f32 %v4348, %v4463
        %v4561 = vadd.f32 %v4349, %v4465
        %v4562 = vadd.f32 %v4350, %v4467
        %v4563 = vadd.f32 %v4351, %v4466
        %v4564 = vadd.f32 %v4352, %v4468
        %v4565 = vadd.f32 %v4353, %v4470
        %v4566 = vadd.f32 %v4354, %v4469
        %v4567 = vadd.f32 %v4355, %v4471
        %v4568 = vadd.f32 %v4356, %v4473
        %v4569 = vadd.f32 %v4357, %v4472
        %v4570 = vadd.f32 %v4358, %v4474
        %v4571 = vadd.f32 %v4359, %v4476
        %v4572 = vadd.f32 %v4360, %v4475
        %v4573 = vadd.f32 %v4361, %v4477
        %v4574 = vadd.f32 %v4362, %v4479
        %v4575 = vadd.f32 %v4363, %v4478
        %v4576 = vadd.f32 %v4364, %v4480
        %v4577 = vadd.f32 %v4365, %v4482
        %v4578 = vadd.f32 %v4366, %v4481
        %v4579 = vadd.f32 %v4367, %v4483
        %v4580 = vadd.f32 %v4368, %v4485
        %v4581 = vadd.f32 %v4369, %v4484
        %v4582 = vlaneseq
        %v4583 = vshrl.u32 %v4582, 7
        %v4584 = vsub.s32 0, %v4583
        %v4585 = vrot.slane %v2901, %v4584
        %v4586 = vmul.f32 %v4207, %v4585
        %v4587 = vmul.f32 %v4208, %v4585
        %v4588 = vmul.f32 %v4209, %v4585
        %v4589 = vmul.f32 %v4211, %v4585
        %v4590 = vmul.f32 %v4212, %v4585
        %v4591 = vmul.f32 %v4213, %v4585
        %v4592 = vmul.f32 %v4215, %v4585
        %v4593 = vmul.f32 %v4216, %v4585
        %v4594 = vmul.f32 %v4217, %v4585
        %v4595 = vmul.f32 %v4219, %v4585
        %v4596 = vmul.f32 %v4220, %v4585
        %v4597 = vmul.f32 %v4221, %v4585
        %v4598 = vmul.f32 %v4223, %v4585
        %v4599 = vmul.f32 %v4224, %v4585
        %v4600 = vmul.f32 %v4225, %v4585
        %v4601 = vmul.f32 %v4227, %v4585
        %v4602 = vmul.f32 %v4228, %v4585
        %v4603 = vmul.f32 %v4229, %v4585
        %v4604 = vmul.f32 %v4231, %v4585
        %v4605 = vmul.f32 %v4232, %v4585
        %v4606 = vmul.f32 %v4233, %v4585
        %v4607 = vmul.f32 %v4235, %v4585
        %v4608 = vmul.f32 %v4236, %v4585
        %v4609 = vmul.f32 %v4237, %v4585
        %v4610 = vmul.f32 %v4239, %v4585
        %v4611 = vmul.f32 %v4240, %v4585
        %v4612 = vmul.f32 %v4241, %v4585
        %v4613 = vmul.f32 %v4243, %v4585
        %v4614 = vmul.f32 %v4244, %v4585
        %v4615 = vmul.f32 %v4245, %v4585
        %v4616 = vmul.f32 %v4247, %v4585
        %v4617 = vmul.f32 %v4248, %v4585
        %v4618 = vmul.f32 %v4249, %v4585
        %v4619 = vmul.f32 %v4251, %v4585
        %v4620 = vmul.f32 %v4252, %v4585
        %v4621 = vmul.f32 %v4253, %v4585
        %v4622 = vmul.f32 %v4255, %v4585
        %v4623 = vmul.f32 %v4256, %v4585
        %v4624 = vmul.f32 %v4257, %v4585
        %v4625 = vmul.f32 %v4259, %v4585
        %v4626 = vmul.f32 %v4260, %v4585
        %v4627 = vmul.f32 %v4261, %v4585
        %v4628 = vmul.f32 %v4263, %v4585
        %v4629 = vmul.f32 %v4264, %v4585
        %v4630 = vmul.f32 %v4265, %v4585
        %v4631 = vmul.f32 %v4267, %v4585
        %v4632 = vmul.f32 %v4268, %v4585
        %v4633 = vmul.f32 %v4269, %v4585
        %v4682 = vrot.slane %v4586, 2
        %v4683 = vrot.slane %v4587, 2
        %v4684 = vsel %vm956, %v4682, %v4683
        %v4685 = vrot.slane %v4588, 2
        %v4686 = vsel %vm956, %v4683, %v4685
        %v4687 = vrot.slane %v4589, 2
        %v4688 = vrot.slane %v4590, 2
        %v4689 = vsel %vm956, %v4687, %v4688
        %v4690 = vrot.slane %v4591, 2
        %v4691 = vsel %vm956, %v4688, %v4690
        %v4692 = vrot.slane %v4592, 2
        %v4693 = vrot.slane %v4593, 2
        %v4694 = vsel %vm956, %v4692, %v4693
        %v4695 = vrot.slane %v4594, 2
        %v4696 = vsel %vm956, %v4693, %v4695
        %v4697 = vrot.slane %v4595, 2
        %v4698 = vrot.slane %v4596, 2
        %v4699 = vsel %vm956, %v4697, %v4698
        %v4700 = vrot.slane %v4597, 2
        %v4701 = vsel %vm956, %v4698, %v4700
        %v4702 = vrot.slane %v4598, 2
        %v4703 = vrot.slane %v4599, 2
        %v4704 = vsel %vm956, %v4702, %v4703
        %v4705 = vrot.slane %v4600, 2
        %v4706 = vsel %vm956, %v4703, %v4705
        %v4707 = vrot.slane %v4601, 2
        %v4708 = vrot.slane %v4602, 2
        %v4709 = vsel %vm956, %v4707, %v4708
        %v4710 = vrot.slane %v4603, 2
        %v4711 = vsel %vm956, %v4708, %v4710
        %v4712 = vrot.slane %v4604, 2
        %v4713 = vrot.slane %v4605, 2
        %v4714 = vsel %vm956, %v4712, %v4713
        %v4715 = vrot.slane %v4606, 2
        %v4716 = vsel %vm956, %v4713, %v4715
        %v4717 = vrot.slane %v4607, 2
        %v4718 = vrot.slane %v4608, 2
        %v4719 = vsel %vm956, %v4717, %v4718
        %v4720 = vrot.slane %v4609, 2
        %v4721 = vsel %vm956, %v4718, %v4720
        %v4722 = vrot.slane %v4610, 2
        %v4723 = vrot.slane %v4611, 2
        %v4724 = vsel %vm956, %v4722, %v4723
        %v4725 = vrot.slane %v4612, 2
        %v4726 = vsel %vm956, %v4723, %v4725
        %v4727 = vrot.slane %v4613, 2
        %v4728 = vrot.slane %v4614, 2
        %v4729 = vsel %vm956, %v4727, %v4728
        %v4730 = vrot.slane %v4615, 2
        %v4731 = vsel %vm956, %v4728, %v4730
        %v4732 = vrot.slane %v4616, 2
        %v4733 = vrot.slane %v4617, 2
        %v4734 = vsel %vm956, %v4732, %v4733
        %v4735 = vrot.slane %v4618, 2
        %v4736 = vsel %vm956, %v4733, %v4735
        %v4737 = vrot.slane %v4619, 2
        %v4738 = vrot.slane %v4620, 2
        %v4739 = vsel %vm956, %v4737, %v4738
        %v4740 = vrot.slane %v4621, 2
        %v4741 = vsel %vm956, %v4738, %v4740
        %v4742 = vrot.slane %v4622, 2
        %v4743 = vrot.slane %v4623, 2
        %v4744 = vsel %vm956, %v4742, %v4743
        %v4745 = vrot.slane %v4624, 2
        %v4746 = vsel %vm956, %v4743, %v4745
        %v4747 = vrot.slane %v4625, 2
        %v4748 = vrot.slane %v4626, 2
        %v4749 = vsel %vm956, %v4747, %v4748
        %v4750 = vrot.slane %v4627, 2
        %v4751 = vsel %vm956, %v4748, %v4750
        %v4752 = vrot.slane %v4628, 2
        %v4753 = vrot.slane %v4629, 2
        %v4754 = vsel %vm956, %v4752, %v4753
        %v4755 = vrot.slane %v4630, 2
        %v4756 = vsel %vm956, %v4753, %v4755
        %v4757 = vrot.slane %v4631, 2
        %v4758 = vrot.slane %v4632, 2
        %v4759 = vsel %vm956, %v4757, %v4758
        %v4760 = vrot.slane %v4633, 2
        %v4761 = vsel %vm956, %v4758, %v4760
        %v4810 = vadd.f32 %v4534, %v4682
        %v4811 = vadd.f32 %v4535, %v4684
        %v4812 = vadd.f32 %v4536, %v4686
        %v4813 = vadd.f32 %v4537, %v4687
        %v4814 = vadd.f32 %v4538, %v4689
        %v4815 = vadd.f32 %v4539, %v4691
        %v4816 = vadd.f32 %v4540, %v4692
        %v4817 = vadd.f32 %v4541, %v4694
        %v4818 = vadd.f32 %v4542, %v4696
        %v4819 = vadd.f32 %v4543, %v4697
        %v4820 = vadd.f32 %v4544, %v4699
        %v4821 = vadd.f32 %v4545, %v4701
        %v4822 = vadd.f32 %v4546, %v4702
        %v4823 = vadd.f32 %v4547, %v4704
        %v4824 = vadd.f32 %v4548, %v4706
        %v4825 = vadd.f32 %v4549, %v4707
        %v4826 = vadd.f32 %v4550, %v4709
        %v4827 = vadd.f32 %v4551, %v4711
        %v4828 = vadd.f32 %v4552, %v4712
        %v4829 = vadd.f32 %v4553, %v4714
        %v4830 = vadd.f32 %v4554, %v4716
        %v4831 = vadd.f32 %v4555, %v4717
        %v4832 = vadd.f32 %v4556, %v4719
        %v4833 = vadd.f32 %v4557, %v4721
        %v4834 = vadd.f32 %v4558, %v4722
        %v4835 = vadd.f32 %v4559, %v4724
        %v4836 = vadd.f32 %v4560, %v4726
        %v4837 = vadd.f32 %v4561, %v4727
        %v4838 = vadd.f32 %v4562, %v4729
        %v4839 = vadd.f32 %v4563, %v4731
        %v4840 = vadd.f32 %v4564, %v4732
        %v4841 = vadd.f32 %v4565, %v4734
        %v4842 = vadd.f32 %v4566, %v4736
        %v4843 = vadd.f32 %v4567, %v4737
        %v4844 = vadd.f32 %v4568, %v4739
        %v4845 = vadd.f32 %v4569, %v4741
        %v4846 = vadd.f32 %v4570, %v4742
        %v4847 = vadd.f32 %v4571, %v4744
        %v4848 = vadd.f32 %v4572, %v4746
        %v4849 = vadd.f32 %v4573, %v4747
        %v4850 = vadd.f32 %v4574, %v4749
        %v4851 = vadd.f32 %v4575, %v4751
        %v4852 = vadd.f32 %v4576, %v4752
        %v4853 = vadd.f32 %v4577, %v4754
        %v4854 = vadd.f32 %v4578, %v4756
        %v4855 = vadd.f32 %v4579, %v4757
        %v4856 = vadd.f32 %v4580, %v4759
        %v4857 = vadd.f32 %v4581, %v4761
        %v4858 = vld [vmem:[%s5] sm:$0xf]
        %v4907 = vrot.slane %v4810, 7
        %v4908 = vrot.slane %v4811, 7
        %v4909 = vsel %vm2487, %v4907, %v4908
        %v4910 = vrot.slane %v4812, 7
        %v4911 = vsel %vm2487, %v4908, %v4910
        %v4912 = vrot.slane %v4813, 7
        %v4913 = vrot.slane %v4814, 7
        %v4914 = vsel %vm2487, %v4912, %v4913
        %v4915 = vrot.slane %v4815, 7
        %v4916 = vsel %vm2487, %v4913, %v4915
        %v4917 = vrot.slane %v4816, 7
        %v4918 = vrot.slane %v4817, 7
        %v4919 = vsel %vm2487, %v4917, %v4918
        %v4920 = vrot.slane %v4818, 7
        %v4921 = vsel %vm2487, %v4918, %v4920
        %v4922 = vrot.slane %v4819, 7
        %v4923 = vrot.slane %v4820, 7
        %v4924 = vsel %vm2487, %v4922, %v4923
        %v4925 = vrot.slane %v4821, 7
        %v4926 = vsel %vm2487, %v4923, %v4925
        %v4927 = vrot.slane %v4822, 7
        %v4928 = vrot.slane %v4823, 7
        %v4929 = vsel %vm2487, %v4927, %v4928
        %v4930 = vrot.slane %v4824, 7
        %v4931 = vsel %vm2487, %v4928, %v4930
        %v4932 = vrot.slane %v4825, 7
        %v4933 = vrot.slane %v4826, 7
        %v4934 = vsel %vm2487, %v4932, %v4933
        %v4935 = vrot.slane %v4827, 7
        %v4936 = vsel %vm2487, %v4933, %v4935
        %v4937 = vrot.slane %v4828, 7
        %v4938 = vrot.slane %v4829, 7
        %v4939 = vsel %vm2487, %v4937, %v4938
        %v4940 = vrot.slane %v4830, 7
        %v4941 = vsel %vm2487, %v4938, %v4940
        %v4942 = vrot.slane %v4831, 7
        %v4943 = vrot.slane %v4832, 7
        %v4944 = vsel %vm2487, %v4942, %v4943
        %v4945 = vrot.slane %v4833, 7
        %v4946 = vsel %vm2487, %v4943, %v4945
        %v4947 = vrot.slane %v4834, 7
        %v4948 = vrot.slane %v4835, 7
        %v4949 = vsel %vm2487, %v4947, %v4948
        %v4950 = vrot.slane %v4836, 7
        %v4951 = vsel %vm2487, %v4948, %v4950
        %v4952 = vrot.slane %v4837, 7
        %v4953 = vrot.slane %v4838, 7
        %v4954 = vsel %vm2487, %v4952, %v4953
        %v4955 = vrot.slane %v4839, 7
        %v4956 = vsel %vm2487, %v4953, %v4955
        %v4957 = vrot.slane %v4840, 7
        %v4958 = vrot.slane %v4841, 7
        %v4959 = vsel %vm2487, %v4957, %v4958
        %v4960 = vrot.slane %v4842, 7
        %v4961 = vsel %vm2487, %v4958, %v4960
        %v4962 = vrot.slane %v4843, 7
        %v4963 = vrot.slane %v4844, 7
        %v4964 = vsel %vm2487, %v4962, %v4963
        %v4965 = vrot.slane %v4845, 7
        %v4966 = vsel %vm2487, %v4963, %v4965
        %v4967 = vrot.slane %v4846, 7
        %v4968 = vrot.slane %v4847, 7
        %v4969 = vsel %vm2487, %v4967, %v4968
        %v4970 = vrot.slane %v4848, 7
        %v4971 = vsel %vm2487, %v4968, %v4970
        %v4972 = vrot.slane %v4849, 7
        %v4973 = vrot.slane %v4850, 7
        %v4974 = vsel %vm2487, %v4972, %v4973
        %v4975 = vrot.slane %v4851, 7
        %v4976 = vsel %vm2487, %v4973, %v4975
        %v4977 = vrot.slane %v4852, 7
        %v4978 = vrot.slane %v4853, 7
        %v4979 = vsel %vm2487, %v4977, %v4978
        %v4980 = vrot.slane %v4854, 7
        %v4981 = vsel %vm2487, %v4978, %v4980
        %v4982 = vrot.slane %v4855, 7
        %v4983 = vrot.slane %v4856, 7
        %v4984 = vsel %vm2487, %v4982, %v4983
        %v4985 = vrot.slane %v4857, 7
        %v4986 = vsel %vm2487, %v4983, %v4985
        %v5019 = vpack.c.bf16 %v4911, %v4909
        %v5020 = vpack.c.bf16 %v4916, %v4914
        %v5021 = vpack.c.bf16 %v4921, %v4919
        %v5022 = vpack.c.bf16 %v4926, %v4924
        %v5023 = vpack.c.bf16 %v4931, %v4929
        %v5024 = vpack.c.bf16 %v4936, %v4934
        %v5025 = vpack.c.bf16 %v4941, %v4939
        %v5026 = vpack.c.bf16 %v4946, %v4944
        %v5027 = vpack.c.bf16 %v4951, %v4949
        %v5028 = vpack.c.bf16 %v4956, %v4954
        %v5029 = vpack.c.bf16 %v4961, %v4959
        %v5030 = vpack.c.bf16 %v4966, %v4964
        %v5031 = vpack.c.bf16 %v4971, %v4969
        %v5032 = vpack.c.bf16 %v4976, %v4974
        %v5033 = vpack.c.bf16 %v4981, %v4979
        %v5034 = vpack.c.bf16 %v4986, %v4984
        %v5035 = vld [vmem:[%s6] sm:$0x1]
        %v5037 = vlaneseq
        %v5038 = vshrl.u32 %v5037, 7
        %v5039 = vsub.s32 0, %v5038
        %v5040 = vrot.slane %v5035, %v5039
        %v5043 = vsel %vm332, %v5019, 0
        %v5046 = vsel %vm332, %v5020, 0
        %v5049 = vsel %vm332, %v5021, 0
        %v5052 = vsel %vm332, %v5022, 0
        %v5055 = vsel %vm332, %v5023, 0
        %v5058 = vsel %vm332, %v5024, 0
        %v5061 = vsel %vm332, %v5025, 0
        %v5064 = vsel %vm332, %v5026, 0
        %v5067 = vsel %vm332, %v5027, 0
        %v5070 = vsel %vm332, %v5028, 0
        %v5073 = vsel %vm332, %v5029, 0
        %v5076 = vsel %vm332, %v5030, 0
        %v5079 = vsel %vm332, %v5031, 0
        %v5082 = vsel %vm332, %v5032, 0
        %v5085 = vsel %vm332, %v5033, 0
        %v5088 = vsel %vm332, %v5034, 0
        %vm5090 = vcmask 1043456
        %v5092 = vsel %vm5090, %v4858, 0
        %5094 = vmatprep.subr.bf16.mxu0 0
        %5095 = vmatpush1.bf16.msra.mxu0 %v5092
        %5096 = vmatprep.subr.bf16.mxu0 0
        %5097 = vmatpush1.bf16.msra.mxu0 0
        %5098 = vmatprep.subr.bf16.mxu0 0
        %5099 = vmatpush1.bf16.msra.mxu0 0
        %5100 = vmatprep.subr.bf16.mxu0 0
        %5101 = vmatpush1.bf16.msra.mxu0 0
        %5102 = vmatprep.subr.bf16.mxu0 0
        %5103 = vmatpush1.bf16.msra.mxu0 0
        %5104 = vmatprep.subr.bf16.mxu0 0
        %5105 = vmatpush1.bf16.msra.mxu0 0
        %5106 = vmatprep.subr.bf16.mxu0 0
        %5107 = vmatpush1.bf16.msra.mxu0 0
        %5108 = vmatprep.subr.bf16.mxu0 0
        %5109 = vmatpush1.bf16.msra.mxu0 0
        %5110 = vmatprep.subr.bf16.mxu0 0
        %5111 = vmatpush1.bf16.msra.mxu0 0
        %5112 = vmatprep.subr.bf16.mxu0 0
        %5113 = vmatpush1.bf16.msra.mxu0 0
        %5114 = vmatprep.subr.bf16.mxu0 0
        %5115 = vmatpush1.bf16.msra.mxu0 0
        %5116 = vmatprep.subr.bf16.mxu0 0
        %5117 = vmatpush1.bf16.msra.mxu0 0
        %5118 = vmatprep.subr.bf16.mxu0 0
        %5119 = vmatpush1.bf16.msra.mxu0 0
        %5120 = vmatprep.subr.bf16.mxu0 0
        %5121 = vmatpush1.bf16.msra.mxu0 0
        %5122 = vmatprep.subr.bf16.mxu0 0
        %5123 = vmatpush1.bf16.msra.mxu0 0
        %5124 = vmatprep.subr.bf16.mxu0 0
        %5125 = vmatpush1.bf16.msra.mxu0 0
        %5126 = vmatprep.mubr.bf16.mxu0 0
        %5127 = vmatmul.mubr.bf16.gmra.mrb[0].mxu0 %v5043
        %v5128 = vpop.f32.mrb[0].mxu0
        %v5129 = vadd.f32 %v5040, %v5128
        %v5130 = vpop.f32.mrb[0].mxu0
        %v5131 = vpop.f32.mrb[0].mxu0
        %v5132 = vadd.f32 %v5040, %v5131
        %v5133 = vpop.f32.mrb[0].mxu0
        %5134 = vmatprep.mubr.bf16.mxu0 0
        %5135 = vmatmul.mubr.bf16.gmra.mrb[0].mxu0 %v5046
        %v5136 = vpop.f32.mrb[0].mxu0
        %v5137 = vadd.f32 %v5040, %v5136
        %v5138 = vpop.f32.mrb[0].mxu0
        %v5139 = vpop.f32.mrb[0].mxu0
        %v5140 = vadd.f32 %v5040, %v5139
        %v5141 = vpop.f32.mrb[0].mxu0
        %5142 = vmatprep.mubr.bf16.mxu0 0
        %5143 = vmatmul.mubr.bf16.gmra.mrb[0].mxu0 %v5049
        %v5144 = vpop.f32.mrb[0].mxu0
        %v5145 = vadd.f32 %v5040, %v5144
        %v5146 = vpop.f32.mrb[0].mxu0
        %v5147 = vpop.f32.mrb[0].mxu0
        %v5148 = vadd.f32 %v5040, %v5147
        %v5149 = vpop.f32.mrb[0].mxu0
        %5150 = vmatprep.mubr.bf16.mxu0 0
        %5151 = vmatmul.mubr.bf16.gmra.mrb[0].mxu0 %v5052
        %v5152 = vpop.f32.mrb[0].mxu0
        %v5153 = vadd.f32 %v5040, %v5152
        %v5154 = vpop.f32.mrb[0].mxu0
        %v5155 = vpop.f32.mrb[0].mxu0
        %v5156 = vadd.f32 %v5040, %v5155
        %v5157 = vpop.f32.mrb[0].mxu0
        %5158 = vmatprep.mubr.bf16.mxu0 0
        %5159 = vmatmul.mubr.bf16.gmra.mrb[0].mxu0 %v5055
        %v5160 = vpop.f32.mrb[0].mxu0
        %v5161 = vadd.f32 %v5040, %v5160
        %v5162 = vpop.f32.mrb[0].mxu0
        %v5163 = vpop.f32.mrb[0].mxu0
        %v5164 = vadd.f32 %v5040, %v5163
        %v5165 = vpop.f32.mrb[0].mxu0
        %5166 = vmatprep.mubr.bf16.mxu0 0
        %5167 = vmatmul.mubr.bf16.gmra.mrb[0].mxu0 %v5058
        %v5168 = vpop.f32.mrb[0].mxu0
        %v5169 = vadd.f32 %v5040, %v5168
        %v5170 = vpop.f32.mrb[0].mxu0
        %v5171 = vpop.f32.mrb[0].mxu0
        %v5172 = vadd.f32 %v5040, %v5171
        %v5173 = vpop.f32.mrb[0].mxu0
        %5174 = vmatprep.mubr.bf16.mxu0 0
        %5175 = vmatmul.mubr.bf16.gmra.mrb[0].mxu0 %v5061
        %v5176 = vpop.f32.mrb[0].mxu0
        %v5177 = vadd.f32 %v5040, %v5176
        %v5178 = vpop.f32.mrb[0].mxu0
        %v5179 = vpop.f32.mrb[0].mxu0
        %v5180 = vadd.f32 %v5040, %v5179
        %v5181 = vpop.f32.mrb[0].mxu0
        %5182 = vmatprep.mubr.bf16.mxu0 0
        %5183 = vmatmul.mubr.bf16.gmra.mrb[0].mxu0 %v5064
        %v5184 = vpop.f32.mrb[0].mxu0
        %v5185 = vadd.f32 %v5040, %v5184
        %v5186 = vpop.f32.mrb[0].mxu0
        %v5187 = vpop.f32.mrb[0].mxu0
        %v5188 = vadd.f32 %v5040, %v5187
        %v5189 = vpop.f32.mrb[0].mxu0
        %5190 = vmatprep.mubr.bf16.mxu0 0
        %5191 = vmatmul.mubr.bf16.gmra.mrb[0].mxu0 %v5067
        %v5192 = vpop.f32.mrb[0].mxu0
        %v5193 = vadd.f32 %v5040, %v5192
        %v5194 = vpop.f32.mrb[0].mxu0
        %v5195 = vpop.f32.mrb[0].mxu0
        %v5196 = vadd.f32 %v5040, %v5195
        %v5197 = vpop.f32.mrb[0].mxu0
        %5198 = vmatprep.mubr.bf16.mxu0 0
        %5199 = vmatmul.mubr.bf16.gmra.mrb[0].mxu0 %v5070
        %v5200 = vpop.f32.mrb[0].mxu0
        %v5201 = vadd.f32 %v5040, %v5200
        %v5202 = vpop.f32.mrb[0].mxu0
        %v5203 = vpop.f32.mrb[0].mxu0
        %v5204 = vadd.f32 %v5040, %v5203
        %v5205 = vpop.f32.mrb[0].mxu0
        %5206 = vmatprep.mubr.bf16.mxu0 0
        %5207 = vmatmul.mubr.bf16.gmra.mrb[0].mxu0 %v5073
        %v5208 = vpop.f32.mrb[0].mxu0
        %v5209 = vadd.f32 %v5040, %v5208
        %v5210 = vpop.f32.mrb[0].mxu0
        %v5211 = vpop.f32.mrb[0].mxu0
        %v5212 = vadd.f32 %v5040, %v5211
        %v5213 = vpop.f32.mrb[0].mxu0
        %5214 = vmatprep.mubr.bf16.mxu0 0
        %5215 = vmatmul.mubr.bf16.gmra.mrb[0].mxu0 %v5076
        %v5216 = vpop.f32.mrb[0].mxu0
        %v5217 = vadd.f32 %v5040, %v5216
        %v5218 = vpop.f32.mrb[0].mxu0
        %v5219 = vpop.f32.mrb[0].mxu0
        %v5220 = vadd.f32 %v5040, %v5219
        %v5221 = vpop.f32.mrb[0].mxu0
        %5222 = vmatprep.mubr.bf16.mxu0 0
        %5223 = vmatmul.mubr.bf16.gmra.mrb[0].mxu0 %v5079
        %v5224 = vpop.f32.mrb[0].mxu0
        %v5225 = vadd.f32 %v5040, %v5224
        %v5226 = vpop.f32.mrb[0].mxu0
        %v5227 = vpop.f32.mrb[0].mxu0
        %v5228 = vadd.f32 %v5040, %v5227
        %v5229 = vpop.f32.mrb[0].mxu0
        %5230 = vmatprep.mubr.bf16.mxu0 0
        %5231 = vmatmul.mubr.bf16.gmra.mrb[0].mxu0 %v5082
        %v5232 = vpop.f32.mrb[0].mxu0
        %v5233 = vadd.f32 %v5040, %v5232
        %v5234 = vpop.f32.mrb[0].mxu0
        %v5235 = vpop.f32.mrb[0].mxu0
        %v5236 = vadd.f32 %v5040, %v5235
        %v5237 = vpop.f32.mrb[0].mxu0
        %5238 = vmatprep.mubr.bf16.mxu0 0
        %5239 = vmatmul.mubr.bf16.gmra.mrb[0].mxu0 %v5085
        %v5240 = vpop.f32.mrb[0].mxu0
        %v5241 = vadd.f32 %v5040, %v5240
        %v5242 = vpop.f32.mrb[0].mxu0
        %v5243 = vpop.f32.mrb[0].mxu0
        %v5244 = vadd.f32 %v5040, %v5243
        %v5245 = vpop.f32.mrb[0].mxu0
        %5246 = vmatprep.mubr.bf16.mxu0 0
        %5247 = vmatmul.mubr.bf16.gmra.mrb[0].mxu0 %v5088
        %v5248 = vpop.f32.mrb[0].mxu0
        %v5249 = vadd.f32 %v5040, %v5248
        %v5250 = vpop.f32.mrb[0].mxu0
        %v5251 = vpop.f32.mrb[0].mxu0
        %v5252 = vadd.f32 %v5040, %v5251
        %v5253 = vpop.f32.mrb[0].mxu0
        %5254 = vdwg.mxu0
        %5255 = vst.msk [vmem:[#allocation2 + $0x7] sm:$0xff] %vm332, -inf
        %5256 = vst.msk [vmem:[#allocation2 + $0xf] sm:$0xff] %vm332, -inf
        %5257 = vst.msk [vmem:[#allocation2 + $0x17] sm:$0x1] %vm342, -inf
        %5258 = vst.msk [vmem:[%s443 + $0x7] sm:$0x1] %vm342, -inf
        %5259 = vst.msk [vmem:[%s443 + $0x27] sm:$0x1] %vm342, -inf
        %5260 = vst.msk [vmem:[%s443 + $0x47] sm:$0x1] %vm342, -inf
        %5261 = vst.msk [vmem:[%s443 + $0x67] sm:$0x1] %vm342, -inf
        %5262 = vst.msk [vmem:[%s443 + $0x87] sm:$0x1] %vm342, -inf
        %5263 = vst.msk [vmem:[%s443 + $0xa7] sm:$0x1] %vm342, -inf
        %5264 = vst.msk [vmem:[%s443 + $0xc7] sm:$0x1] %vm342, -inf
        %5265 = vst.msk [vmem:[%s443 + $0xe7] sm:$0x1] %vm342, -inf
        %5266 = vst.msk [vmem:[%s443 + $0x107] sm:$0x1] %vm342, -inf
        %5267 = vst.msk [vmem:[%s443 + $0x127] sm:$0x1] %vm342, -inf
        %5268 = vst.msk [vmem:[%s443 + $0x147] sm:$0x1] %vm342, -inf
        %5269 = vst.msk [vmem:[%s443 + $0x167] sm:$0x1] %vm342, -inf
        %5270 = vst.msk [vmem:[%s443 + $0x187] sm:$0x1] %vm342, -inf
        %5271 = vst.msk [vmem:[%s443 + $0x1a7] sm:$0x1] %vm342, -inf
        %5272 = vst.msk [vmem:[%s443 + $0x1c7] sm:$0x1] %vm342, -inf
        %5273 = vst.msk [vmem:[%s443 + $0x1e7] sm:$0x1] %vm342, -inf
        %5274 = vst.msk [vmem:[%s443 + $0x8] sm:$0xff] %vm332, %v5129
        %5275 = vst.msk [vmem:[%s443 + $0x10] sm:$0xff] %vm332, %v5132
        %5276 = vst.msk [vmem:[%s443 + $0x28] sm:$0xff] %vm332, %v5137
        %5277 = vst.msk [vmem:[%s443 + $0x30] sm:$0xff] %vm332, %v5140
        %5278 = vst.msk [vmem:[%s443 + $0x48] sm:$0xff] %vm332, %v5145
        %5279 = vst.msk [vmem:[%s443 + $0x50] sm:$0xff] %vm332, %v5148
        %5280 = vst.msk [vmem:[%s443 + $0x68] sm:$0xff] %vm332, %v5153
        %5281 = vst.msk [vmem:[%s443 + $0x70] sm:$0xff] %vm332, %v5156
        %5282 = vst.msk [vmem:[%s443 + $0x88] sm:$0xff] %vm332, %v5161
        %5283 = vst.msk [vmem:[%s443 + $0x90] sm:$0xff] %vm332, %v5164
        %5284 = vst.msk [vmem:[%s443 + $0xa8] sm:$0xff] %vm332, %v5169
        %5285 = vst.msk [vmem:[%s443 + $0xb0] sm:$0xff] %vm332, %v5172
        %5286 = vst.msk [vmem:[%s443 + $0xc8] sm:$0xff] %vm332, %v5177
        %5287 = vst.msk [vmem:[%s443 + $0xd0] sm:$0xff] %vm332, %v5180
        %5288 = vst.msk [vmem:[%s443 + $0xe8] sm:$0xff] %vm332, %v5185
        %5289 = vst.msk [vmem:[%s443 + $0xf0] sm:$0xff] %vm332, %v5188
        %5290 = vst.msk [vmem:[%s443 + $0x108] sm:$0xff] %vm332, %v5193
        %5291 = vst.msk [vmem:[%s443 + $0x110] sm:$0xff] %vm332, %v5196
        %5292 = vst.msk [vmem:[%s443 + $0x128] sm:$0xff] %vm332, %v5201
        %5293 = vst.msk [vmem:[%s443 + $0x130] sm:$0xff] %vm332, %v5204
        %5294 = vst.msk [vmem:[%s443 + $0x148] sm:$0xff] %vm332, %v5209
        %5295 = vst.msk [vmem:[%s443 + $0x150] sm:$0xff] %vm332, %v5212
        %5296 = vst.msk [vmem:[%s443 + $0x168] sm:$0xff] %vm332, %v5217
        %5297 = vst.msk [vmem:[%s443 + $0x170] sm:$0xff] %vm332, %v5220
        %5298 = vst.msk [vmem:[%s443 + $0x188] sm:$0xff] %vm332, %v5225
        %5299 = vst.msk [vmem:[%s443 + $0x190] sm:$0xff] %vm332, %v5228
        %5300 = vst.msk [vmem:[%s443 + $0x1a8] sm:$0xff] %vm332, %v5233
        %5301 = vst.msk [vmem:[%s443 + $0x1b0] sm:$0xff] %vm332, %v5236
        %5302 = vst.msk [vmem:[%s443 + $0x1c8] sm:$0xff] %vm332, %v5241
        %5303 = vst.msk [vmem:[%s443 + $0x1d0] sm:$0xff] %vm332, %v5244
        %5304 = vst.msk [vmem:[%s443 + $0x1e8] sm:$0xff] %vm332, %v5249
        %5305 = vst.msk [vmem:[%s443 + $0x1f0] sm:$0xff] %vm332, %v5252
        %s5306 = scalar_lea.vmem [#allocation2], 7
        %v5307 = vld [vmem:[%s5306] ss:$2 sm:$0xff]
        %s5308 = scalar_lea.vmem [#allocation2], 71
        %v5309 = vld [vmem:[%s5308] ss:$2 sm:$0xff]
        %s5310 = scalar_lea.vmem [#allocation2], 135
        %v5311 = vld [vmem:[%s5310] ss:$2 sm:$0xff]
        %s5312 = scalar_lea.vmem [#allocation2], 199
        %v5313 = vld [vmem:[%s5312] ss:$2 sm:$0xff]
        %s5314 = scalar_lea.vmem [#allocation2], 263
        %v5315 = vld [vmem:[%s5314] ss:$2 sm:$0xff]
        %s5316 = scalar_lea.vmem [#allocation2], 327
        %v5317 = vld [vmem:[%s5316] ss:$2 sm:$0xff]
        %s5318 = scalar_lea.vmem [#allocation2], 391
        %v5319 = vld [vmem:[%s5318] ss:$2 sm:$0xff]
        %s5320 = scalar_lea.vmem [#allocation2], 455
        %v5321 = vld [vmem:[%s5320] ss:$2 sm:$0xff]
        %s5322 = scalar_lea.vmem [#allocation2], 8
        %v5323 = vld [vmem:[%s5322] ss:$2 sm:$0xff]
        %s5324 = scalar_lea.vmem [#allocation2], 72
        %v5325 = vld [vmem:[%s5324] ss:$2 sm:$0xff]
        %s5326 = scalar_lea.vmem [#allocation2], 136
        %v5327 = vld [vmem:[%s5326] ss:$2 sm:$0xff]
        %s5328 = scalar_lea.vmem [#allocation2], 200
        %v5329 = vld [vmem:[%s5328] ss:$2 sm:$0xff]
        %s5330 = scalar_lea.vmem [#allocation2], 264
        %v5331 = vld [vmem:[%s5330] ss:$2 sm:$0xff]
        %s5332 = scalar_lea.vmem [#allocation2], 328
        %v5333 = vld [vmem:[%s5332] ss:$2 sm:$0xff]
        %s5334 = scalar_lea.vmem [#allocation2], 392
        %v5335 = vld [vmem:[%s5334] ss:$2 sm:$0xff]
        %s5336 = scalar_lea.vmem [#allocation2], 456
        %v5337 = vld [vmem:[%s5336] ss:$2 sm:$0xff]
        %v5338 = vmax.f32 %v5307, %v5323
        %v5339 = vmax.f32 %v5309, %v5325
        %v5340 = vmax.f32 %v5311, %v5327
        %v5341 = vmax.f32 %v5313, %v5329
        %v5342 = vmax.f32 %v5315, %v5331
        %v5343 = vmax.f32 %v5317, %v5333
        %v5344 = vmax.f32 %v5319, %v5335
        %v5345 = vmax.f32 %v5321, %v5337
        %s5346 = scalar_lea.vmem [#allocation2], 9
        %v5347 = vld [vmem:[%s5346] ss:$2 sm:$0xff]
        %s5348 = scalar_lea.vmem [#allocation2], 73
        %v5349 = vld [vmem:[%s5348] ss:$2 sm:$0xff]
        %s5350 = scalar_lea.vmem [#allocation2], 137
        %v5351 = vld [vmem:[%s5350] ss:$2 sm:$0xff]
        %s5352 = scalar_lea.vmem [#allocation2], 201
        %v5353 = vld [vmem:[%s5352] ss:$2 sm:$0xff]
        %s5354 = scalar_lea.vmem [#allocation2], 265
        %v5355 = vld [vmem:[%s5354] ss:$2 sm:$0xff]
        %s5356 = scalar_lea.vmem [#allocation2], 329
        %v5357 = vld [vmem:[%s5356] ss:$2 sm:$0xff]
        %s5358 = scalar_lea.vmem [#allocation2], 393
        %v5359 = vld [vmem:[%s5358] ss:$2 sm:$0xff]
        %s5360 = scalar_lea.vmem [#allocation2], 457
        %v5361 = vld [vmem:[%s5360] ss:$2 sm:$0xff]
        %v5362 = vmax.f32 %v5338, %v5347
        %v5363 = vmax.f32 %v5339, %v5349
        %v5364 = vmax.f32 %v5340, %v5351
        %v5365 = vmax.f32 %v5341, %v5353
        %v5366 = vmax.f32 %v5342, %v5355
        %v5367 = vmax.f32 %v5343, %v5357
        %v5368 = vmax.f32 %v5344, %v5359
        %v5369 = vmax.f32 %v5345, %v5361
        %s5370 = scalar_lea.vmem %s443, 7 [#allocation2]
        %v5371 = vld [vmem:[%s5370] ss:$2 sm:$0xff]
        %s5372 = scalar_lea.vmem %s443, 71 [#allocation2]
        %v5373 = vld [vmem:[%s5372] ss:$2 sm:$0xff]
        %s5374 = scalar_lea.vmem %s443, 135 [#allocation2]
        %v5375 = vld [vmem:[%s5374] ss:$2 sm:$0xff]
        %s5376 = scalar_lea.vmem %s443, 199 [#allocation2]
        %v5377 = vld [vmem:[%s5376] ss:$2 sm:$0xff]
        %s5378 = scalar_lea.vmem %s443, 263 [#allocation2]
        %v5379 = vld [vmem:[%s5378] ss:$2 sm:$0xff]
        %s5380 = scalar_lea.vmem %s443, 327 [#allocation2]
        %v5381 = vld [vmem:[%s5380] ss:$2 sm:$0xff]
        %s5382 = scalar_lea.vmem %s443, 391 [#allocation2]
        %v5383 = vld [vmem:[%s5382] ss:$2 sm:$0xff]
        %s5384 = scalar_lea.vmem %s443, 455 [#allocation2]
        %v5385 = vld [vmem:[%s5384] ss:$2 sm:$0xff]
        %v5386 = vmax.f32 %v5362, %v5371
        %v5387 = vmax.f32 %v5363, %v5373
        %v5388 = vmax.f32 %v5364, %v5375
        %v5389 = vmax.f32 %v5365, %v5377
        %v5390 = vmax.f32 %v5366, %v5379
        %v5391 = vmax.f32 %v5367, %v5381
        %v5392 = vmax.f32 %v5368, %v5383
        %v5393 = vmax.f32 %v5369, %v5385
        %s5394 = scalar_lea.vmem %s443, 8 [#allocation2]
        %v5395 = vld [vmem:[%s5394] ss:$2 sm:$0xff]
        %s5396 = scalar_lea.vmem %s443, 72 [#allocation2]
        %v5397 = vld [vmem:[%s5396] ss:$2 sm:$0xff]
        %s5398 = scalar_lea.vmem %s443, 136 [#allocation2]
        %v5399 = vld [vmem:[%s5398] ss:$2 sm:$0xff]
        %s5400 = scalar_lea.vmem %s443, 200 [#allocation2]
        %v5401 = vld [vmem:[%s5400] ss:$2 sm:$0xff]
        %s5402 = scalar_lea.vmem %s443, 264 [#allocation2]
        %v5403 = vld [vmem:[%s5402] ss:$2 sm:$0xff]
        %s5404 = scalar_lea.vmem %s443, 328 [#allocation2]
        %v5405 = vld [vmem:[%s5404] ss:$2 sm:$0xff]
        %s5406 = scalar_lea.vmem %s443, 392 [#allocation2]
        %v5407 = vld [vmem:[%s5406] ss:$2 sm:$0xff]
        %s5408 = scalar_lea.vmem %s443, 456 [#allocation2]
        %v5409 = vld [vmem:[%s5408] ss:$2 sm:$0xff]
        %v5410 = vmax.f32 %v5386, %v5395
        %v5411 = vmax.f32 %v5387, %v5397
        %v5412 = vmax.f32 %v5388, %v5399
        %v5413 = vmax.f32 %v5389, %v5401
        %v5414 = vmax.f32 %v5390, %v5403
        %v5415 = vmax.f32 %v5391, %v5405
        %v5416 = vmax.f32 %v5392, %v5407
        %v5417 = vmax.f32 %v5393, %v5409
        %s5418 = scalar_lea.vmem %s443, 9 [#allocation2]
        %v5419 = vld [vmem:[%s5418] ss:$2 sm:$0xff]
        %s5420 = scalar_lea.vmem %s443, 73 [#allocation2]
        %v5421 = vld [vmem:[%s5420] ss:$2 sm:$0xff]
        %s5422 = scalar_lea.vmem %s443, 137 [#allocation2]
        %v5423 = vld [vmem:[%s5422] ss:$2 sm:$0xff]
        %s5424 = scalar_lea.vmem %s443, 201 [#allocation2]
        %v5425 = vld [vmem:[%s5424] ss:$2 sm:$0xff]
        %s5426 = scalar_lea.vmem %s443, 265 [#allocation2]
        %v5427 = vld [vmem:[%s5426] ss:$2 sm:$0xff]
        %s5428 = scalar_lea.vmem %s443, 329 [#allocation2]
        %v5429 = vld [vmem:[%s5428] ss:$2 sm:$0xff]
        %s5430 = scalar_lea.vmem %s443, 393 [#allocation2]
        %v5431 = vld [vmem:[%s5430] ss:$2 sm:$0xff]
        %s5432 = scalar_lea.vmem %s443, 457 [#allocation2]
        %v5433 = vld [vmem:[%s5432] ss:$2 sm:$0xff]
        %v5434 = vmax.f32 %v5410, %v5419
        %v5435 = vmax.f32 %v5411, %v5421
        %v5436 = vmax.f32 %v5412, %v5423
        %v5437 = vmax.f32 %v5413, %v5425
        %v5438 = vmax.f32 %v5414, %v5427
        %v5439 = vmax.f32 %v5415, %v5429
        %v5440 = vmax.f32 %v5416, %v5431
        %v5441 = vmax.f32 %v5417, %v5433
        %s5442 = scalar_lea.vmem %s1785, 7 [#allocation2]
        %v5443 = vld [vmem:[%s5442] ss:$2 sm:$0xff]
        %s5444 = scalar_lea.vmem %s1785, 71 [#allocation2]
        %v5445 = vld [vmem:[%s5444] ss:$2 sm:$0xff]
        %s5446 = scalar_lea.vmem %s1785, 135 [#allocation2]
        %v5447 = vld [vmem:[%s5446] ss:$2 sm:$0xff]
        %s5448 = scalar_lea.vmem %s1785, 199 [#allocation2]
        %v5449 = vld [vmem:[%s5448] ss:$2 sm:$0xff]
        %s5450 = scalar_lea.vmem %s1785, 263 [#allocation2]
        %v5451 = vld [vmem:[%s5450] ss:$2 sm:$0xff]
        %s5452 = scalar_lea.vmem %s1785, 327 [#allocation2]
        %v5453 = vld [vmem:[%s5452] ss:$2 sm:$0xff]
        %s5454 = scalar_lea.vmem %s1785, 391 [#allocation2]
        %v5455 = vld [vmem:[%s5454] ss:$2 sm:$0xff]
        %s5456 = scalar_lea.vmem %s1785, 455 [#allocation2]
        %v5457 = vld [vmem:[%s5456] ss:$2 sm:$0xff]
        %v5458 = vmax.f32 %v5434, %v5443
        %v5459 = vmax.f32 %v5435, %v5445
        %v5460 = vmax.f32 %v5436, %v5447
        %v5461 = vmax.f32 %v5437, %v5449
        %v5462 = vmax.f32 %v5438, %v5451
        %v5463 = vmax.f32 %v5439, %v5453
        %v5464 = vmax.f32 %v5440, %v5455
        %v5465 = vmax.f32 %v5441, %v5457
        %s5466 = scalar_lea.vmem %s1785, 8 [#allocation2]
        %v5467 = vld [vmem:[%s5466] ss:$2 sm:$0xff]
        %s5468 = scalar_lea.vmem %s1785, 72 [#allocation2]
        %v5469 = vld [vmem:[%s5468] ss:$2 sm:$0xff]
        %s5470 = scalar_lea.vmem %s1785, 136 [#allocation2]
        %v5471 = vld [vmem:[%s5470] ss:$2 sm:$0xff]
        %s5472 = scalar_lea.vmem %s1785, 200 [#allocation2]
        %v5473 = vld [vmem:[%s5472] ss:$2 sm:$0xff]
        %s5474 = scalar_lea.vmem %s1785, 264 [#allocation2]
        %v5475 = vld [vmem:[%s5474] ss:$2 sm:$0xff]
        %s5476 = scalar_lea.vmem %s1785, 328 [#allocation2]
        %v5477 = vld [vmem:[%s5476] ss:$2 sm:$0xff]
        %s5478 = scalar_lea.vmem %s1785, 392 [#allocation2]
        %v5479 = vld [vmem:[%s5478] ss:$2 sm:$0xff]
        %s5480 = scalar_lea.vmem %s1785, 456 [#allocation2]
        %v5481 = vld [vmem:[%s5480] ss:$2 sm:$0xff]
        %v5482 = vmax.f32 %v5458, %v5467
        %v5483 = vmax.f32 %v5459, %v5469
        %v5484 = vmax.f32 %v5460, %v5471
        %v5485 = vmax.f32 %v5461, %v5473
        %v5486 = vmax.f32 %v5462, %v5475
        %v5487 = vmax.f32 %v5463, %v5477
        %v5488 = vmax.f32 %v5464, %v5479
        %v5489 = vmax.f32 %v5465, %v5481
        %s5490 = scalar_lea.vmem %s1785, 9 [#allocation2]
        %v5491 = vld [vmem:[%s5490] ss:$2 sm:$0xff]
        %s5492 = scalar_lea.vmem %s1785, 73 [#allocation2]
        %v5493 = vld [vmem:[%s5492] ss:$2 sm:$0xff]
        %s5494 = scalar_lea.vmem %s1785, 137 [#allocation2]
        %v5495 = vld [vmem:[%s5494] ss:$2 sm:$0xff]
        %s5496 = scalar_lea.vmem %s1785, 201 [#allocation2]
        %v5497 = vld [vmem:[%s5496] ss:$2 sm:$0xff]
        %s5498 = scalar_lea.vmem %s1785, 265 [#allocation2]
        %v5499 = vld [vmem:[%s5498] ss:$2 sm:$0xff]
        %s5500 = scalar_lea.vmem %s1785, 329 [#allocation2]
        %v5501 = vld [vmem:[%s5500] ss:$2 sm:$0xff]
        %s5502 = scalar_lea.vmem %s1785, 393 [#allocation2]
        %v5503 = vld [vmem:[%s5502] ss:$2 sm:$0xff]
        %s5504 = scalar_lea.vmem %s1785, 457 [#allocation2]
        %v5505 = vld [vmem:[%s5504] ss:$2 sm:$0xff]
        %v5506 = vmax.f32 %v5482, %v5491
        %v5507 = vmax.f32 %v5483, %v5493
        %v5508 = vmax.f32 %v5484, %v5495
        %v5509 = vmax.f32 %v5485, %v5497
        %v5510 = vmax.f32 %v5486, %v5499
        %v5511 = vmax.f32 %v5487, %v5501
        %v5512 = vmax.f32 %v5488, %v5503
        %v5513 = vmax.f32 %v5489, %v5505
        %v5514 = vld [vmem:[%s330] ss:$2 sm:$0xff]
        %s5515 = scalar_lea.vmem %s330, 32
        %v5516 = vld [vmem:[%s5515] ss:$2 sm:$0xff]
        %s5517 = scalar_lea.vmem %s330, 64
        %v5518 = vld [vmem:[%s5517] ss:$2 sm:$0xff]
        %s5519 = scalar_lea.vmem %s330, 96
        %v5520 = vld [vmem:[%s5519] ss:$2 sm:$0xff]
        %s5521 = scalar_lea.vmem %s330, 128
        %v5522 = vld [vmem:[%s5521] ss:$2 sm:$0xff]
        %s5523 = scalar_lea.vmem %s330, 160
        %v5524 = vld [vmem:[%s5523] ss:$2 sm:$0xff]
        %s5525 = scalar_lea.vmem %s330, 192
        %v5526 = vld [vmem:[%s5525] ss:$2 sm:$0xff]
        %s5527 = scalar_lea.vmem %s330, 224
        %v5528 = vld [vmem:[%s5527] ss:$2 sm:$0xff]
        %v5529 = vpack.c.bf16 %v5516, %v5514
        %v5530 = vpack.c.bf16 %v5520, %v5518
        %v5531 = vpack.c.bf16 %v5524, %v5522
        %v5532 = vpack.c.bf16 %v5528, %v5526
        %v5533 = vld [vmem:[%s7] sm:$0x3]
        %v5534 = vld [vmem:[%s8] sm:$0x1]
        %v5536 = vlaneseq
        %v5537 = vshrl.u32 %v5536, 7
        %v5538 = vsub.s32 0, %v5537
        %v5539 = vrot.slane %v5534, %v5538
        %v5542 = vsel %vm444, %v5529, 0
        %v5545 = vsel %vm444, %v5530, 0
        %v5548 = vsel %vm444, %v5531, 0
        %v5551 = vsel %vm444, %v5532, 0
        %v5554 = vsel %vm2671, %v5533, 0
        %5556 = vmatprep.subr.bf16.mxu0 0
        %5557 = vmatpush1.bf16.msra.mxu0 %v5554
        %5558 = vmatprep.subr.bf16.mxu0 0
        %5559 = vmatpush1.bf16.msra.mxu0 0
        %5560 = vmatprep.subr.bf16.mxu0 0
        %5561 = vmatpush1.bf16.msra.mxu0 0
        %5562 = vmatprep.subr.bf16.mxu0 0
        %5563 = vmatpush1.bf16.msra.mxu0 0
        %5564 = vmatprep.subr.bf16.mxu0 0
        %5565 = vmatpush1.bf16.msra.mxu0 0
        %5566 = vmatprep.subr.bf16.mxu0 0
        %5567 = vmatpush1.bf16.msra.mxu0 0
        %5568 = vmatprep.subr.bf16.mxu0 0
        %5569 = vmatpush1.bf16.msra.mxu0 0
        %5570 = vmatprep.subr.bf16.mxu0 0
        %5571 = vmatpush1.bf16.msra.mxu0 0
        %5572 = vmatprep.subr.bf16.mxu0 0
        %5573 = vmatpush1.bf16.msra.mxu0 0
        %5574 = vmatprep.subr.bf16.mxu0 0
        %5575 = vmatpush1.bf16.msra.mxu0 0
        %5576 = vmatprep.subr.bf16.mxu0 0
        %5577 = vmatpush1.bf16.msra.mxu0 0
        %5578 = vmatprep.subr.bf16.mxu0 0
        %5579 = vmatpush1.bf16.msra.mxu0 0
        %5580 = vmatprep.subr.bf16.mxu0 0
        %5581 = vmatpush1.bf16.msra.mxu0 0
        %5582 = vmatprep.subr.bf16.mxu0 0
        %5583 = vmatpush1.bf16.msra.mxu0 0
        %5584 = vmatprep.subr.bf16.mxu0 0
        %5585 = vmatpush1.bf16.msra.mxu0 0
        %5586 = vmatprep.subr.bf16.mxu0 0
        %5587 = vmatpush1.bf16.msra.mxu0 0
        %5588 = vmatprep.mubr.bf16.mxu0 0
        %5589 = vmatmul.mubr.bf16.gmra.mrb[0].mxu0 %v5542
        %v5590 = vpop.f32.mrb[0].mxu0
        %v5591 = vadd.f32 %v5539, %v5590
        %v5592 = vpop.f32.mrb[0].mxu0
        %v5593 = vpop.f32.mrb[0].mxu0
        %v5594 = vadd.f32 %v5539, %v5593
        %v5595 = vpop.f32.mrb[0].mxu0
        %5596 = vmatprep.mubr.bf16.mxu0 0
        %5597 = vmatmul.mubr.bf16.gmra.mrb[0].mxu0 %v5545
        %v5598 = vpop.f32.mrb[0].mxu0
        %v5599 = vadd.f32 %v5539, %v5598
        %v5600 = vpop.f32.mrb[0].mxu0
        %v5601 = vpop.f32.mrb[0].mxu0
        %v5602 = vadd.f32 %v5539, %v5601
        %v5603 = vpop.f32.mrb[0].mxu0
        %5604 = vmatprep.mubr.bf16.mxu0 0
        %5605 = vmatmul.mubr.bf16.gmra.mrb[0].mxu0 %v5548
        %v5606 = vpop.f32.mrb[0].mxu0
        %v5607 = vadd.f32 %v5539, %v5606
        %v5608 = vpop.f32.mrb[0].mxu0
        %v5609 = vpop.f32.mrb[0].mxu0
        %v5610 = vadd.f32 %v5539, %v5609
        %v5611 = vpop.f32.mrb[0].mxu0
        %5612 = vmatprep.mubr.bf16.mxu0 0
        %5613 = vmatmul.mubr.bf16.gmra.mrb[0].mxu0 %v5551
        %v5614 = vpop.f32.mrb[0].mxu0
        %v5615 = vadd.f32 %v5539, %v5614
        %v5616 = vpop.f32.mrb[0].mxu0
        %v5617 = vpop.f32.mrb[0].mxu0
        %v5618 = vadd.f32 %v5539, %v5617
        %v5619 = vpop.f32.mrb[0].mxu0
        %5620 = vdwg.mxu0
        %v5621 = vadd.f32 %v5506, %v5591
        %v5622 = vadd.f32 %v5507, %v5594
        %v5623 = vadd.f32 %v5508, %v5599
        %v5624 = vadd.f32 %v5509, %v5602
        %v5625 = vadd.f32 %v5510, %v5607
        %v5626 = vadd.f32 %v5511, %v5610
        %v5627 = vadd.f32 %v5512, %v5615
        %v5628 = vadd.f32 %v5513, %v5618
        %5629 = vst.msk [vmem:[%s325] sm:$0xff] %vm332, %v5621
        %5630 = vst.msk [vmem:[%s325 + $0x8] sm:$0xff] %vm332, %v5622
        %5631 = vst.msk [vmem:[%s325 + $0x10] sm:$0xff] %vm332, %v5623
        %5632 = vst.msk [vmem:[%s325 + $0x18] sm:$0xff] %vm332, %v5624
        %5633 = vst.msk [vmem:[%s325 + $0x20] sm:$0xff] %vm332, %v5625
        %5634 = vst.msk [vmem:[%s325 + $0x28] sm:$0xff] %vm332, %v5626
        %5635 = vst.msk [vmem:[%s325 + $0x30] sm:$0xff] %vm332, %v5627
        %5636 = vst.msk [vmem:[%s325 + $0x38] sm:$0xff] %vm332, %v5628
        %s5637 = sand.u32 %s225, 1
        %s5638 = scalar_lea.sflag [#allocation4], %s5637
        %s5639 = sand.u32 %s225, 1
        %s5640 = smul.addr %s5639, 64
        %s5641 = scalar_lea.vmem [#allocation3], %s5640
        // Predicated region
        $region57: #{tpu_custom_call.1} parent=55 // pred_check
          %p5642 = pneg %p235
        $region58: #{tpu_custom_call.1} parent=55 // pred_check_branch
          %5644 = sbr.rel (%p5642) target = $region60
        $region59: #{tpu_custom_call.1} parent=55 // pred_region
          %s5646 = ssub.s32 1024, 1024
          %5647 = vsyncadd %s5638, %s5646
          %s5648 = smul.addr %s23, 8
          %s5649 = smul.addr %s5648, 128
          %s5650 = scalar_lea.hbm %s9, %s5649
          %s5651 = sshll.u32 %s5641, 4
          %s5652 = int_to_ptr.vmem [resolvable:$true] %s5651
          %5657 = dma.vmem_to_hbm [thread:$0]  %s5652, 1024, %s5650, %s5638, 128, 128, 8
        $region60: #{tpu_custom_call.1} parent=55 // pred_fallthru
          _
      $region56: #{tpu_custom_call.1} parent=5 // pred_fallthru
        _
      %p5658 = scmp.le.s32.totalorder 2, %s18
      // Predicated region
      $region61: #{tpu_custom_call.1} parent=5 // pred_check
        %p5659 = pneg %p5658
      $region62: #{tpu_custom_call.1} parent=5 // pred_check_branch
        %5661 = sbr.rel (%p5659) target = $region64
      $region63: #{tpu_custom_call.1} parent=5 // pred_region
        %s5662 = ssub.s32 %s18, 2
        // Predicated region
        $region65: #{tpu_custom_call.1} parent=63 // pred_check
          %p5663 = pneg %p241
        $region66: #{tpu_custom_call.1} parent=63 // pred_check_branch
          %5665 = sbr.rel (%p5663) target = $region68
        $region67: #{tpu_custom_call.1} parent=63 // pred_region
          %s5666 = sand.u32 %s226, 1
          %s5667 = scalar_lea.sflag [#allocation4], %s5666
          %s5668 = sand.u32 %s226, 1
          %s5669 = smul.addr %s5668, 64
          %s5670 = scalar_lea.vmem [#allocation3], %s5669
          %5671 = dma.done %s5667, 1024
        $region68: #{tpu_custom_call.1} parent=63 // pred_fallthru
          _
      $region64: #{tpu_custom_call.1} parent=5 // pred_fallthru
        _
    $region6: #{tpu_custom_call.1} parent=1 // loop_footer
      %s22 = sadd.s32 1, %s18
    $region7: #{tpu_custom_call.1} parent=1 // loop_footer_branch
      %17 = sbr.rel target = $region3
    $region8: #{tpu_custom_call.1} parent=1 // loop_exit
      _
    %5672 = vsyncpa [#allocation4], 1
    %s5673 = scalar_lea.sflag [#allocation4], 1
    %5674 = vsyncpa %s5673, 1

</llo_original>
